<compile_context>
chip_gen: v5e
topology: v5e:2x2
jax: 0.10.0
libtpu: 0.0.40
codegen_flags: <defaults>
</compile_context>

<pallas_src>
import jax
import jax.numpy as jnp
from jax.experimental import pallas as pl
from jax.experimental.pallas import tpu as pltpu

# TODO(synk): env.action_space.n is not available in this standalone script;
# NUM_ACTIONS is hard-coded to a small value.
NUM_ACTIONS = 6
N_POS = 16          # 4 * 4 spatial positions
D_IN = 18
H1 = 128
H2 = 64
D_FLAT_IN = N_POS * D_IN     # 288
D_FLAT_H1 = N_POS * H1       # 2048
MAX_TB = 512                 # batch tile size (rows per grid step)


def embnet_kernel(x_ref, w1_ref, b1_ref, w2_ref, b2_ref, wo_ref, bo_ref, out_ref):
    # x_ref  : (TB, 288)  bf16     w1_ref : (288, 2048) bf16 (block-diagonal fc1)
    # b1_ref : (1, 2048)  f32      w2_ref : (2048, 64)  bf16
    # b2_ref : (1, 64)    f32      wo_ref : (64, A)     bf16
    # bo_ref : (1, A)     f32      out_ref: (TB, A)     f32
    x = x_ref[...]                                                # already bf16

    # fc1 (all 16 positions at once via the block-diagonal weight) + relu.
    h1 = jnp.dot(x, w1_ref[...], preferred_element_type=jnp.float32)
    h1 = jnp.maximum(h1 + b1_ref[...], 0.0)                       # (TB, 2048) f32

    # fc2: single K=2048 MXU matmul + relu.
    h2 = jnp.dot(h1.astype(jnp.bfloat16), w2_ref[...],
                 preferred_element_type=jnp.float32)
    h2 = jnp.maximum(h2 + b2_ref[...], 0.0)                       # (TB, 64) f32

    # Output layer + numerically-stable softmax along the action dim.
    # Exact f32 divide (not approx reciprocal) so rows sum to 1 tightly.
    logits = jnp.dot(h2.astype(jnp.bfloat16), wo_ref[...],
                     preferred_element_type=jnp.float32) + bo_ref[...]
    m = jnp.max(logits, axis=-1, keepdims=True)
    e = jnp.exp(logits - m)
    out_ref[...] = (e / jnp.sum(e, axis=-1, keepdims=True)).astype(out_ref.dtype)


def _round_up(n, m):
    return ((n + m - 1) // m) * m


def _pick_tile(B):
    """Batch tile: multiple of 8 (or full dim), >=2 grid steps when B > 8."""
    if B <= 8:
        return B                              # full-dim block, single step
    if B <= 2 * MAX_TB:
        return min(_round_up(-(-B // 2), 8), MAX_TB)   # ~half batch -> 2 steps
    return MAX_TB


def embnet_forward(x, kernel_params):
    """x: any shape that flattens to (-1, 4, 4, 18). Returns (B, NUM_ACTIONS) probs."""
    w1b, b1, w2, b2, wo, bo = kernel_params
    # bf16 on the host: halves the only streamed input's DMA bytes.
    x2 = x.reshape(-1, D_FLAT_IN).astype(jnp.bfloat16)
    B = x2.shape[0]
    TB = _pick_tile(B)
    grid = (pl.cdiv(B, TB),)

    const = lambda i: (0, 0)   # weights/biases: same block every step -> VMEM-resident
    return pl.pallas_call(
        embnet_kernel,
        out_shape=jax.ShapeDtypeStruct((B, NUM_ACTIONS), jnp.float32),
        grid=grid,
        in_specs=[
            pl.BlockSpec((TB, D_FLAT_IN), lambda i: (i, 0)),      # x tile (streamed)
            pl.BlockSpec((D_FLAT_IN, D_FLAT_H1), const),          # fc1 block-diag W
            pl.BlockSpec((1, D_FLAT_H1), const),                  # fc1 bias (tiled)
            pl.BlockSpec((D_FLAT_H1, H2), const),                 # fc2 W
            pl.BlockSpec((1, H2), const),                         # fc2 bias
            pl.BlockSpec((H2, NUM_ACTIONS), const),               # out W
            pl.BlockSpec((1, NUM_ACTIONS), const),                # out bias
        ],
        out_specs=pl.BlockSpec((TB, NUM_ACTIONS), lambda i: (i, 0)),
        compiler_params=pltpu.CompilerParams(
            dimension_semantics=("parallel",),
            vmem_limit_bytes=32 * 1024 * 1024),
    )(x2, w1b, b1, w2, b2, wo, bo)


def init_torch_params(key):
    """Parameters in PyTorch nn.Linear layout: W ~ N(0, 0.1), b ~ default uniform."""
    k = jax.random.split(key, 6)
    w1 = 0.1 * jax.random.normal(k[0], (H1, D_IN), jnp.float32)          # (out, in)
    b1 = jax.random.uniform(k[1], (H1,), jnp.float32,
                            -1.0 / jnp.sqrt(D_IN), 1.0 / jnp.sqrt(D_IN))
    w2 = 0.1 * jax.random.normal(k[2], (H2, D_FLAT_H1), jnp.float32)
    b2 = jax.random.uniform(k[3], (H2,), jnp.float32,
                            -1.0 / jnp.sqrt(D_FLAT_H1), 1.0 / jnp.sqrt(D_FLAT_H1))
    wo = 0.1 * jax.random.normal(k[4], (NUM_ACTIONS, H2), jnp.float32)
    bo = jax.random.uniform(k[5], (NUM_ACTIONS,), jnp.float32,
                            -1.0 / jnp.sqrt(H2), 1.0 / jnp.sqrt(H2))
    return (w1, b1, w2, b2, wo, bo)


def prepare_kernel_params(torch_params):
    """Host-side rearrangement into kernel layouts (bf16 matmul operands, f32 biases)."""
    w1, b1, w2, b2, wo, bo = torch_params
    w1t = w1.T                                            # (18, 128)
    # Block-diagonal fc1 weight: row p*18+i, col p*128+j <- w1t[i, j].
    eye = jnp.eye(N_POS, dtype=jnp.float32)
    w1_block = jnp.einsum("pq,ij->piqj", eye, w1t).reshape(D_FLAT_IN, D_FLAT_H1)
    b1_tiled = jnp.tile(b1, N_POS)                        # (2048,)  pos-major, matches view order
    return (
        w1_block.astype(jnp.bfloat16),
        b1_tiled.reshape(1, D_FLAT_H1).astype(jnp.float32),
        w2.T.astype(jnp.bfloat16),                        # (2048, 64)
        b2.reshape(1, H2).astype(jnp.float32),
        wo.T.astype(jnp.bfloat16),                        # (64, A)
        bo.reshape(1, NUM_ACTIONS).astype(jnp.float32),
    )


def embnet_reference(x, torch_params):
    """Pure-JAX reference mirroring the PyTorch forward (all f32)."""
    w1, b1, w2, b2, wo, bo = torch_params
    h = x.reshape(-1, N_POS, D_IN) @ w1.T + b1
    h = jnp.maximum(h, 0.0).reshape(-1, D_FLAT_H1)
    h = jnp.maximum(h @ w2.T + b2, 0.0)
    logits = h @ wo.T + bo
    return jax.nn.softmax(logits, axis=-1)


if __name__ == "__main__":
    key = jax.random.PRNGKey(0)
    k_param, k_x = jax.random.split(key)
    torch_params = init_torch_params(k_param)
    kernel_params = prepare_kernel_params(torch_params)

    # Small batch, shape matching the x.view(-1, 4, 4, 18) convention.
    x = jax.random.normal(k_x, (2, 4, 4, 18), jnp.float32)

    probs = jax.block_until_ready(embnet_forward(x, kernel_params))
    ref = jax.block_until_ready(embnet_reference(x, torch_params))

    assert probs.shape == (2, NUM_ACTIONS)
    # Exact softmax divide -> rows sum to 1 to f32 rounding.
    assert bool(jnp.all(jnp.abs(jnp.sum(probs, axis=-1) - 1.0) < 1e-4))
    # bf16 matmul operands vs f32 reference.
    assert bool(jnp.max(jnp.abs(probs - ref)) < 2.5e-2)
    print("KERNEL_OK")
</pallas_src>

<mosaic_0001>
module attributes {stable_mosaic.version = 11 : i64} {
  func.func @embnet_kernel(%arg0: i32, %arg1: memref<2x288xbf16, #tpu.memory_space<vmem>>, %arg2: memref<288x2048xbf16, #tpu.memory_space<vmem>>, %arg3: memref<1x2048xf32, #tpu.memory_space<vmem>>, %arg4: memref<2048x64xbf16, #tpu.memory_space<vmem>>, %arg5: memref<1x64xf32, #tpu.memory_space<vmem>>, %arg6: memref<64x6xbf16, #tpu.memory_space<vmem>>, %arg7: memref<1x6xf32, #tpu.memory_space<vmem>>, %arg8: memref<2x6xf32, #tpu.memory_space<vmem>>) attributes {dimension_semantics = [#tpu.dimension_semantics<parallel>], iteration_bounds = array<i64: 1>, scalar_prefetch = 0 : i64, scratch_operands = 0 : i64, tpu.core_type = #tpu.core_type<tc>, window_params = [{transform_indices = @transform_0, window_bounds = array<i64: 2, 288>}, {pipeline_mode = #tpu.pipeline_mode<synchronous>, transform_indices = @transform_1, window_bounds = array<i64: 288, 2048>}, {pipeline_mode = #tpu.pipeline_mode<synchronous>, transform_indices = @transform_2, window_bounds = array<i64: 1, 2048>}, {pipeline_mode = #tpu.pipeline_mode<synchronous>, transform_indices = @transform_3, window_bounds = array<i64: 2048, 64>}, {pipeline_mode = #tpu.pipeline_mode<synchronous>, transform_indices = @transform_4, window_bounds = array<i64: 1, 64>}, {pipeline_mode = #tpu.pipeline_mode<synchronous>, transform_indices = @transform_5, window_bounds = array<i64: 64, 6>}, {pipeline_mode = #tpu.pipeline_mode<synchronous>, transform_indices = @transform_6, window_bounds = array<i64: 1, 6>}, {transform_indices = @transform_7, window_bounds = array<i64: 2, 6>}]} {
    %c0 = arith.constant 0 : index
    %c0_0 = arith.constant 0 : index
    %0 = vector.load %arg1[%c0, %c0_0] : memref<2x288xbf16, #tpu.memory_space<vmem>>, vector<2x288xbf16>
    %c0_1 = arith.constant 0 : index
    %c0_2 = arith.constant 0 : index
    %1 = vector.load %arg2[%c0_1, %c0_2] : memref<288x2048xbf16, #tpu.memory_space<vmem>>, vector<288x2048xbf16>
    %cst = arith.constant dense<0.000000e+00> : vector<2x2048xf32>
    %2 = tpu.matmul %0, %1, %cst {dimension_numbers = #tpu.dot_dimension_numbers<[1], [0], [0], [1], [0, 0, 1, 1], [], []>} : vector<2x288xbf16>, vector<288x2048xbf16>, vector<2x2048xf32> -> vector<2x2048xf32>
    %c0_3 = arith.constant 0 : index
    %c0_4 = arith.constant 0 : index
    %3 = vector.load %arg3[%c0_3, %c0_4] : memref<1x2048xf32, #tpu.memory_space<vmem>>, vector<1x2048xf32>
    %4 = vector.broadcast %3 : vector<1x2048xf32> to vector<2x2048xf32>
    %5 = arith.addf %2, %4 : vector<2x2048xf32>
    %cst_5 = arith.constant 0.000000e+00 : f32
    %6 = vector.broadcast %cst_5 : f32 to vector<2x2048xf32>
    %7 = arith.maximumf %5, %6 : vector<2x2048xf32>
    %8 = arith.truncf %7 : vector<2x2048xf32> to vector<2x2048xbf16>
    %c0_6 = arith.constant 0 : index
    %c0_7 = arith.constant 0 : index
    %9 = vector.load %arg4[%c0_6, %c0_7] : memref<2048x64xbf16, #tpu.memory_space<vmem>>, vector<2048x64xbf16>
    %cst_8 = arith.constant dense<0.000000e+00> : vector<2x64xf32>
    %10 = tpu.matmul %8, %9, %cst_8 {dimension_numbers = #tpu.dot_dimension_numbers<[1], [0], [0], [1], [0, 0, 1, 1], [], []>} : vector<2x2048xbf16>, vector<2048x64xbf16>, vector<2x64xf32> -> vector<2x64xf32>
    %c0_9 = arith.constant 0 : index
    %c0_10 = arith.constant 0 : index
    %11 = vector.load %arg5[%c0_9, %c0_10] : memref<1x64xf32, #tpu.memory_space<vmem>>, vector<1x64xf32>
    %12 = vector.broadcast %11 : vector<1x64xf32> to vector<2x64xf32>
    %13 = arith.addf %10, %12 : vector<2x64xf32>
    %cst_11 = arith.constant 0.000000e+00 : f32
    %14 = vector.broadcast %cst_11 : f32 to vector<2x64xf32>
    %15 = arith.maximumf %13, %14 : vector<2x64xf32>
    %16 = arith.truncf %15 : vector<2x64xf32> to vector<2x64xbf16>
    %c0_12 = arith.constant 0 : index
    %c0_13 = arith.constant 0 : index
    %17 = vector.load %arg6[%c0_12, %c0_13] : memref<64x6xbf16, #tpu.memory_space<vmem>>, vector<64x6xbf16>
    %cst_14 = arith.constant dense<0.000000e+00> : vector<2x6xf32>
    %18 = tpu.matmul %16, %17, %cst_14 {dimension_numbers = #tpu.dot_dimension_numbers<[1], [0], [0], [1], [0, 0, 1, 1], [], []>} : vector<2x64xbf16>, vector<64x6xbf16>, vector<2x6xf32> -> vector<2x6xf32>
    %c0_15 = arith.constant 0 : index
    %c0_16 = arith.constant 0 : index
    %19 = vector.load %arg7[%c0_15, %c0_16] : memref<1x6xf32, #tpu.memory_space<vmem>>, vector<1x6xf32>
    %20 = vector.broadcast %19 : vector<1x6xf32> to vector<2x6xf32>
    %21 = arith.addf %18, %20 : vector<2x6xf32>
    %cst_17 = arith.constant dense<0xFF800000> : vector<2xf32>
    %22 = vector.multi_reduction <maximumf>, %21, %cst_17 [1] : vector<2x6xf32> to vector<2xf32>
    %23 = vector.shape_cast %22 : vector<2xf32> to vector<2x1xf32>
    %24 = vector.broadcast %23 : vector<2x1xf32> to vector<2x6xf32>
    %25 = arith.subf %21, %24 : vector<2x6xf32>
    %26 = math.exp %25 : vector<2x6xf32>
    %cst_18 = arith.constant dense<0.000000e+00> : vector<2xf32>
    %27 = vector.multi_reduction <add>, %26, %cst_18 [1] : vector<2x6xf32> to vector<2xf32>
    %28 = vector.shape_cast %27 : vector<2xf32> to vector<2x1xf32>
    %29 = vector.broadcast %28 : vector<2x1xf32> to vector<2x6xf32>
    %30 = arith.divf %26, %29 : vector<2x6xf32>
    %c0_19 = arith.constant 0 : index
    %c0_20 = arith.constant 0 : index
    %31 = vector.load %arg8[%c0_19, %c0_20] : memref<2x6xf32, #tpu.memory_space<vmem>>, vector<2x6xf32>
    tpu.vector_store %arg8[%c0_19, %c0_20], %30 {strides = array<i32>} : memref<2x6xf32, #tpu.memory_space<vmem>>, vector<2x6xf32>,
    return
  }
  func.func @transform_0(%arg0: i32) -> (i32, i32) {
    %c0_i32 = arith.constant 0 : i32
    %c0_i32_0 = arith.constant 0 : i32
    return %arg0, %c0_i32 : i32, i32
  }
  func.func @transform_1(%arg0: i32) -> (i32, i32) {
    %c0_i32 = arith.constant 0 : i32
    %c0_i32_0 = arith.constant 0 : i32
    %c0_i32_1 = arith.constant 0 : i32
    return %c0_i32, %c0_i32_0 : i32, i32
  }
  func.func @transform_2(%arg0: i32) -> (i32, i32) {
    %c0_i32 = arith.constant 0 : i32
    %c0_i32_0 = arith.constant 0 : i32
    %c0_i32_1 = arith.constant 0 : i32
    return %c0_i32, %c0_i32_0 : i32, i32
  }
  func.func @transform_3(%arg0: i32) -> (i32, i32) {
    %c0_i32 = arith.constant 0 : i32
    %c0_i32_0 = arith.constant 0 : i32
    %c0_i32_1 = arith.constant 0 : i32
    return %c0_i32, %c0_i32_0 : i32, i32
  }
  func.func @transform_4(%arg0: i32) -> (i32, i32) {
    %c0_i32 = arith.constant 0 : i32
    %c0_i32_0 = arith.constant 0 : i32
    %c0_i32_1 = arith.constant 0 : i32
    return %c0_i32, %c0_i32_0 : i32, i32
  }
  func.func @transform_5(%arg0: i32) -> (i32, i32) {
    %c0_i32 = arith.constant 0 : i32
    %c0_i32_0 = arith.constant 0 : i32
    %c0_i32_1 = arith.constant 0 : i32
    return %c0_i32, %c0_i32_0 : i32, i32
  }
  func.func @transform_6(%arg0: i32) -> (i32, i32) {
    %c0_i32 = arith.constant 0 : i32
    %c0_i32_0 = arith.constant 0 : i32
    %c0_i32_1 = arith.constant 0 : i32
    return %c0_i32, %c0_i32_0 : i32, i32
  }
  func.func @transform_7(%arg0: i32) -> (i32, i32) {
    %c0_i32 = arith.constant 0 : i32
    %c0_i32_0 = arith.constant 0 : i32
    return %arg0, %c0_i32 : i32, i32
  }
}

</mosaic_0001>

<llo_original>
// kernel: tpu_custom_call.1
$region0: #{tpu_custom_call.1}
  #allocation0 [shape = 'u32[]', space=smem, size = 0x4, offset = 0x4, fixed_abs, tag = 'smem constant byte address 0x4 - core index']
  #allocation1 [shape = 'u32[72,128]{1,0:T(1,128)}', space=vmem, size = 0x9000, scoped, tag = 'internal scratch']
  %s0 = inlined_call_operand.hbm [shape: bf16[2,288], index: 0, kind: input, shape index: {}]
  %s1 = inlined_call_operand.hbm [shape: bf16[288,2048], index: 1, kind: input, shape index: {}]
  %s2 = inlined_call_operand.hbm [shape: f32[1,2048], index: 2, kind: input, shape index: {}]
  %s3 = inlined_call_operand.vmem [shape: bf16[2048,64], index: 3, kind: input, shape index: {}]
  %s4 = inlined_call_operand.hbm [shape: f32[1,64], index: 4, kind: input, shape index: {}]
  %s5 = inlined_call_operand.vmem [shape: bf16[64,6], index: 5, kind: input, shape index: {}]
  %s6 = inlined_call_operand.hbm [shape: f32[1,6], index: 6, kind: input, shape index: {}]
  %s7 = inlined_call_operand.hbm [shape: f32[2,6], index: 7, kind: output, shape index: {}]
  %s8 = sld [smem:[#allocation0]]
  $region58: #{tpu_custom_call.1} parent=0
    _
  %s10 = ssub.s32 1, %s8
  %s11 = scalar_select 0, %s10, %s8
  $region1: #{tpu_custom_call.1} parent=0
    #allocation2 [shape = 'u8[1536]{0}', space=vmem, size = 0x800, scoped, tag = 'input window, operand 0, single buffered']
    #allocation3 [shape = 's32[1]{0}', space=sflag, size = 0x4, scoped, tag = 'scoped memory for tpu_custom_call.1']
    #allocation4 [shape = 's32[1]{0}', space=sflag, size = 0x4, scoped, tag = 'scoped memory for tpu_custom_call.1']
    #allocation5 [shape = 'u8[1179648]{0}', space=vmem, size = 0x120000, scoped, tag = 'input window, operand 1, single buffered']
    #allocation6 [shape = 's32[1]{0}', space=sflag, size = 0x4, scoped, tag = 'scoped memory for tpu_custom_call.1']
    #allocation7 [shape = 'u8[8192]{0}', space=vmem, size = 0x2000, scoped, tag = 'input window, operand 2, single buffered']
    #allocation8 [shape = 'u8[512]{0}', space=vmem, size = 0x400, scoped, tag = 'input window, operand 4, single buffered']
    #allocation9 [shape = 's32[1]{0}', space=sflag, size = 0x4, scoped, tag = 'scoped memory for tpu_custom_call.1']
    #allocation10 [shape = 'u8[512]{0}', space=vmem, size = 0x400, scoped, tag = 'input window, operand 6, single buffered']
    #allocation11 [shape = 'u8[1024]{0}', space=vmem, size = 0x400, scoped, tag = 'output window, operand 0, single buffered']
    %12 = vsyncpa [#allocation3], 0
    %13 = vsyncpa [#allocation6], 0
    %14 = vsyncpa [#allocation9], 0
    %15 = vsyncpa [#allocation4], 0
    // Predicated region
    $region2: #{tpu_custom_call.1} parent=1 // pred_check
      _
    $region3: #{tpu_custom_call.1} parent=1 // pred_check_branch
      %17 = sbr.rel (0) target = $region5
    $region4: #{tpu_custom_call.1} parent=1 // pred_region
      %19 = vsyncadd [#allocation3], 0
      %s21 = sshll.u32 %s0, 4
      %s22 = int_to_ptr.hbm [resolvable:$true] %s21
      %s23 = sshll.u32 [#allocation2], 4
      %s24 = int_to_ptr.vmem [resolvable:$true] %s23
      %26 = dma.hbm_to_vmem [thread:$0]  %s22, 48, %s24, [#allocation3]
    $region5: #{tpu_custom_call.1} parent=1 // pred_fallthru
      _
    // Predicated region
    $region6: #{tpu_custom_call.1} parent=1 // pred_check
      _
    $region7: #{tpu_custom_call.1} parent=1 // pred_check_branch
      %28 = sbr.rel (0) target = $region9
    $region8: #{tpu_custom_call.1} parent=1 // pred_region
      %30 = vsyncadd [#allocation6], 0
      %s31 = sshll.u32 %s1, 4
      %s32 = int_to_ptr.hbm [resolvable:$true] %s31
      %s33 = sshll.u32 [#allocation5], 4
      %s34 = int_to_ptr.vmem [resolvable:$true] %s33
      %39 = dma.hbm_to_vmem [thread:$0]  %s32, 36864, %s34, [#allocation6], 1024, 1024, 64
    $region9: #{tpu_custom_call.1} parent=1 // pred_fallthru
      _
    // Predicated region
    $region10: #{tpu_custom_call.1} parent=1 // pred_check
      _
    $region11: #{tpu_custom_call.1} parent=1 // pred_check_branch
      %41 = sbr.rel (0) target = $region13
    $region12: #{tpu_custom_call.1} parent=1 // pred_region
      %43 = vsyncadd [#allocation6], 0
      %s45 = sshll.u32 %s2, 4
      %s46 = int_to_ptr.hbm [resolvable:$true] %s45
      %s47 = sshll.u32 [#allocation7], 4
      %s48 = int_to_ptr.vmem [resolvable:$true] %s47
      %50 = dma.hbm_to_vmem [thread:$0]  %s46, 256, %s48, [#allocation6]
    $region13: #{tpu_custom_call.1} parent=1 // pred_fallthru
      _
    // Predicated region
    $region14: #{tpu_custom_call.1} parent=1 // pred_check
      _
    $region15: #{tpu_custom_call.1} parent=1 // pred_check_branch
      %52 = sbr.rel (0) target = $region17
    $region16: #{tpu_custom_call.1} parent=1 // pred_region
      _
    $region17: #{tpu_custom_call.1} parent=1 // pred_fallthru
      _
    // Predicated region
    $region18: #{tpu_custom_call.1} parent=1 // pred_check
      _
    $region19: #{tpu_custom_call.1} parent=1 // pred_check_branch
      %54 = sbr.rel (0) target = $region21
    $region20: #{tpu_custom_call.1} parent=1 // pred_region
      %56 = vsyncadd [#allocation9], 0
      %s58 = sshll.u32 %s4, 4
      %s59 = int_to_ptr.hbm [resolvable:$true] %s58
      %s60 = sshll.u32 [#allocation8], 4
      %s61 = int_to_ptr.vmem [resolvable:$true] %s60
      %63 = dma.hbm_to_vmem [thread:$0]  %s59, 16, %s61, [#allocation9]
    $region21: #{tpu_custom_call.1} parent=1 // pred_fallthru
      _
    // Predicated region
    $region22: #{tpu_custom_call.1} parent=1 // pred_check
      _
    $region23: #{tpu_custom_call.1} parent=1 // pred_check_branch
      %65 = sbr.rel (0) target = $region25
    $region24: #{tpu_custom_call.1} parent=1 // pred_region
      _
    $region25: #{tpu_custom_call.1} parent=1 // pred_fallthru
      _
    // Predicated region
    $region26: #{tpu_custom_call.1} parent=1 // pred_check
      _
    $region27: #{tpu_custom_call.1} parent=1 // pred_check_branch
      %67 = sbr.rel (0) target = $region29
    $region28: #{tpu_custom_call.1} parent=1 // pred_region
      %69 = vsyncadd [#allocation9], 0
      %s71 = sshll.u32 %s6, 4
      %s72 = int_to_ptr.hbm [resolvable:$true] %s71
      %s73 = sshll.u32 [#allocation10], 4
      %s74 = int_to_ptr.vmem [resolvable:$true] %s73
      %76 = dma.hbm_to_vmem [thread:$0]  %s72, 16, %s74, [#allocation9]
    $region29: #{tpu_custom_call.1} parent=1 // pred_fallthru
      _
    // Predicated region
    $region30: #{tpu_custom_call.1} parent=1 // pred_check
      _
    $region31: #{tpu_custom_call.1} parent=1 // pred_check_branch
      %78 = sbr.rel (0) target = $region33
    $region32: #{tpu_custom_call.1} parent=1 // pred_region
      %80 = dma.done [#allocation3], 48
    $region33: #{tpu_custom_call.1} parent=1 // pred_fallthru
      _
    // Predicated region
    $region34: #{tpu_custom_call.1} parent=1 // pred_check
      _
    $region35: #{tpu_custom_call.1} parent=1 // pred_check_branch
      %82 = sbr.rel (0) target = $region37
    $region36: #{tpu_custom_call.1} parent=1 // pred_region
      %84 = dma.done [#allocation6], 36864
    $region37: #{tpu_custom_call.1} parent=1 // pred_fallthru
      _
    // Predicated region
    $region38: #{tpu_custom_call.1} parent=1 // pred_check
      _
    $region39: #{tpu_custom_call.1} parent=1 // pred_check_branch
      %86 = sbr.rel (0) target = $region41
    $region40: #{tpu_custom_call.1} parent=1 // pred_region
      %88 = dma.done [#allocation6], 256
    $region41: #{tpu_custom_call.1} parent=1 // pred_fallthru
      _
    // Predicated region
    $region42: #{tpu_custom_call.1} parent=1 // pred_check
      _
    $region43: #{tpu_custom_call.1} parent=1 // pred_check_branch
      %90 = sbr.rel (0) target = $region45
    $region44: #{tpu_custom_call.1} parent=1 // pred_region
      %92 = dma.done [#allocation9], 16
    $region45: #{tpu_custom_call.1} parent=1 // pred_fallthru
      _
    // Predicated region
    $region46: #{tpu_custom_call.1} parent=1 // pred_check
      _
    $region47: #{tpu_custom_call.1} parent=1 // pred_check_branch
      %94 = sbr.rel (0) target = $region49
    $region48: #{tpu_custom_call.1} parent=1 // pred_region
      %96 = dma.done [#allocation9], 16
    $region49: #{tpu_custom_call.1} parent=1 // pred_fallthru
      _
    %v98 = vld [vmem:[#allocation2] sm:$0x7]
    %v99 = vld [vmem:[#allocation5] sm:$0xff]
    %v100 = vld [vmem:[#allocation5 + $0x8] sm:$0xff]
    %v101 = vld [vmem:[#allocation5 + $0x10] sm:$0xff]
    %v102 = vld [vmem:[#allocation5 + $0x18] sm:$0xff]
    %v103 = vld [vmem:[#allocation5 + $0x20] sm:$0xff]
    %v104 = vld [vmem:[#allocation5 + $0x28] sm:$0xff]
    %v105 = vld [vmem:[#allocation5 + $0x30] sm:$0xff]
    %v106 = vld [vmem:[#allocation5 + $0x38] sm:$0xff]
    %v107 = vld [vmem:[#allocation5 + $0x40] sm:$0xff]
    %v108 = vld [vmem:[#allocation5 + $0x48] sm:$0xff]
    %v109 = vld [vmem:[#allocation5 + $0x50] sm:$0xff]
    %v110 = vld [vmem:[#allocation5 + $0x58] sm:$0xff]
    %v111 = vld [vmem:[#allocation5 + $0x60] sm:$0xff]
    %v112 = vld [vmem:[#allocation5 + $0x68] sm:$0xff]
    %v113 = vld [vmem:[#allocation5 + $0x70] sm:$0xff]
    %v114 = vld [vmem:[#allocation5 + $0x78] sm:$0xff]
    %v115 = vld [vmem:[#allocation5 + $0x80] sm:$0xff]
    %v116 = vld [vmem:[#allocation5 + $0x88] sm:$0xff]
    %v117 = vld [vmem:[#allocation5 + $0x90] sm:$0xff]
    %v118 = vld [vmem:[#allocation5 + $0x98] sm:$0xff]
    %v119 = vld [vmem:[#allocation5 + $0xa0] sm:$0xff]
    %v120 = vld [vmem:[#allocation5 + $0xa8] sm:$0xff]
    %v121 = vld [vmem:[#allocation5 + $0xb0] sm:$0xff]
    %v122 = vld [vmem:[#allocation5 + $0xb8] sm:$0xff]
    %v123 = vld [vmem:[#allocation5 + $0xc0] sm:$0xff]
    %v124 = vld [vmem:[#allocation5 + $0xc8] sm:$0xff]
    %v125 = vld [vmem:[#allocation5 + $0xd0] sm:$0xff]
    %v126 = vld [vmem:[#allocation5 + $0xd8] sm:$0xff]
    %v127 = vld [vmem:[#allocation5 + $0xe0] sm:$0xff]
    %v128 = vld [vmem:[#allocation5 + $0xe8] sm:$0xff]
    %v129 = vld [vmem:[#allocation5 + $0xf0] sm:$0xff]
    %v130 = vld [vmem:[#allocation5 + $0xf8] sm:$0xff]
    %v131 = vld [vmem:[#allocation5 + $0x100] sm:$0xff]
    %v132 = vld [vmem:[#allocation5 + $0x108] sm:$0xff]
    %v133 = vld [vmem:[#allocation5 + $0x110] sm:$0xff]
    %v134 = vld [vmem:[#allocation5 + $0x118] sm:$0xff]
    %v135 = vld [vmem:[#allocation5 + $0x120] sm:$0xff]
    %v136 = vld [vmem:[#allocation5 + $0x128] sm:$0xff]
    %v137 = vld [vmem:[#allocation5 + $0x130] sm:$0xff]
    %v138 = vld [vmem:[#allocation5 + $0x138] sm:$0xff]
    %v139 = vld [vmem:[#allocation5 + $0x140] sm:$0xff]
    %v140 = vld [vmem:[#allocation5 + $0x148] sm:$0xff]
    %v141 = vld [vmem:[#allocation5 + $0x150] sm:$0xff]
    %v142 = vld [vmem:[#allocation5 + $0x158] sm:$0xff]
    %v143 = vld [vmem:[#allocation5 + $0x160] sm:$0xff]
    %v144 = vld [vmem:[#allocation5 + $0x168] sm:$0xff]
    %v145 = vld [vmem:[#allocation5 + $0x170] sm:$0xff]
    %v146 = vld [vmem:[#allocation5 + $0x178] sm:$0xff]
    %v147 = vld [vmem:[#allocation5 + $0x180] sm:$0xff]
    %v148 = vld [vmem:[#allocation5 + $0x188] sm:$0xff]
    %v149 = vld [vmem:[#allocation5 + $0x190] sm:$0xff]
    %v150 = vld [vmem:[#allocation5 + $0x198] sm:$0xff]
    %v151 = vld [vmem:[#allocation5 + $0x1a0] sm:$0xff]
    %v152 = vld [vmem:[#allocation5 + $0x1a8] sm:$0xff]
    %v153 = vld [vmem:[#allocation5 + $0x1b0] sm:$0xff]
    %v154 = vld [vmem:[#allocation5 + $0x1b8] sm:$0xff]
    %v155 = vld [vmem:[#allocation5 + $0x1c0] sm:$0xff]
    %v156 = vld [vmem:[#allocation5 + $0x1c8] sm:$0xff]
    %v157 = vld [vmem:[#allocation5 + $0x1d0] sm:$0xff]
    %v158 = vld [vmem:[#allocation5 + $0x1d8] sm:$0xff]
    %v159 = vld [vmem:[#allocation5 + $0x1e0] sm:$0xff]
    %v160 = vld [vmem:[#allocation5 + $0x1e8] sm:$0xff]
    %v161 = vld [vmem:[#allocation5 + $0x1f0] sm:$0xff]
    %v162 = vld [vmem:[#allocation5 + $0x1f8] sm:$0xff]
    %v163 = vld [vmem:[#allocation5 + $0x200] sm:$0xff]
    %v164 = vld [vmem:[#allocation5 + $0x208] sm:$0xff]
    %v165 = vld [vmem:[#allocation5 + $0x210] sm:$0xff]
    %v166 = vld [vmem:[#allocation5 + $0x218] sm:$0xff]
    %v167 = vld [vmem:[#allocation5 + $0x220] sm:$0xff]
    %v168 = vld [vmem:[#allocation5 + $0x228] sm:$0xff]
    %v169 = vld [vmem:[#allocation5 + $0x230] sm:$0xff]
    %v170 = vld [vmem:[#allocation5 + $0x238] sm:$0xff]
    %v171 = vld [vmem:[#allocation5 + $0x240] sm:$0xff]
    %v172 = vld [vmem:[#allocation5 + $0x248] sm:$0xff]
    %v173 = vld [vmem:[#allocation5 + $0x250] sm:$0xff]
    %v174 = vld [vmem:[#allocation5 + $0x258] sm:$0xff]
    %v175 = vld [vmem:[#allocation5 + $0x260] sm:$0xff]
    %v176 = vld [vmem:[#allocation5 + $0x268] sm:$0xff]
    %v177 = vld [vmem:[#allocation5 + $0x270] sm:$0xff]
    %v178 = vld [vmem:[#allocation5 + $0x278] sm:$0xff]
    %v179 = vld [vmem:[#allocation5 + $0x280] sm:$0xff]
    %v180 = vld [vmem:[#allocation5 + $0x288] sm:$0xff]
    %v181 = vld [vmem:[#allocation5 + $0x290] sm:$0xff]
    %v182 = vld [vmem:[#allocation5 + $0x298] sm:$0xff]
    %v183 = vld [vmem:[#allocation5 + $0x2a0] sm:$0xff]
    %v184 = vld [vmem:[#allocation5 + $0x2a8] sm:$0xff]
    %v185 = vld [vmem:[#allocation5 + $0x2b0] sm:$0xff]
    %v186 = vld [vmem:[#allocation5 + $0x2b8] sm:$0xff]
    %v187 = vld [vmem:[#allocation5 + $0x2c0] sm:$0xff]
    %v188 = vld [vmem:[#allocation5 + $0x2c8] sm:$0xff]
    %v189 = vld [vmem:[#allocation5 + $0x2d0] sm:$0xff]
    %v190 = vld [vmem:[#allocation5 + $0x2d8] sm:$0xff]
    %v191 = vld [vmem:[#allocation5 + $0x2e0] sm:$0xff]
    %v192 = vld [vmem:[#allocation5 + $0x2e8] sm:$0xff]
    %v193 = vld [vmem:[#allocation5 + $0x2f0] sm:$0xff]
    %v194 = vld [vmem:[#allocation5 + $0x2f8] sm:$0xff]
    %v195 = vld [vmem:[#allocation5 + $0x300] sm:$0xff]
    %v196 = vld [vmem:[#allocation5 + $0x308] sm:$0xff]
    %v197 = vld [vmem:[#allocation5 + $0x310] sm:$0xff]
    %v198 = vld [vmem:[#allocation5 + $0x318] sm:$0xff]
    %v199 = vld [vmem:[#allocation5 + $0x320] sm:$0xff]
    %v200 = vld [vmem:[#allocation5 + $0x328] sm:$0xff]
    %v201 = vld [vmem:[#allocation5 + $0x330] sm:$0xff]
    %v202 = vld [vmem:[#allocation5 + $0x338] sm:$0xff]
    %v203 = vld [vmem:[#allocation5 + $0x340] sm:$0xff]
    %v204 = vld [vmem:[#allocation5 + $0x348] sm:$0xff]
    %v205 = vld [vmem:[#allocation5 + $0x350] sm:$0xff]
    %v206 = vld [vmem:[#allocation5 + $0x358] sm:$0xff]
    %v207 = vld [vmem:[#allocation5 + $0x360] sm:$0xff]
    %v208 = vld [vmem:[#allocation5 + $0x368] sm:$0xff]
    %v209 = vld [vmem:[#allocation5 + $0x370] sm:$0xff]
    %v210 = vld [vmem:[#allocation5 + $0x378] sm:$0xff]
    %v211 = vld [vmem:[#allocation5 + $0x380] sm:$0xff]
    %v212 = vld [vmem:[#allocation5 + $0x388] sm:$0xff]
    %v213 = vld [vmem:[#allocation5 + $0x390] sm:$0xff]
    %v214 = vld [vmem:[#allocation5 + $0x398] sm:$0xff]
    %v215 = vld [vmem:[#allocation5 + $0x3a0] sm:$0xff]
    %v216 = vld [vmem:[#allocation5 + $0x3a8] sm:$0xff]
    %v217 = vld [vmem:[#allocation5 + $0x3b0] sm:$0xff]
    %v218 = vld [vmem:[#allocation5 + $0x3b8] sm:$0xff]
    %v219 = vld [vmem:[#allocation5 + $0x3c0] sm:$0xff]
    %v220 = vld [vmem:[#allocation5 + $0x3c8] sm:$0xff]
    %v221 = vld [vmem:[#allocation5 + $0x3d0] sm:$0xff]
    %v222 = vld [vmem:[#allocation5 + $0x3d8] sm:$0xff]
    %v223 = vld [vmem:[#allocation5 + $0x3e0] sm:$0xff]
    %v224 = vld [vmem:[#allocation5 + $0x3e8] sm:$0xff]
    %v225 = vld [vmem:[#allocation5 + $0x3f0] sm:$0xff]
    %v226 = vld [vmem:[#allocation5 + $0x3f8] sm:$0xff]
    %v227 = vld [vmem:[#allocation5 + $0x400] sm:$0xff]
    %v228 = vld [vmem:[#allocation5 + $0x408] sm:$0xff]
    %v229 = vld [vmem:[#allocation5 + $0x410] sm:$0xff]
    %v230 = vld [vmem:[#allocation5 + $0x418] sm:$0xff]
    %v231 = vld [vmem:[#allocation5 + $0x420] sm:$0xff]
    %v232 = vld [vmem:[#allocation5 + $0x428] sm:$0xff]
    %v233 = vld [vmem:[#allocation5 + $0x430] sm:$0xff]
    %v234 = vld [vmem:[#allocation5 + $0x438] sm:$0xff]
    %v235 = vld [vmem:[#allocation5 + $0x440] sm:$0xff]
    %v236 = vld [vmem:[#allocation5 + $0x448] sm:$0xff]
    %v237 = vld [vmem:[#allocation5 + $0x450] sm:$0xff]
    %v238 = vld [vmem:[#allocation5 + $0x458] sm:$0xff]
    %v239 = vld [vmem:[#allocation5 + $0x460] sm:$0xff]
    %v240 = vld [vmem:[#allocation5 + $0x468] sm:$0xff]
    %v241 = vld [vmem:[#allocation5 + $0x470] sm:$0xff]
    %v242 = vld [vmem:[#allocation5 + $0x478] sm:$0xff]
    %v243 = vld [vmem:[#allocation5 + $0x480] sm:$0xff]
    %v244 = vld [vmem:[#allocation5 + $0x488] sm:$0xff]
    %v245 = vld [vmem:[#allocation5 + $0x490] sm:$0xff]
    %v246 = vld [vmem:[#allocation5 + $0x498] sm:$0xff]
    %v247 = vld [vmem:[#allocation5 + $0x4a0] sm:$0xff]
    %v248 = vld [vmem:[#allocation5 + $0x4a8] sm:$0xff]
    %v249 = vld [vmem:[#allocation5 + $0x4b0] sm:$0xff]
    %v250 = vld [vmem:[#allocation5 + $0x4b8] sm:$0xff]
    %v251 = vld [vmem:[#allocation5 + $0x4c0] sm:$0xff]
    %v252 = vld [vmem:[#allocation5 + $0x4c8] sm:$0xff]
    %v253 = vld [vmem:[#allocation5 + $0x4d0] sm:$0xff]
    %v254 = vld [vmem:[#allocation5 + $0x4d8] sm:$0xff]
    %v255 = vld [vmem:[#allocation5 + $0x4e0] sm:$0xff]
    %v256 = vld [vmem:[#allocation5 + $0x4e8] sm:$0xff]
    %v257 = vld [vmem:[#allocation5 + $0x4f0] sm:$0xff]
    %v258 = vld [vmem:[#allocation5 + $0x4f8] sm:$0xff]
    %v259 = vld [vmem:[#allocation5 + $0x500] sm:$0xff]
    %v260 = vld [vmem:[#allocation5 + $0x508] sm:$0xff]
    %v261 = vld [vmem:[#allocation5 + $0x510] sm:$0xff]
    %v262 = vld [vmem:[#allocation5 + $0x518] sm:$0xff]
    %v263 = vld [vmem:[#allocation5 + $0x520] sm:$0xff]
    %v264 = vld [vmem:[#allocation5 + $0x528] sm:$0xff]
    %v265 = vld [vmem:[#allocation5 + $0x530] sm:$0xff]
    %v266 = vld [vmem:[#allocation5 + $0x538] sm:$0xff]
    %v267 = vld [vmem:[#allocation5 + $0x540] sm:$0xff]
    %v268 = vld [vmem:[#allocation5 + $0x548] sm:$0xff]
    %v269 = vld [vmem:[#allocation5 + $0x550] sm:$0xff]
    %v270 = vld [vmem:[#allocation5 + $0x558] sm:$0xff]
    %v271 = vld [vmem:[#allocation5 + $0x560] sm:$0xff]
    %v272 = vld [vmem:[#allocation5 + $0x568] sm:$0xff]
    %v273 = vld [vmem:[#allocation5 + $0x570] sm:$0xff]
    %v274 = vld [vmem:[#allocation5 + $0x578] sm:$0xff]
    %v275 = vld [vmem:[#allocation5 + $0x580] sm:$0xff]
    %v276 = vld [vmem:[#allocation5 + $0x588] sm:$0xff]
    %v277 = vld [vmem:[#allocation5 + $0x590] sm:$0xff]
    %v278 = vld [vmem:[#allocation5 + $0x598] sm:$0xff]
    %v279 = vld [vmem:[#allocation5 + $0x5a0] sm:$0xff]
    %v280 = vld [vmem:[#allocation5 + $0x5a8] sm:$0xff]
    %v281 = vld [vmem:[#allocation5 + $0x5b0] sm:$0xff]
    %v282 = vld [vmem:[#allocation5 + $0x5b8] sm:$0xff]
    %v283 = vld [vmem:[#allocation5 + $0x5c0] sm:$0xff]
    %v284 = vld [vmem:[#allocation5 + $0x5c8] sm:$0xff]
    %v285 = vld [vmem:[#allocation5 + $0x5d0] sm:$0xff]
    %v286 = vld [vmem:[#allocation5 + $0x5d8] sm:$0xff]
    %v287 = vld [vmem:[#allocation5 + $0x5e0] sm:$0xff]
    %v288 = vld [vmem:[#allocation5 + $0x5e8] sm:$0xff]
    %v289 = vld [vmem:[#allocation5 + $0x5f0] sm:$0xff]
    %v290 = vld [vmem:[#allocation5 + $0x5f8] sm:$0xff]
    %v291 = vld [vmem:[#allocation5 + $0x600] sm:$0xff]
    %v292 = vld [vmem:[#allocation5 + $0x608] sm:$0xff]
    %v293 = vld [vmem:[#allocation5 + $0x610] sm:$0xff]
    %v294 = vld [vmem:[#allocation5 + $0x618] sm:$0xff]
    %v295 = vld [vmem:[#allocation5 + $0x620] sm:$0xff]
    %v296 = vld [vmem:[#allocation5 + $0x628] sm:$0xff]
    %v297 = vld [vmem:[#allocation5 + $0x630] sm:$0xff]
    %v298 = vld [vmem:[#allocation5 + $0x638] sm:$0xff]
    %v299 = vld [vmem:[#allocation5 + $0x640] sm:$0xff]
    %v300 = vld [vmem:[#allocation5 + $0x648] sm:$0xff]
    %v301 = vld [vmem:[#allocation5 + $0x650] sm:$0xff]
    %v302 = vld [vmem:[#allocation5 + $0x658] sm:$0xff]
    %v303 = vld [vmem:[#allocation5 + $0x660] sm:$0xff]
    %v304 = vld [vmem:[#allocation5 + $0x668] sm:$0xff]
    %v305 = vld [vmem:[#allocation5 + $0x670] sm:$0xff]
    %v306 = vld [vmem:[#allocation5 + $0x678] sm:$0xff]
    %v307 = vld [vmem:[#allocation5 + $0x680] sm:$0xff]
    %v308 = vld [vmem:[#allocation5 + $0x688] sm:$0xff]
    %v309 = vld [vmem:[#allocation5 + $0x690] sm:$0xff]
    %v310 = vld [vmem:[#allocation5 + $0x698] sm:$0xff]
    %v311 = vld [vmem:[#allocation5 + $0x6a0] sm:$0xff]
    %v312 = vld [vmem:[#allocation5 + $0x6a8] sm:$0xff]
    %v313 = vld [vmem:[#allocation5 + $0x6b0] sm:$0xff]
    %v314 = vld [vmem:[#allocation5 + $0x6b8] sm:$0xff]
    %v315 = vld [vmem:[#allocation5 + $0x6c0] sm:$0xff]
    %v316 = vld [vmem:[#allocation5 + $0x6c8] sm:$0xff]
    %v317 = vld [vmem:[#allocation5 + $0x6d0] sm:$0xff]
    %v318 = vld [vmem:[#allocation5 + $0x6d8] sm:$0xff]
    %v319 = vld [vmem:[#allocation5 + $0x6e0] sm:$0xff]
    %v320 = vld [vmem:[#allocation5 + $0x6e8] sm:$0xff]
    %v321 = vld [vmem:[#allocation5 + $0x6f0] sm:$0xff]
    %v322 = vld [vmem:[#allocation5 + $0x6f8] sm:$0xff]
    %v323 = vld [vmem:[#allocation5 + $0x700] sm:$0xff]
    %v324 = vld [vmem:[#allocation5 + $0x708] sm:$0xff]
    %v325 = vld [vmem:[#allocation5 + $0x710] sm:$0xff]
    %v326 = vld [vmem:[#allocation5 + $0x718] sm:$0xff]
    %v327 = vld [vmem:[#allocation5 + $0x720] sm:$0xff]
    %v328 = vld [vmem:[#allocation5 + $0x728] sm:$0xff]
    %v329 = vld [vmem:[#allocation5 + $0x730] sm:$0xff]
    %v330 = vld [vmem:[#allocation5 + $0x738] sm:$0xff]
    %v331 = vld [vmem:[#allocation5 + $0x740] sm:$0xff]
    %v332 = vld [vmem:[#allocation5 + $0x748] sm:$0xff]
    %v333 = vld [vmem:[#allocation5 + $0x750] sm:$0xff]
    %v334 = vld [vmem:[#allocation5 + $0x758] sm:$0xff]
    %v335 = vld [vmem:[#allocation5 + $0x760] sm:$0xff]
    %v336 = vld [vmem:[#allocation5 + $0x768] sm:$0xff]
    %v337 = vld [vmem:[#allocation5 + $0x770] sm:$0xff]
    %v338 = vld [vmem:[#allocation5 + $0x778] sm:$0xff]
    %v339 = vld [vmem:[#allocation5 + $0x780] sm:$0xff]
    %v340 = vld [vmem:[#allocation5 + $0x788] sm:$0xff]
    %v341 = vld [vmem:[#allocation5 + $0x790] sm:$0xff]
    %v342 = vld [vmem:[#allocation5 + $0x798] sm:$0xff]
    %v343 = vld [vmem:[#allocation5 + $0x7a0] sm:$0xff]
    %v344 = vld [vmem:[#allocation5 + $0x7a8] sm:$0xff]
    %v345 = vld [vmem:[#allocation5 + $0x7b0] sm:$0xff]
    %v346 = vld [vmem:[#allocation5 + $0x7b8] sm:$0xff]
    %v347 = vld [vmem:[#allocation5 + $0x7c0] sm:$0xff]
    %v348 = vld [vmem:[#allocation5 + $0x7c8] sm:$0xff]
    %v349 = vld [vmem:[#allocation5 + $0x7d0] sm:$0xff]
    %v350 = vld [vmem:[#allocation5 + $0x7d8] sm:$0xff]
    %v351 = vld [vmem:[#allocation5 + $0x7e0] sm:$0xff]
    %v352 = vld [vmem:[#allocation5 + $0x7e8] sm:$0xff]
    %v353 = vld [vmem:[#allocation5 + $0x7f0] sm:$0xff]
    %v354 = vld [vmem:[#allocation5 + $0x7f8] sm:$0xff]
    %v355 = vld [vmem:[#allocation5 + $0x800] sm:$0xff]
    %v356 = vld [vmem:[#allocation5 + $0x808] sm:$0xff]
    %v357 = vld [vmem:[#allocation5 + $0x810] sm:$0xff]
    %v358 = vld [vmem:[#allocation5 + $0x818] sm:$0xff]
    %v359 = vld [vmem:[#allocation5 + $0x820] sm:$0xff]
    %v360 = vld [vmem:[#allocation5 + $0x828] sm:$0xff]
    %v361 = vld [vmem:[#allocation5 + $0x830] sm:$0xff]
    %v362 = vld [vmem:[#allocation5 + $0x838] sm:$0xff]
    %v363 = vld [vmem:[#allocation5 + $0x840] sm:$0xff]
    %v364 = vld [vmem:[#allocation5 + $0x848] sm:$0xff]
    %v365 = vld [vmem:[#allocation5 + $0x850] sm:$0xff]
    %v366 = vld [vmem:[#allocation5 + $0x858] sm:$0xff]
    %v367 = vld [vmem:[#allocation5 + $0x860] sm:$0xff]
    %v368 = vld [vmem:[#allocation5 + $0x868] sm:$0xff]
    %v369 = vld [vmem:[#allocation5 + $0x870] sm:$0xff]
    %v370 = vld [vmem:[#allocation5 + $0x878] sm:$0xff]
    %v371 = vld [vmem:[#allocation5 + $0x880] sm:$0xff]
    %v372 = vld [vmem:[#allocation5 + $0x888] sm:$0xff]
    %v373 = vld [vmem:[#allocation5 + $0x890] sm:$0xff]
    %v374 = vld [vmem:[#allocation5 + $0x898] sm:$0xff]
    %v375 = vld [vmem:[#allocation5 + $0x8a0] sm:$0xff]
    %v376 = vld [vmem:[#allocation5 + $0x8a8] sm:$0xff]
    %v377 = vld [vmem:[#allocation5 + $0x8b0] sm:$0xff]
    %v378 = vld [vmem:[#allocation5 + $0x8b8] sm:$0xff]
    %v379 = vld [vmem:[#allocation5 + $0x8c0] sm:$0xff]
    %v380 = vld [vmem:[#allocation5 + $0x8c8] sm:$0xff]
    %v381 = vld [vmem:[#allocation5 + $0x8d0] sm:$0xff]
    %v382 = vld [vmem:[#allocation5 + $0x8d8] sm:$0xff]
    %v383 = vld [vmem:[#allocation5 + $0x8e0] sm:$0xff]
    %v384 = vld [vmem:[#allocation5 + $0x8e8] sm:$0xff]
    %v385 = vld [vmem:[#allocation5 + $0x8f0] sm:$0xff]
    %v386 = vld [vmem:[#allocation5 + $0x8f8] sm:$0xff]
    %v387 = vld [vmem:[#allocation7] sm:$0xff]
    %v388 = vld [vmem:[#allocation7 + $0x8] sm:$0xff]
    %v391 = vperm.slane %v387, 0
    %v392 = vperm.slane %v387, 1
    %v393 = vperm.slane %v387, 2
    %v394 = vperm.slane %v387, 3
    %v395 = vperm.slane %v387, 4
    %v396 = vperm.slane %v387, 5
    %v397 = vperm.slane %v387, 6
    %v398 = vperm.slane %v387, 7
    %v399 = vperm.slane %v388, 0
    %v400 = vperm.slane %v388, 1
    %v401 = vperm.slane %v388, 2
    %v402 = vperm.slane %v388, 3
    %v403 = vperm.slane %v388, 4
    %v404 = vperm.slane %v388, 5
    %v405 = vperm.slane %v388, 6
    %v406 = vperm.slane %v388, 7
    %424 = vst [vmem:[#allocation1] ss:$9 sm:$0xff] %v98
    %v425 = vld [vmem:[#allocation1] sm:$0xff]
    %v426 = vld [vmem:[#allocation1 + $0x9] sm:$0xff]
    %v427 = vld [vmem:[#allocation1 + $0x12] sm:$0xff]
    %v718 = vunpack.c.l.b16 %v99
    %v719 = vunpack.c.h.b16 %v99
    %v720 = vunpack.c.l.b16 %v100
    %v721 = vunpack.c.h.b16 %v100
    %v722 = vunpack.c.l.b16 %v101
    %v723 = vunpack.c.h.b16 %v101
    %v724 = vunpack.c.l.b16 %v102
    %v725 = vunpack.c.h.b16 %v102
    %v726 = vunpack.c.l.b16 %v103
    %v727 = vunpack.c.h.b16 %v103
    %v728 = vunpack.c.l.b16 %v104
    %v729 = vunpack.c.h.b16 %v104
    %v730 = vunpack.c.l.b16 %v105
    %v731 = vunpack.c.h.b16 %v105
    %v732 = vunpack.c.l.b16 %v106
    %v733 = vunpack.c.h.b16 %v106
    %v734 = vunpack.c.l.b16 %v107
    %v735 = vunpack.c.h.b16 %v107
    %v736 = vunpack.c.l.b16 %v108
    %v737 = vunpack.c.h.b16 %v108
    %v738 = vunpack.c.l.b16 %v109
    %v739 = vunpack.c.h.b16 %v109
    %v740 = vunpack.c.l.b16 %v110
    %v741 = vunpack.c.h.b16 %v110
    %v742 = vunpack.c.l.b16 %v111
    %v743 = vunpack.c.h.b16 %v111
    %v744 = vunpack.c.l.b16 %v112
    %v745 = vunpack.c.h.b16 %v112
    %v746 = vunpack.c.l.b16 %v113
    %v747 = vunpack.c.h.b16 %v113
    %v748 = vunpack.c.l.b16 %v114
    %v749 = vunpack.c.h.b16 %v114
    %v750 = vunpack.c.l.b16 %v115
    %v751 = vunpack.c.h.b16 %v115
    %v752 = vunpack.c.l.b16 %v116
    %v753 = vunpack.c.h.b16 %v116
    %v754 = vunpack.c.l.b16 %v117
    %v755 = vunpack.c.h.b16 %v117
    %v756 = vunpack.c.l.b16 %v118
    %v757 = vunpack.c.h.b16 %v118
    %v758 = vunpack.c.l.b16 %v119
    %v759 = vunpack.c.h.b16 %v119
    %v760 = vunpack.c.l.b16 %v120
    %v761 = vunpack.c.h.b16 %v120
    %v762 = vunpack.c.l.b16 %v121
    %v763 = vunpack.c.h.b16 %v121
    %v764 = vunpack.c.l.b16 %v122
    %v765 = vunpack.c.h.b16 %v122
    %v766 = vunpack.c.l.b16 %v123
    %v767 = vunpack.c.h.b16 %v123
    %v768 = vunpack.c.l.b16 %v124
    %v769 = vunpack.c.h.b16 %v124
    %v770 = vunpack.c.l.b16 %v125
    %v771 = vunpack.c.h.b16 %v125
    %v772 = vunpack.c.l.b16 %v126
    %v773 = vunpack.c.h.b16 %v126
    %v774 = vunpack.c.l.b16 %v127
    %v775 = vunpack.c.h.b16 %v127
    %v776 = vunpack.c.l.b16 %v128
    %v777 = vunpack.c.h.b16 %v128
    %v778 = vunpack.c.l.b16 %v129
    %v779 = vunpack.c.h.b16 %v129
    %v780 = vunpack.c.l.b16 %v130
    %v781 = vunpack.c.h.b16 %v130
    %v782 = vunpack.c.l.b16 %v131
    %v783 = vunpack.c.h.b16 %v131
    %v784 = vunpack.c.l.b16 %v132
    %v785 = vunpack.c.h.b16 %v132
    %v786 = vunpack.c.l.b16 %v133
    %v787 = vunpack.c.h.b16 %v133
    %v788 = vunpack.c.l.b16 %v134
    %v789 = vunpack.c.h.b16 %v134
    %v790 = vunpack.c.l.b16 %v135
    %v791 = vunpack.c.h.b16 %v135
    %v792 = vunpack.c.l.b16 %v136
    %v793 = vunpack.c.h.b16 %v136
    %v794 = vunpack.c.l.b16 %v137
    %v795 = vunpack.c.h.b16 %v137
    %v796 = vunpack.c.l.b16 %v138
    %v797 = vunpack.c.h.b16 %v138
    %v798 = vunpack.c.l.b16 %v139
    %v799 = vunpack.c.h.b16 %v139
    %v800 = vunpack.c.l.b16 %v140
    %v801 = vunpack.c.h.b16 %v140
    %v802 = vunpack.c.l.b16 %v141
    %v803 = vunpack.c.h.b16 %v141
    %v804 = vunpack.c.l.b16 %v142
    %v805 = vunpack.c.h.b16 %v142
    %v806 = vunpack.c.l.b16 %v143
    %v807 = vunpack.c.h.b16 %v143
    %v808 = vunpack.c.l.b16 %v144
    %v809 = vunpack.c.h.b16 %v144
    %v810 = vunpack.c.l.b16 %v145
    %v811 = vunpack.c.h.b16 %v145
    %v812 = vunpack.c.l.b16 %v146
    %v813 = vunpack.c.h.b16 %v146
    %v814 = vunpack.c.l.b16 %v147
    %v815 = vunpack.c.h.b16 %v147
    %v816 = vunpack.c.l.b16 %v148
    %v817 = vunpack.c.h.b16 %v148
    %v818 = vunpack.c.l.b16 %v149
    %v819 = vunpack.c.h.b16 %v149
    %v820 = vunpack.c.l.b16 %v150
    %v821 = vunpack.c.h.b16 %v150
    %v822 = vunpack.c.l.b16 %v151
    %v823 = vunpack.c.h.b16 %v151
    %v824 = vunpack.c.l.b16 %v152
    %v825 = vunpack.c.h.b16 %v152
    %v826 = vunpack.c.l.b16 %v153
    %v827 = vunpack.c.h.b16 %v153
    %v828 = vunpack.c.l.b16 %v154
    %v829 = vunpack.c.h.b16 %v154
    %v830 = vunpack.c.l.b16 %v155
    %v831 = vunpack.c.h.b16 %v155
    %v832 = vunpack.c.l.b16 %v156
    %v833 = vunpack.c.h.b16 %v156
    %v834 = vunpack.c.l.b16 %v157
    %v835 = vunpack.c.h.b16 %v157
    %v836 = vunpack.c.l.b16 %v158
    %v837 = vunpack.c.h.b16 %v158
    %v838 = vunpack.c.l.b16 %v159
    %v839 = vunpack.c.h.b16 %v159
    %v840 = vunpack.c.l.b16 %v160
    %v841 = vunpack.c.h.b16 %v160
    %v842 = vunpack.c.l.b16 %v161
    %v843 = vunpack.c.h.b16 %v161
    %v844 = vunpack.c.l.b16 %v162
    %v845 = vunpack.c.h.b16 %v162
    %v846 = vunpack.c.l.b16 %v163
    %v847 = vunpack.c.h.b16 %v163
    %v848 = vunpack.c.l.b16 %v164
    %v849 = vunpack.c.h.b16 %v164
    %v850 = vunpack.c.l.b16 %v165
    %v851 = vunpack.c.h.b16 %v165
    %v852 = vunpack.c.l.b16 %v166
    %v853 = vunpack.c.h.b16 %v166
    %v854 = vunpack.c.l.b16 %v167
    %v855 = vunpack.c.h.b16 %v167
    %v856 = vunpack.c.l.b16 %v168
    %v857 = vunpack.c.h.b16 %v168
    %v858 = vunpack.c.l.b16 %v169
    %v859 = vunpack.c.h.b16 %v169
    %v860 = vunpack.c.l.b16 %v170
    %v861 = vunpack.c.h.b16 %v170
    %v862 = vunpack.c.l.b16 %v171
    %v863 = vunpack.c.h.b16 %v171
    %v864 = vunpack.c.l.b16 %v172
    %v865 = vunpack.c.h.b16 %v172
    %v866 = vunpack.c.l.b16 %v173
    %v867 = vunpack.c.h.b16 %v173
    %v868 = vunpack.c.l.b16 %v174
    %v869 = vunpack.c.h.b16 %v174
    %v870 = vunpack.c.l.b16 %v175
    %v871 = vunpack.c.h.b16 %v175
    %v872 = vunpack.c.l.b16 %v176
    %v873 = vunpack.c.h.b16 %v176
    %v874 = vunpack.c.l.b16 %v177
    %v875 = vunpack.c.h.b16 %v177
    %v876 = vunpack.c.l.b16 %v178
    %v877 = vunpack.c.h.b16 %v178
    %v878 = vunpack.c.l.b16 %v179
    %v879 = vunpack.c.h.b16 %v179
    %v880 = vunpack.c.l.b16 %v180
    %v881 = vunpack.c.h.b16 %v180
    %v882 = vunpack.c.l.b16 %v181
    %v883 = vunpack.c.h.b16 %v181
    %v884 = vunpack.c.l.b16 %v182
    %v885 = vunpack.c.h.b16 %v182
    %v886 = vunpack.c.l.b16 %v183
    %v887 = vunpack.c.h.b16 %v183
    %v888 = vunpack.c.l.b16 %v184
    %v889 = vunpack.c.h.b16 %v184
    %v890 = vunpack.c.l.b16 %v185
    %v891 = vunpack.c.h.b16 %v185
    %v892 = vunpack.c.l.b16 %v186
    %v893 = vunpack.c.h.b16 %v186
    %v894 = vunpack.c.l.b16 %v187
    %v895 = vunpack.c.h.b16 %v187
    %v896 = vunpack.c.l.b16 %v188
    %v897 = vunpack.c.h.b16 %v188
    %v898 = vunpack.c.l.b16 %v189
    %v899 = vunpack.c.h.b16 %v189
    %v900 = vunpack.c.l.b16 %v190
    %v901 = vunpack.c.h.b16 %v190
    %v902 = vunpack.c.l.b16 %v191
    %v903 = vunpack.c.h.b16 %v191
    %v904 = vunpack.c.l.b16 %v192
    %v905 = vunpack.c.h.b16 %v192
    %v906 = vunpack.c.l.b16 %v193
    %v907 = vunpack.c.h.b16 %v193
    %v908 = vunpack.c.l.b16 %v194
    %v909 = vunpack.c.h.b16 %v194
    %v910 = vunpack.c.l.b16 %v195
    %v911 = vunpack.c.h.b16 %v195
    %v912 = vunpack.c.l.b16 %v196
    %v913 = vunpack.c.h.b16 %v196
    %v914 = vunpack.c.l.b16 %v197
    %v915 = vunpack.c.h.b16 %v197
    %v916 = vunpack.c.l.b16 %v198
    %v917 = vunpack.c.h.b16 %v198
    %v918 = vunpack.c.l.b16 %v199
    %v919 = vunpack.c.h.b16 %v199
    %v920 = vunpack.c.l.b16 %v200
    %v921 = vunpack.c.h.b16 %v200
    %v922 = vunpack.c.l.b16 %v201
    %v923 = vunpack.c.h.b16 %v201
    %v924 = vunpack.c.l.b16 %v202
    %v925 = vunpack.c.h.b16 %v202
    %v926 = vunpack.c.l.b16 %v203
    %v927 = vunpack.c.h.b16 %v203
    %v928 = vunpack.c.l.b16 %v204
    %v929 = vunpack.c.h.b16 %v204
    %v930 = vunpack.c.l.b16 %v205
    %v931 = vunpack.c.h.b16 %v205
    %v932 = vunpack.c.l.b16 %v206
    %v933 = vunpack.c.h.b16 %v206
    %v934 = vunpack.c.l.b16 %v207
    %v935 = vunpack.c.h.b16 %v207
    %v936 = vunpack.c.l.b16 %v208
    %v937 = vunpack.c.h.b16 %v208
    %v938 = vunpack.c.l.b16 %v209
    %v939 = vunpack.c.h.b16 %v209
    %v940 = vunpack.c.l.b16 %v210
    %v941 = vunpack.c.h.b16 %v210
    %v942 = vunpack.c.l.b16 %v211
    %v943 = vunpack.c.h.b16 %v211
    %v944 = vunpack.c.l.b16 %v212
    %v945 = vunpack.c.h.b16 %v212
    %v946 = vunpack.c.l.b16 %v213
    %v947 = vunpack.c.h.b16 %v213
    %v948 = vunpack.c.l.b16 %v214
    %v949 = vunpack.c.h.b16 %v214
    %v950 = vunpack.c.l.b16 %v215
    %v951 = vunpack.c.h.b16 %v215
    %v952 = vunpack.c.l.b16 %v216
    %v953 = vunpack.c.h.b16 %v216
    %v954 = vunpack.c.l.b16 %v217
    %v955 = vunpack.c.h.b16 %v217
    %v956 = vunpack.c.l.b16 %v218
    %v957 = vunpack.c.h.b16 %v218
    %v958 = vunpack.c.l.b16 %v219
    %v959 = vunpack.c.h.b16 %v219
    %v960 = vunpack.c.l.b16 %v220
    %v961 = vunpack.c.h.b16 %v220
    %v962 = vunpack.c.l.b16 %v221
    %v963 = vunpack.c.h.b16 %v221
    %v964 = vunpack.c.l.b16 %v222
    %v965 = vunpack.c.h.b16 %v222
    %v966 = vunpack.c.l.b16 %v223
    %v967 = vunpack.c.h.b16 %v223
    %v968 = vunpack.c.l.b16 %v224
    %v969 = vunpack.c.h.b16 %v224
    %v970 = vunpack.c.l.b16 %v225
    %v971 = vunpack.c.h.b16 %v225
    %v972 = vunpack.c.l.b16 %v226
    %v973 = vunpack.c.h.b16 %v226
    %v974 = vunpack.c.l.b16 %v227
    %v975 = vunpack.c.h.b16 %v227
    %v976 = vunpack.c.l.b16 %v228
    %v977 = vunpack.c.h.b16 %v228
    %v978 = vunpack.c.l.b16 %v229
    %v979 = vunpack.c.h.b16 %v229
    %v980 = vunpack.c.l.b16 %v230
    %v981 = vunpack.c.h.b16 %v230
    %v982 = vunpack.c.l.b16 %v231
    %v983 = vunpack.c.h.b16 %v231
    %v984 = vunpack.c.l.b16 %v232
    %v985 = vunpack.c.h.b16 %v232
    %v986 = vunpack.c.l.b16 %v233
    %v987 = vunpack.c.h.b16 %v233
    %v988 = vunpack.c.l.b16 %v234
    %v989 = vunpack.c.h.b16 %v234
    %v990 = vunpack.c.l.b16 %v235
    %v991 = vunpack.c.h.b16 %v235
    %v992 = vunpack.c.l.b16 %v236
    %v993 = vunpack.c.h.b16 %v236
    %v994 = vunpack.c.l.b16 %v237
    %v995 = vunpack.c.h.b16 %v237
    %v996 = vunpack.c.l.b16 %v238
    %v997 = vunpack.c.h.b16 %v238
    %v998 = vunpack.c.l.b16 %v239
    %v999 = vunpack.c.h.b16 %v239
    %v1000 = vunpack.c.l.b16 %v240
    %v1001 = vunpack.c.h.b16 %v240
    %v1002 = vunpack.c.l.b16 %v241
    %v1003 = vunpack.c.h.b16 %v241
    %v1004 = vunpack.c.l.b16 %v242
    %v1005 = vunpack.c.h.b16 %v242
    %v1006 = vunpack.c.l.b16 %v243
    %v1007 = vunpack.c.h.b16 %v243
    %v1008 = vunpack.c.l.b16 %v244
    %v1009 = vunpack.c.h.b16 %v244
    %v1010 = vunpack.c.l.b16 %v245
    %v1011 = vunpack.c.h.b16 %v245
    %v1012 = vunpack.c.l.b16 %v246
    %v1013 = vunpack.c.h.b16 %v246
    %v1014 = vunpack.c.l.b16 %v247
    %v1015 = vunpack.c.h.b16 %v247
    %v1016 = vunpack.c.l.b16 %v248
    %v1017 = vunpack.c.h.b16 %v248
    %v1018 = vunpack.c.l.b16 %v249
    %v1019 = vunpack.c.h.b16 %v249
    %v1020 = vunpack.c.l.b16 %v250
    %v1021 = vunpack.c.h.b16 %v250
    %v1022 = vunpack.c.l.b16 %v251
    %v1023 = vunpack.c.h.b16 %v251
    %v1024 = vunpack.c.l.b16 %v252
    %v1025 = vunpack.c.h.b16 %v252
    %v1026 = vunpack.c.l.b16 %v253
    %v1027 = vunpack.c.h.b16 %v253
    %v1028 = vunpack.c.l.b16 %v254
    %v1029 = vunpack.c.h.b16 %v254
    %v1030 = vunpack.c.l.b16 %v255
    %v1031 = vunpack.c.h.b16 %v255
    %v1032 = vunpack.c.l.b16 %v256
    %v1033 = vunpack.c.h.b16 %v256
    %v1034 = vunpack.c.l.b16 %v257
    %v1035 = vunpack.c.h.b16 %v257
    %v1036 = vunpack.c.l.b16 %v258
    %v1037 = vunpack.c.h.b16 %v258
    %v1038 = vunpack.c.l.b16 %v259
    %v1039 = vunpack.c.h.b16 %v259
    %v1040 = vunpack.c.l.b16 %v260
    %v1041 = vunpack.c.h.b16 %v260
    %v1042 = vunpack.c.l.b16 %v261
    %v1043 = vunpack.c.h.b16 %v261
    %v1044 = vunpack.c.l.b16 %v262
    %v1045 = vunpack.c.h.b16 %v262
    %v1046 = vunpack.c.l.b16 %v263
    %v1047 = vunpack.c.h.b16 %v263
    %v1048 = vunpack.c.l.b16 %v264
    %v1049 = vunpack.c.h.b16 %v264
    %v1050 = vunpack.c.l.b16 %v265
    %v1051 = vunpack.c.h.b16 %v265
    %v1052 = vunpack.c.l.b16 %v266
    %v1053 = vunpack.c.h.b16 %v266
    %v1054 = vunpack.c.l.b16 %v267
    %v1055 = vunpack.c.h.b16 %v267
    %v1056 = vunpack.c.l.b16 %v268
    %v1057 = vunpack.c.h.b16 %v268
    %v1058 = vunpack.c.l.b16 %v269
    %v1059 = vunpack.c.h.b16 %v269
    %v1060 = vunpack.c.l.b16 %v270
    %v1061 = vunpack.c.h.b16 %v270
    %v1062 = vunpack.c.l.b16 %v271
    %v1063 = vunpack.c.h.b16 %v271
    %v1064 = vunpack.c.l.b16 %v272
    %v1065 = vunpack.c.h.b16 %v272
    %v1066 = vunpack.c.l.b16 %v273
    %v1067 = vunpack.c.h.b16 %v273
    %v1068 = vunpack.c.l.b16 %v274
    %v1069 = vunpack.c.h.b16 %v274
    %v1070 = vunpack.c.l.b16 %v275
    %v1071 = vunpack.c.h.b16 %v275
    %v1072 = vunpack.c.l.b16 %v276
    %v1073 = vunpack.c.h.b16 %v276
    %v1074 = vunpack.c.l.b16 %v277
    %v1075 = vunpack.c.h.b16 %v277
    %v1076 = vunpack.c.l.b16 %v278
    %v1077 = vunpack.c.h.b16 %v278
    %v1078 = vunpack.c.l.b16 %v279
    %v1079 = vunpack.c.h.b16 %v279
    %v1080 = vunpack.c.l.b16 %v280
    %v1081 = vunpack.c.h.b16 %v280
    %v1082 = vunpack.c.l.b16 %v281
    %v1083 = vunpack.c.h.b16 %v281
    %v1084 = vunpack.c.l.b16 %v282
    %v1085 = vunpack.c.h.b16 %v282
    %v1086 = vunpack.c.l.b16 %v283
    %v1087 = vunpack.c.h.b16 %v283
    %v1088 = vunpack.c.l.b16 %v284
    %v1089 = vunpack.c.h.b16 %v284
    %v1090 = vunpack.c.l.b16 %v285
    %v1091 = vunpack.c.h.b16 %v285
    %v1092 = vunpack.c.l.b16 %v286
    %v1093 = vunpack.c.h.b16 %v286
    %v1094 = vunpack.c.l.b16 %v287
    %v1095 = vunpack.c.h.b16 %v287
    %v1096 = vunpack.c.l.b16 %v288
    %v1097 = vunpack.c.h.b16 %v288
    %v1098 = vunpack.c.l.b16 %v289
    %v1099 = vunpack.c.h.b16 %v289
    %v1100 = vunpack.c.l.b16 %v290
    %v1101 = vunpack.c.h.b16 %v290
    %v1102 = vunpack.c.l.b16 %v291
    %v1103 = vunpack.c.h.b16 %v291
    %v1104 = vunpack.c.l.b16 %v292
    %v1105 = vunpack.c.h.b16 %v292
    %v1106 = vunpack.c.l.b16 %v293
    %v1107 = vunpack.c.h.b16 %v293
    %v1108 = vunpack.c.l.b16 %v294
    %v1109 = vunpack.c.h.b16 %v294
    %v1110 = vunpack.c.l.b16 %v295
    %v1111 = vunpack.c.h.b16 %v295
    %v1112 = vunpack.c.l.b16 %v296
    %v1113 = vunpack.c.h.b16 %v296
    %v1114 = vunpack.c.l.b16 %v297
    %v1115 = vunpack.c.h.b16 %v297
    %v1116 = vunpack.c.l.b16 %v298
    %v1117 = vunpack.c.h.b16 %v298
    %v1118 = vunpack.c.l.b16 %v299
    %v1119 = vunpack.c.h.b16 %v299
    %v1120 = vunpack.c.l.b16 %v300
    %v1121 = vunpack.c.h.b16 %v300
    %v1122 = vunpack.c.l.b16 %v301
    %v1123 = vunpack.c.h.b16 %v301
    %v1124 = vunpack.c.l.b16 %v302
    %v1125 = vunpack.c.h.b16 %v302
    %v1126 = vunpack.c.l.b16 %v303
    %v1127 = vunpack.c.h.b16 %v303
    %v1128 = vunpack.c.l.b16 %v304
    %v1129 = vunpack.c.h.b16 %v304
    %v1130 = vunpack.c.l.b16 %v305
    %v1131 = vunpack.c.h.b16 %v305
    %v1132 = vunpack.c.l.b16 %v306
    %v1133 = vunpack.c.h.b16 %v306
    %v1134 = vunpack.c.l.b16 %v307
    %v1135 = vunpack.c.h.b16 %v307
    %v1136 = vunpack.c.l.b16 %v308
    %v1137 = vunpack.c.h.b16 %v308
    %v1138 = vunpack.c.l.b16 %v309
    %v1139 = vunpack.c.h.b16 %v309
    %v1140 = vunpack.c.l.b16 %v310
    %v1141 = vunpack.c.h.b16 %v310
    %v1142 = vunpack.c.l.b16 %v311
    %v1143 = vunpack.c.h.b16 %v311
    %v1144 = vunpack.c.l.b16 %v312
    %v1145 = vunpack.c.h.b16 %v312
    %v1146 = vunpack.c.l.b16 %v313
    %v1147 = vunpack.c.h.b16 %v313
    %v1148 = vunpack.c.l.b16 %v314
    %v1149 = vunpack.c.h.b16 %v314
    %v1150 = vunpack.c.l.b16 %v315
    %v1151 = vunpack.c.h.b16 %v315
    %v1152 = vunpack.c.l.b16 %v316
    %v1153 = vunpack.c.h.b16 %v316
    %v1154 = vunpack.c.l.b16 %v317
    %v1155 = vunpack.c.h.b16 %v317
    %v1156 = vunpack.c.l.b16 %v318
    %v1157 = vunpack.c.h.b16 %v318
    %v1158 = vunpack.c.l.b16 %v319
    %v1159 = vunpack.c.h.b16 %v319
    %v1160 = vunpack.c.l.b16 %v320
    %v1161 = vunpack.c.h.b16 %v320
    %v1162 = vunpack.c.l.b16 %v321
    %v1163 = vunpack.c.h.b16 %v321
    %v1164 = vunpack.c.l.b16 %v322
    %v1165 = vunpack.c.h.b16 %v322
    %v1166 = vunpack.c.l.b16 %v323
    %v1167 = vunpack.c.h.b16 %v323
    %v1168 = vunpack.c.l.b16 %v324
    %v1169 = vunpack.c.h.b16 %v324
    %v1170 = vunpack.c.l.b16 %v325
    %v1171 = vunpack.c.h.b16 %v325
    %v1172 = vunpack.c.l.b16 %v326
    %v1173 = vunpack.c.h.b16 %v326
    %v1174 = vunpack.c.l.b16 %v327
    %v1175 = vunpack.c.h.b16 %v327
    %v1176 = vunpack.c.l.b16 %v328
    %v1177 = vunpack.c.h.b16 %v328
    %v1178 = vunpack.c.l.b16 %v329
    %v1179 = vunpack.c.h.b16 %v329
    %v1180 = vunpack.c.l.b16 %v330
    %v1181 = vunpack.c.h.b16 %v330
    %v1182 = vunpack.c.l.b16 %v331
    %v1183 = vunpack.c.h.b16 %v331
    %v1184 = vunpack.c.l.b16 %v332
    %v1185 = vunpack.c.h.b16 %v332
    %v1186 = vunpack.c.l.b16 %v333
    %v1187 = vunpack.c.h.b16 %v333
    %v1188 = vunpack.c.l.b16 %v334
    %v1189 = vunpack.c.h.b16 %v334
    %v1190 = vunpack.c.l.b16 %v335
    %v1191 = vunpack.c.h.b16 %v335
    %v1192 = vunpack.c.l.b16 %v336
    %v1193 = vunpack.c.h.b16 %v336
    %v1194 = vunpack.c.l.b16 %v337
    %v1195 = vunpack.c.h.b16 %v337
    %v1196 = vunpack.c.l.b16 %v338
    %v1197 = vunpack.c.h.b16 %v338
    %v1198 = vunpack.c.l.b16 %v339
    %v1199 = vunpack.c.h.b16 %v339
    %v1200 = vunpack.c.l.b16 %v340
    %v1201 = vunpack.c.h.b16 %v340
    %v1202 = vunpack.c.l.b16 %v341
    %v1203 = vunpack.c.h.b16 %v341
    %v1204 = vunpack.c.l.b16 %v342
    %v1205 = vunpack.c.h.b16 %v342
    %v1206 = vunpack.c.l.b16 %v343
    %v1207 = vunpack.c.h.b16 %v343
    %v1208 = vunpack.c.l.b16 %v344
    %v1209 = vunpack.c.h.b16 %v344
    %v1210 = vunpack.c.l.b16 %v345
    %v1211 = vunpack.c.h.b16 %v345
    %v1212 = vunpack.c.l.b16 %v346
    %v1213 = vunpack.c.h.b16 %v346
    %v1214 = vunpack.c.l.b16 %v347
    %v1215 = vunpack.c.h.b16 %v347
    %v1216 = vunpack.c.l.b16 %v348
    %v1217 = vunpack.c.h.b16 %v348
    %v1218 = vunpack.c.l.b16 %v349
    %v1219 = vunpack.c.h.b16 %v349
    %v1220 = vunpack.c.l.b16 %v350
    %v1221 = vunpack.c.h.b16 %v350
    %v1222 = vunpack.c.l.b16 %v351
    %v1223 = vunpack.c.h.b16 %v351
    %v1224 = vunpack.c.l.b16 %v352
    %v1225 = vunpack.c.h.b16 %v352
    %v1226 = vunpack.c.l.b16 %v353
    %v1227 = vunpack.c.h.b16 %v353
    %v1228 = vunpack.c.l.b16 %v354
    %v1229 = vunpack.c.h.b16 %v354
    %v1230 = vunpack.c.l.b16 %v355
    %v1231 = vunpack.c.h.b16 %v355
    %v1232 = vunpack.c.l.b16 %v356
    %v1233 = vunpack.c.h.b16 %v356
    %v1234 = vunpack.c.l.b16 %v357
    %v1235 = vunpack.c.h.b16 %v357
    %v1236 = vunpack.c.l.b16 %v358
    %v1237 = vunpack.c.h.b16 %v358
    %v1238 = vunpack.c.l.b16 %v359
    %v1239 = vunpack.c.h.b16 %v359
    %v1240 = vunpack.c.l.b16 %v360
    %v1241 = vunpack.c.h.b16 %v360
    %v1242 = vunpack.c.l.b16 %v361
    %v1243 = vunpack.c.h.b16 %v361
    %v1244 = vunpack.c.l.b16 %v362
    %v1245 = vunpack.c.h.b16 %v362
    %v1246 = vunpack.c.l.b16 %v363
    %v1247 = vunpack.c.h.b16 %v363
    %v1248 = vunpack.c.l.b16 %v364
    %v1249 = vunpack.c.h.b16 %v364
    %v1250 = vunpack.c.l.b16 %v365
    %v1251 = vunpack.c.h.b16 %v365
    %v1252 = vunpack.c.l.b16 %v366
    %v1253 = vunpack.c.h.b16 %v366
    %v1254 = vunpack.c.l.b16 %v367
    %v1255 = vunpack.c.h.b16 %v367
    %v1256 = vunpack.c.l.b16 %v368
    %v1257 = vunpack.c.h.b16 %v368
    %v1258 = vunpack.c.l.b16 %v369
    %v1259 = vunpack.c.h.b16 %v369
    %v1260 = vunpack.c.l.b16 %v370
    %v1261 = vunpack.c.h.b16 %v370
    %v1262 = vunpack.c.l.b16 %v371
    %v1263 = vunpack.c.h.b16 %v371
    %v1264 = vunpack.c.l.b16 %v372
    %v1265 = vunpack.c.h.b16 %v372
    %v1266 = vunpack.c.l.b16 %v373
    %v1267 = vunpack.c.h.b16 %v373
    %v1268 = vunpack.c.l.b16 %v374
    %v1269 = vunpack.c.h.b16 %v374
    %v1270 = vunpack.c.l.b16 %v375
    %v1271 = vunpack.c.h.b16 %v375
    %v1272 = vunpack.c.l.b16 %v376
    %v1273 = vunpack.c.h.b16 %v376
    %v1274 = vunpack.c.l.b16 %v377
    %v1275 = vunpack.c.h.b16 %v377
    %v1276 = vunpack.c.l.b16 %v378
    %v1277 = vunpack.c.h.b16 %v378
    %v1278 = vunpack.c.l.b16 %v379
    %v1279 = vunpack.c.h.b16 %v379
    %v1280 = vunpack.c.l.b16 %v380
    %v1281 = vunpack.c.h.b16 %v380
    %v1282 = vunpack.c.l.b16 %v381
    %v1283 = vunpack.c.h.b16 %v381
    %v1284 = vunpack.c.l.b16 %v382
    %v1285 = vunpack.c.h.b16 %v382
    %v1286 = vunpack.c.l.b16 %v383
    %v1287 = vunpack.c.h.b16 %v383
    %v1288 = vunpack.c.l.b16 %v384
    %v1289 = vunpack.c.h.b16 %v384
    %v1290 = vunpack.c.l.b16 %v385
    %v1291 = vunpack.c.h.b16 %v385
    %v1292 = vunpack.c.l.b16 %v386
    %v1293 = vunpack.c.h.b16 %v386
    %v1294 = vpack.c.b16 %v734, %v718
    %v1295 = vpack.c.b16 %v735, %v719
    %v1296 = vpack.c.b16 %v736, %v720
    %v1297 = vpack.c.b16 %v737, %v721
    %v1298 = vpack.c.b16 %v738, %v722
    %v1299 = vpack.c.b16 %v739, %v723
    %v1300 = vpack.c.b16 %v740, %v724
    %v1301 = vpack.c.b16 %v741, %v725
    %v1302 = vpack.c.b16 %v742, %v726
    %v1303 = vpack.c.b16 %v743, %v727
    %v1304 = vpack.c.b16 %v744, %v728
    %v1305 = vpack.c.b16 %v745, %v729
    %v1306 = vpack.c.b16 %v746, %v730
    %v1307 = vpack.c.b16 %v747, %v731
    %v1308 = vpack.c.b16 %v748, %v732
    %v1309 = vpack.c.b16 %v749, %v733
    %v1310 = vpack.c.b16 %v766, %v750
    %v1311 = vpack.c.b16 %v767, %v751
    %v1312 = vpack.c.b16 %v768, %v752
    %v1313 = vpack.c.b16 %v769, %v753
    %v1314 = vpack.c.b16 %v770, %v754
    %v1315 = vpack.c.b16 %v771, %v755
    %v1316 = vpack.c.b16 %v772, %v756
    %v1317 = vpack.c.b16 %v773, %v757
    %v1318 = vpack.c.b16 %v774, %v758
    %v1319 = vpack.c.b16 %v775, %v759
    %v1320 = vpack.c.b16 %v776, %v760
    %v1321 = vpack.c.b16 %v777, %v761
    %v1322 = vpack.c.b16 %v778, %v762
    %v1323 = vpack.c.b16 %v779, %v763
    %v1324 = vpack.c.b16 %v780, %v764
    %v1325 = vpack.c.b16 %v781, %v765
    %v1326 = vpack.c.b16 %v798, %v782
    %v1327 = vpack.c.b16 %v799, %v783
    %v1328 = vpack.c.b16 %v800, %v784
    %v1329 = vpack.c.b16 %v801, %v785
    %v1330 = vpack.c.b16 %v802, %v786
    %v1331 = vpack.c.b16 %v803, %v787
    %v1332 = vpack.c.b16 %v804, %v788
    %v1333 = vpack.c.b16 %v805, %v789
    %v1334 = vpack.c.b16 %v806, %v790
    %v1335 = vpack.c.b16 %v807, %v791
    %v1336 = vpack.c.b16 %v808, %v792
    %v1337 = vpack.c.b16 %v809, %v793
    %v1338 = vpack.c.b16 %v810, %v794
    %v1339 = vpack.c.b16 %v811, %v795
    %v1340 = vpack.c.b16 %v812, %v796
    %v1341 = vpack.c.b16 %v813, %v797
    %v1342 = vpack.c.b16 %v830, %v814
    %v1343 = vpack.c.b16 %v831, %v815
    %v1344 = vpack.c.b16 %v832, %v816
    %v1345 = vpack.c.b16 %v833, %v817
    %v1346 = vpack.c.b16 %v834, %v818
    %v1347 = vpack.c.b16 %v835, %v819
    %v1348 = vpack.c.b16 %v836, %v820
    %v1349 = vpack.c.b16 %v837, %v821
    %v1350 = vpack.c.b16 %v838, %v822
    %v1351 = vpack.c.b16 %v839, %v823
    %v1352 = vpack.c.b16 %v840, %v824
    %v1353 = vpack.c.b16 %v841, %v825
    %v1354 = vpack.c.b16 %v842, %v826
    %v1355 = vpack.c.b16 %v843, %v827
    %v1356 = vpack.c.b16 %v844, %v828
    %v1357 = vpack.c.b16 %v845, %v829
    %v1358 = vpack.c.b16 %v862, %v846
    %v1359 = vpack.c.b16 %v863, %v847
    %v1360 = vpack.c.b16 %v864, %v848
    %v1361 = vpack.c.b16 %v865, %v849
    %v1362 = vpack.c.b16 %v866, %v850
    %v1363 = vpack.c.b16 %v867, %v851
    %v1364 = vpack.c.b16 %v868, %v852
    %v1365 = vpack.c.b16 %v869, %v853
    %v1366 = vpack.c.b16 %v870, %v854
    %v1367 = vpack.c.b16 %v871, %v855
    %v1368 = vpack.c.b16 %v872, %v856
    %v1369 = vpack.c.b16 %v873, %v857
    %v1370 = vpack.c.b16 %v874, %v858
    %v1371 = vpack.c.b16 %v875, %v859
    %v1372 = vpack.c.b16 %v876, %v860
    %v1373 = vpack.c.b16 %v877, %v861
    %v1374 = vpack.c.b16 %v894, %v878
    %v1375 = vpack.c.b16 %v895, %v879
    %v1376 = vpack.c.b16 %v896, %v880
    %v1377 = vpack.c.b16 %v897, %v881
    %v1378 = vpack.c.b16 %v898, %v882
    %v1379 = vpack.c.b16 %v899, %v883
    %v1380 = vpack.c.b16 %v900, %v884
    %v1381 = vpack.c.b16 %v901, %v885
    %v1382 = vpack.c.b16 %v902, %v886
    %v1383 = vpack.c.b16 %v903, %v887
    %v1384 = vpack.c.b16 %v904, %v888
    %v1385 = vpack.c.b16 %v905, %v889
    %v1386 = vpack.c.b16 %v906, %v890
    %v1387 = vpack.c.b16 %v907, %v891
    %v1388 = vpack.c.b16 %v908, %v892
    %v1389 = vpack.c.b16 %v909, %v893
    %v1390 = vpack.c.b16 %v926, %v910
    %v1391 = vpack.c.b16 %v927, %v911
    %v1392 = vpack.c.b16 %v928, %v912
    %v1393 = vpack.c.b16 %v929, %v913
    %v1394 = vpack.c.b16 %v930, %v914
    %v1395 = vpack.c.b16 %v931, %v915
    %v1396 = vpack.c.b16 %v932, %v916
    %v1397 = vpack.c.b16 %v933, %v917
    %v1398 = vpack.c.b16 %v934, %v918
    %v1399 = vpack.c.b16 %v935, %v919
    %v1400 = vpack.c.b16 %v936, %v920
    %v1401 = vpack.c.b16 %v937, %v921
    %v1402 = vpack.c.b16 %v938, %v922
    %v1403 = vpack.c.b16 %v939, %v923
    %v1404 = vpack.c.b16 %v940, %v924
    %v1405 = vpack.c.b16 %v941, %v925
    %v1406 = vpack.c.b16 %v958, %v942
    %v1407 = vpack.c.b16 %v959, %v943
    %v1408 = vpack.c.b16 %v960, %v944
    %v1409 = vpack.c.b16 %v961, %v945
    %v1410 = vpack.c.b16 %v962, %v946
    %v1411 = vpack.c.b16 %v963, %v947
    %v1412 = vpack.c.b16 %v964, %v948
    %v1413 = vpack.c.b16 %v965, %v949
    %v1414 = vpack.c.b16 %v966, %v950
    %v1415 = vpack.c.b16 %v967, %v951
    %v1416 = vpack.c.b16 %v968, %v952
    %v1417 = vpack.c.b16 %v969, %v953
    %v1418 = vpack.c.b16 %v970, %v954
    %v1419 = vpack.c.b16 %v971, %v955
    %v1420 = vpack.c.b16 %v972, %v956
    %v1421 = vpack.c.b16 %v973, %v957
    %v1422 = vpack.c.b16 %v990, %v974
    %v1423 = vpack.c.b16 %v991, %v975
    %v1424 = vpack.c.b16 %v992, %v976
    %v1425 = vpack.c.b16 %v993, %v977
    %v1426 = vpack.c.b16 %v994, %v978
    %v1427 = vpack.c.b16 %v995, %v979
    %v1428 = vpack.c.b16 %v996, %v980
    %v1429 = vpack.c.b16 %v997, %v981
    %v1430 = vpack.c.b16 %v998, %v982
    %v1431 = vpack.c.b16 %v999, %v983
    %v1432 = vpack.c.b16 %v1000, %v984
    %v1433 = vpack.c.b16 %v1001, %v985
    %v1434 = vpack.c.b16 %v1002, %v986
    %v1435 = vpack.c.b16 %v1003, %v987
    %v1436 = vpack.c.b16 %v1004, %v988
    %v1437 = vpack.c.b16 %v1005, %v989
    %v1438 = vpack.c.b16 %v1022, %v1006
    %v1439 = vpack.c.b16 %v1023, %v1007
    %v1440 = vpack.c.b16 %v1024, %v1008
    %v1441 = vpack.c.b16 %v1025, %v1009
    %v1442 = vpack.c.b16 %v1026, %v1010
    %v1443 = vpack.c.b16 %v1027, %v1011
    %v1444 = vpack.c.b16 %v1028, %v1012
    %v1445 = vpack.c.b16 %v1029, %v1013
    %v1446 = vpack.c.b16 %v1030, %v1014
    %v1447 = vpack.c.b16 %v1031, %v1015
    %v1448 = vpack.c.b16 %v1032, %v1016
    %v1449 = vpack.c.b16 %v1033, %v1017
    %v1450 = vpack.c.b16 %v1034, %v1018
    %v1451 = vpack.c.b16 %v1035, %v1019
    %v1452 = vpack.c.b16 %v1036, %v1020
    %v1453 = vpack.c.b16 %v1037, %v1021
    %v1454 = vpack.c.b16 %v1054, %v1038
    %v1455 = vpack.c.b16 %v1055, %v1039
    %v1456 = vpack.c.b16 %v1056, %v1040
    %v1457 = vpack.c.b16 %v1057, %v1041
    %v1458 = vpack.c.b16 %v1058, %v1042
    %v1459 = vpack.c.b16 %v1059, %v1043
    %v1460 = vpack.c.b16 %v1060, %v1044
    %v1461 = vpack.c.b16 %v1061, %v1045
    %v1462 = vpack.c.b16 %v1062, %v1046
    %v1463 = vpack.c.b16 %v1063, %v1047
    %v1464 = vpack.c.b16 %v1064, %v1048
    %v1465 = vpack.c.b16 %v1065, %v1049
    %v1466 = vpack.c.b16 %v1066, %v1050
    %v1467 = vpack.c.b16 %v1067, %v1051
    %v1468 = vpack.c.b16 %v1068, %v1052
    %v1469 = vpack.c.b16 %v1069, %v1053
    %v1470 = vpack.c.b16 %v1086, %v1070
    %v1471 = vpack.c.b16 %v1087, %v1071
    %v1472 = vpack.c.b16 %v1088, %v1072
    %v1473 = vpack.c.b16 %v1089, %v1073
    %v1474 = vpack.c.b16 %v1090, %v1074
    %v1475 = vpack.c.b16 %v1091, %v1075
    %v1476 = vpack.c.b16 %v1092, %v1076
    %v1477 = vpack.c.b16 %v1093, %v1077
    %v1478 = vpack.c.b16 %v1094, %v1078
    %v1479 = vpack.c.b16 %v1095, %v1079
    %v1480 = vpack.c.b16 %v1096, %v1080
    %v1481 = vpack.c.b16 %v1097, %v1081
    %v1482 = vpack.c.b16 %v1098, %v1082
    %v1483 = vpack.c.b16 %v1099, %v1083
    %v1484 = vpack.c.b16 %v1100, %v1084
    %v1485 = vpack.c.b16 %v1101, %v1085
    %v1486 = vpack.c.b16 %v1118, %v1102
    %v1487 = vpack.c.b16 %v1119, %v1103
    %v1488 = vpack.c.b16 %v1120, %v1104
    %v1489 = vpack.c.b16 %v1121, %v1105
    %v1490 = vpack.c.b16 %v1122, %v1106
    %v1491 = vpack.c.b16 %v1123, %v1107
    %v1492 = vpack.c.b16 %v1124, %v1108
    %v1493 = vpack.c.b16 %v1125, %v1109
    %v1494 = vpack.c.b16 %v1126, %v1110
    %v1495 = vpack.c.b16 %v1127, %v1111
    %v1496 = vpack.c.b16 %v1128, %v1112
    %v1497 = vpack.c.b16 %v1129, %v1113
    %v1498 = vpack.c.b16 %v1130, %v1114
    %v1499 = vpack.c.b16 %v1131, %v1115
    %v1500 = vpack.c.b16 %v1132, %v1116
    %v1501 = vpack.c.b16 %v1133, %v1117
    %v1502 = vpack.c.b16 %v1150, %v1134
    %v1503 = vpack.c.b16 %v1151, %v1135
    %v1504 = vpack.c.b16 %v1152, %v1136
    %v1505 = vpack.c.b16 %v1153, %v1137
    %v1506 = vpack.c.b16 %v1154, %v1138
    %v1507 = vpack.c.b16 %v1155, %v1139
    %v1508 = vpack.c.b16 %v1156, %v1140
    %v1509 = vpack.c.b16 %v1157, %v1141
    %v1510 = vpack.c.b16 %v1158, %v1142
    %v1511 = vpack.c.b16 %v1159, %v1143
    %v1512 = vpack.c.b16 %v1160, %v1144
    %v1513 = vpack.c.b16 %v1161, %v1145
    %v1514 = vpack.c.b16 %v1162, %v1146
    %v1515 = vpack.c.b16 %v1163, %v1147
    %v1516 = vpack.c.b16 %v1164, %v1148
    %v1517 = vpack.c.b16 %v1165, %v1149
    %v1518 = vpack.c.b16 %v1182, %v1166
    %v1519 = vpack.c.b16 %v1183, %v1167
    %v1520 = vpack.c.b16 %v1184, %v1168
    %v1521 = vpack.c.b16 %v1185, %v1169
    %v1522 = vpack.c.b16 %v1186, %v1170
    %v1523 = vpack.c.b16 %v1187, %v1171
    %v1524 = vpack.c.b16 %v1188, %v1172
    %v1525 = vpack.c.b16 %v1189, %v1173
    %v1526 = vpack.c.b16 %v1190, %v1174
    %v1527 = vpack.c.b16 %v1191, %v1175
    %v1528 = vpack.c.b16 %v1192, %v1176
    %v1529 = vpack.c.b16 %v1193, %v1177
    %v1530 = vpack.c.b16 %v1194, %v1178
    %v1531 = vpack.c.b16 %v1195, %v1179
    %v1532 = vpack.c.b16 %v1196, %v1180
    %v1533 = vpack.c.b16 %v1197, %v1181
    %v1534 = vpack.c.b16 %v1214, %v1198
    %v1535 = vpack.c.b16 %v1215, %v1199
    %v1536 = vpack.c.b16 %v1216, %v1200
    %v1537 = vpack.c.b16 %v1217, %v1201
    %v1538 = vpack.c.b16 %v1218, %v1202
    %v1539 = vpack.c.b16 %v1219, %v1203
    %v1540 = vpack.c.b16 %v1220, %v1204
    %v1541 = vpack.c.b16 %v1221, %v1205
    %v1542 = vpack.c.b16 %v1222, %v1206
    %v1543 = vpack.c.b16 %v1223, %v1207
    %v1544 = vpack.c.b16 %v1224, %v1208
    %v1545 = vpack.c.b16 %v1225, %v1209
    %v1546 = vpack.c.b16 %v1226, %v1210
    %v1547 = vpack.c.b16 %v1227, %v1211
    %v1548 = vpack.c.b16 %v1228, %v1212
    %v1549 = vpack.c.b16 %v1229, %v1213
    %v1550 = vpack.c.b16 %v1246, %v1230
    %v1551 = vpack.c.b16 %v1247, %v1231
    %v1552 = vpack.c.b16 %v1248, %v1232
    %v1553 = vpack.c.b16 %v1249, %v1233
    %v1554 = vpack.c.b16 %v1250, %v1234
    %v1555 = vpack.c.b16 %v1251, %v1235
    %v1556 = vpack.c.b16 %v1252, %v1236
    %v1557 = vpack.c.b16 %v1253, %v1237
    %v1558 = vpack.c.b16 %v1254, %v1238
    %v1559 = vpack.c.b16 %v1255, %v1239
    %v1560 = vpack.c.b16 %v1256, %v1240
    %v1561 = vpack.c.b16 %v1257, %v1241
    %v1562 = vpack.c.b16 %v1258, %v1242
    %v1563 = vpack.c.b16 %v1259, %v1243
    %v1564 = vpack.c.b16 %v1260, %v1244
    %v1565 = vpack.c.b16 %v1261, %v1245
    %v1566 = vpack.c.b16 %v1278, %v1262
    %v1567 = vpack.c.b16 %v1279, %v1263
    %v1568 = vpack.c.b16 %v1280, %v1264
    %v1569 = vpack.c.b16 %v1281, %v1265
    %v1570 = vpack.c.b16 %v1282, %v1266
    %v1571 = vpack.c.b16 %v1283, %v1267
    %v1572 = vpack.c.b16 %v1284, %v1268
    %v1573 = vpack.c.b16 %v1285, %v1269
    %v1574 = vpack.c.b16 %v1286, %v1270
    %v1575 = vpack.c.b16 %v1287, %v1271
    %v1576 = vpack.c.b16 %v1288, %v1272
    %v1577 = vpack.c.b16 %v1289, %v1273
    %v1578 = vpack.c.b16 %v1290, %v1274
    %v1579 = vpack.c.b16 %v1291, %v1275
    %v1580 = vpack.c.b16 %v1292, %v1276
    %v1581 = vpack.c.b16 %v1293, %v1277
    %vm1870 = vcmask 261120
    %v1871 = vsel %vm1870, %v427, 0
    %1873 = vmatpush.bf16.msra.mxu0 %v1406
    %1874 = vmatpush.bf16.msra.mxu0 %v1390
    %1875 = vmatpush.bf16.msra.mxu0 %v1374
    %1876 = vmatpush.bf16.msra.mxu0 %v1358
    %1877 = vmatpush.bf16.msra.mxu0 %v1342
    %1878 = vmatpush.bf16.msra.mxu0 %v1326
    %1879 = vmatpush.bf16.msra.mxu0 %v1310
    %1880 = vmatpush.bf16.msra.mxu0 %v1294
    %1881 = vmatmul.bf16.gmra.mxu0 %v425
    %v1882 = vpop.f32.mrf.mxu0
    %v1883 = vadd.f32 %v391, %v1882
    %v1884 = vpop.f32.mrf.mxu0
    %1885 = vdwg.mxu0
    %1886 = vmatpush.bf16.msra.mxu0 %v1534
    %1887 = vmatpush.bf16.msra.mxu0 %v1518
    %1888 = vmatpush.bf16.msra.mxu0 %v1502
    %1889 = vmatpush.bf16.msra.mxu0 %v1486
    %1890 = vmatpush.bf16.msra.mxu0 %v1470
    %1891 = vmatpush.bf16.msra.mxu0 %v1454
    %1892 = vmatpush.bf16.msra.mxu0 %v1438
    %1893 = vmatpush.bf16.msra.mxu0 %v1422
    %1894 = vmatmul.bf16.gmra.mxu0 %v426
    %v1895 = vpop.f32.mrf.mxu0
    %v1896 = vadd.f32 %v1883, %v1895
    %v1897 = vpop.f32.mrf.mxu0
    %1898 = vdwg.mxu0
    %1899 = vmatpush.bf16.msra.mxu0 0
    %1900 = vmatpush.bf16.msra.mxu0 0
    %1901 = vmatpush.bf16.msra.mxu0 0
    %1902 = vmatpush.bf16.msra.mxu0 0
    %1903 = vmatpush.bf16.msra.mxu0 0
    %1904 = vmatpush.bf16.msra.mxu0 0
    %1905 = vmatpush.bf16.msra.mxu0 %v1566
    %1906 = vmatpush.bf16.msra.mxu0 %v1550
    %1907 = vmatmul.bf16.gmra.mxu0 %v1871
    %v1908 = vpop.f32.mrf.mxu0
    %v1909 = vadd.f32 %v1896, %v1908
    %v1910 = vpop.f32.mrf.mxu0
    %1911 = vdwg.mxu0
    %1912 = vmatpush.bf16.msra.mxu0 %v1407
    %1913 = vmatpush.bf16.msra.mxu0 %v1391
    %1914 = vmatpush.bf16.msra.mxu0 %v1375
    %1915 = vmatpush.bf16.msra.mxu0 %v1359
    %1916 = vmatpush.bf16.msra.mxu0 %v1343
    %1917 = vmatpush.bf16.msra.mxu0 %v1327
    %1918 = vmatpush.bf16.msra.mxu0 %v1311
    %1919 = vmatpush.bf16.msra.mxu0 %v1295
    %1920 = vmatmul.bf16.gmra.mxu0 %v425
    %v1921 = vpop.f32.mrf.mxu0
    %v1922 = vadd.f32 %v392, %v1921
    %v1923 = vpop.f32.mrf.mxu0
    %1924 = vdwg.mxu0
    %1925 = vmatpush.bf16.msra.mxu0 %v1535
    %1926 = vmatpush.bf16.msra.mxu0 %v1519
    %1927 = vmatpush.bf16.msra.mxu0 %v1503
    %1928 = vmatpush.bf16.msra.mxu0 %v1487
    %1929 = vmatpush.bf16.msra.mxu0 %v1471
    %1930 = vmatpush.bf16.msra.mxu0 %v1455
    %1931 = vmatpush.bf16.msra.mxu0 %v1439
    %1932 = vmatpush.bf16.msra.mxu0 %v1423
    %1933 = vmatmul.bf16.gmra.mxu0 %v426
    %v1934 = vpop.f32.mrf.mxu0
    %v1935 = vadd.f32 %v1922, %v1934
    %v1936 = vpop.f32.mrf.mxu0
    %1937 = vdwg.mxu0
    %1938 = vmatpush.bf16.msra.mxu0 0
    %1939 = vmatpush.bf16.msra.mxu0 0
    %1940 = vmatpush.bf16.msra.mxu0 0
    %1941 = vmatpush.bf16.msra.mxu0 0
    %1942 = vmatpush.bf16.msra.mxu0 0
    %1943 = vmatpush.bf16.msra.mxu0 0
    %1944 = vmatpush.bf16.msra.mxu0 %v1567
    %1945 = vmatpush.bf16.msra.mxu0 %v1551
    %1946 = vmatmul.bf16.gmra.mxu0 %v1871
    %v1947 = vpop.f32.mrf.mxu0
    %v1948 = vadd.f32 %v1935, %v1947
    %v1949 = vpop.f32.mrf.mxu0
    %1950 = vdwg.mxu0
    %1951 = vmatpush.bf16.msra.mxu0 %v1408
    %1952 = vmatpush.bf16.msra.mxu0 %v1392
    %1953 = vmatpush.bf16.msra.mxu0 %v1376
    %1954 = vmatpush.bf16.msra.mxu0 %v1360
    %1955 = vmatpush.bf16.msra.mxu0 %v1344
    %1956 = vmatpush.bf16.msra.mxu0 %v1328
    %1957 = vmatpush.bf16.msra.mxu0 %v1312
    %1958 = vmatpush.bf16.msra.mxu0 %v1296
    %1959 = vmatmul.bf16.gmra.mxu0 %v425
    %v1960 = vpop.f32.mrf.mxu0
    %v1961 = vadd.f32 %v393, %v1960
    %v1962 = vpop.f32.mrf.mxu0
    %1963 = vdwg.mxu0
    %1964 = vmatpush.bf16.msra.mxu0 %v1536
    %1965 = vmatpush.bf16.msra.mxu0 %v1520
    %1966 = vmatpush.bf16.msra.mxu0 %v1504
    %1967 = vmatpush.bf16.msra.mxu0 %v1488
    %1968 = vmatpush.bf16.msra.mxu0 %v1472
    %1969 = vmatpush.bf16.msra.mxu0 %v1456
    %1970 = vmatpush.bf16.msra.mxu0 %v1440
    %1971 = vmatpush.bf16.msra.mxu0 %v1424
    %1972 = vmatmul.bf16.gmra.mxu0 %v426
    %v1973 = vpop.f32.mrf.mxu0
    %v1974 = vadd.f32 %v1961, %v1973
    %v1975 = vpop.f32.mrf.mxu0
    %1976 = vdwg.mxu0
    %1977 = vmatpush.bf16.msra.mxu0 0
    %1978 = vmatpush.bf16.msra.mxu0 0
    %1979 = vmatpush.bf16.msra.mxu0 0
    %1980 = vmatpush.bf16.msra.mxu0 0
    %1981 = vmatpush.bf16.msra.mxu0 0
    %1982 = vmatpush.bf16.msra.mxu0 0
    %1983 = vmatpush.bf16.msra.mxu0 %v1568
    %1984 = vmatpush.bf16.msra.mxu0 %v1552
    %1985 = vmatmul.bf16.gmra.mxu0 %v1871
    %v1986 = vpop.f32.mrf.mxu0
    %v1987 = vadd.f32 %v1974, %v1986
    %v1988 = vpop.f32.mrf.mxu0
    %1989 = vdwg.mxu0
    %1990 = vmatpush.bf16.msra.mxu0 %v1409
    %1991 = vmatpush.bf16.msra.mxu0 %v1393
    %1992 = vmatpush.bf16.msra.mxu0 %v1377
    %1993 = vmatpush.bf16.msra.mxu0 %v1361
    %1994 = vmatpush.bf16.msra.mxu0 %v1345
    %1995 = vmatpush.bf16.msra.mxu0 %v1329
    %1996 = vmatpush.bf16.msra.mxu0 %v1313
    %1997 = vmatpush.bf16.msra.mxu0 %v1297
    %1998 = vmatmul.bf16.gmra.mxu0 %v425
    %v1999 = vpop.f32.mrf.mxu0
    %v2000 = vadd.f32 %v394, %v1999
    %v2001 = vpop.f32.mrf.mxu0
    %2002 = vdwg.mxu0
    %2003 = vmatpush.bf16.msra.mxu0 %v1537
    %2004 = vmatpush.bf16.msra.mxu0 %v1521
    %2005 = vmatpush.bf16.msra.mxu0 %v1505
    %2006 = vmatpush.bf16.msra.mxu0 %v1489
    %2007 = vmatpush.bf16.msra.mxu0 %v1473
    %2008 = vmatpush.bf16.msra.mxu0 %v1457
    %2009 = vmatpush.bf16.msra.mxu0 %v1441
    %2010 = vmatpush.bf16.msra.mxu0 %v1425
    %2011 = vmatmul.bf16.gmra.mxu0 %v426
    %v2012 = vpop.f32.mrf.mxu0
    %v2013 = vadd.f32 %v2000, %v2012
    %v2014 = vpop.f32.mrf.mxu0
    %2015 = vdwg.mxu0
    %2016 = vmatpush.bf16.msra.mxu0 0
    %2017 = vmatpush.bf16.msra.mxu0 0
    %2018 = vmatpush.bf16.msra.mxu0 0
    %2019 = vmatpush.bf16.msra.mxu0 0
    %2020 = vmatpush.bf16.msra.mxu0 0
    %2021 = vmatpush.bf16.msra.mxu0 0
    %2022 = vmatpush.bf16.msra.mxu0 %v1569
    %2023 = vmatpush.bf16.msra.mxu0 %v1553
    %2024 = vmatmul.bf16.gmra.mxu0 %v1871
    %v2025 = vpop.f32.mrf.mxu0
    %v2026 = vadd.f32 %v2013, %v2025
    %v2027 = vpop.f32.mrf.mxu0
    %2028 = vdwg.mxu0
    %2029 = vmatpush.bf16.msra.mxu0 %v1410
    %2030 = vmatpush.bf16.msra.mxu0 %v1394
    %2031 = vmatpush.bf16.msra.mxu0 %v1378
    %2032 = vmatpush.bf16.msra.mxu0 %v1362
    %2033 = vmatpush.bf16.msra.mxu0 %v1346
    %2034 = vmatpush.bf16.msra.mxu0 %v1330
    %2035 = vmatpush.bf16.msra.mxu0 %v1314
    %2036 = vmatpush.bf16.msra.mxu0 %v1298
    %2037 = vmatmul.bf16.gmra.mxu0 %v425
    %v2038 = vpop.f32.mrf.mxu0
    %v2039 = vadd.f32 %v395, %v2038
    %v2040 = vpop.f32.mrf.mxu0
    %2041 = vdwg.mxu0
    %2042 = vmatpush.bf16.msra.mxu0 %v1538
    %2043 = vmatpush.bf16.msra.mxu0 %v1522
    %2044 = vmatpush.bf16.msra.mxu0 %v1506
    %2045 = vmatpush.bf16.msra.mxu0 %v1490
    %2046 = vmatpush.bf16.msra.mxu0 %v1474
    %2047 = vmatpush.bf16.msra.mxu0 %v1458
    %2048 = vmatpush.bf16.msra.mxu0 %v1442
    %2049 = vmatpush.bf16.msra.mxu0 %v1426
    %2050 = vmatmul.bf16.gmra.mxu0 %v426
    %v2051 = vpop.f32.mrf.mxu0
    %v2052 = vadd.f32 %v2039, %v2051
    %v2053 = vpop.f32.mrf.mxu0
    %2054 = vdwg.mxu0
    %2055 = vmatpush.bf16.msra.mxu0 0
    %2056 = vmatpush.bf16.msra.mxu0 0
    %2057 = vmatpush.bf16.msra.mxu0 0
    %2058 = vmatpush.bf16.msra.mxu0 0
    %2059 = vmatpush.bf16.msra.mxu0 0
    %2060 = vmatpush.bf16.msra.mxu0 0
    %2061 = vmatpush.bf16.msra.mxu0 %v1570
    %2062 = vmatpush.bf16.msra.mxu0 %v1554
    %2063 = vmatmul.bf16.gmra.mxu0 %v1871
    %v2064 = vpop.f32.mrf.mxu0
    %v2065 = vadd.f32 %v2052, %v2064
    %v2066 = vpop.f32.mrf.mxu0
    %2067 = vdwg.mxu0
    %2068 = vmatpush.bf16.msra.mxu0 %v1411
    %2069 = vmatpush.bf16.msra.mxu0 %v1395
    %2070 = vmatpush.bf16.msra.mxu0 %v1379
    %2071 = vmatpush.bf16.msra.mxu0 %v1363
    %2072 = vmatpush.bf16.msra.mxu0 %v1347
    %2073 = vmatpush.bf16.msra.mxu0 %v1331
    %2074 = vmatpush.bf16.msra.mxu0 %v1315
    %2075 = vmatpush.bf16.msra.mxu0 %v1299
    %2076 = vmatmul.bf16.gmra.mxu0 %v425
    %v2077 = vpop.f32.mrf.mxu0
    %v2078 = vadd.f32 %v396, %v2077
    %v2079 = vpop.f32.mrf.mxu0
    %2080 = vdwg.mxu0
    %2081 = vmatpush.bf16.msra.mxu0 %v1539
    %2082 = vmatpush.bf16.msra.mxu0 %v1523
    %2083 = vmatpush.bf16.msra.mxu0 %v1507
    %2084 = vmatpush.bf16.msra.mxu0 %v1491
    %2085 = vmatpush.bf16.msra.mxu0 %v1475
    %2086 = vmatpush.bf16.msra.mxu0 %v1459
    %2087 = vmatpush.bf16.msra.mxu0 %v1443
    %2088 = vmatpush.bf16.msra.mxu0 %v1427
    %2089 = vmatmul.bf16.gmra.mxu0 %v426
    %v2090 = vpop.f32.mrf.mxu0
    %v2091 = vadd.f32 %v2078, %v2090
    %v2092 = vpop.f32.mrf.mxu0
    %2093 = vdwg.mxu0
    %2094 = vmatpush.bf16.msra.mxu0 0
    %2095 = vmatpush.bf16.msra.mxu0 0
    %2096 = vmatpush.bf16.msra.mxu0 0
    %2097 = vmatpush.bf16.msra.mxu0 0
    %2098 = vmatpush.bf16.msra.mxu0 0
    %2099 = vmatpush.bf16.msra.mxu0 0
    %2100 = vmatpush.bf16.msra.mxu0 %v1571
    %2101 = vmatpush.bf16.msra.mxu0 %v1555
    %2102 = vmatmul.bf16.gmra.mxu0 %v1871
    %v2103 = vpop.f32.mrf.mxu0
    %v2104 = vadd.f32 %v2091, %v2103
    %v2105 = vpop.f32.mrf.mxu0
    %2106 = vdwg.mxu0
    %2107 = vmatpush.bf16.msra.mxu0 %v1412
    %2108 = vmatpush.bf16.msra.mxu0 %v1396
    %2109 = vmatpush.bf16.msra.mxu0 %v1380
    %2110 = vmatpush.bf16.msra.mxu0 %v1364
    %2111 = vmatpush.bf16.msra.mxu0 %v1348
    %2112 = vmatpush.bf16.msra.mxu0 %v1332
    %2113 = vmatpush.bf16.msra.mxu0 %v1316
    %2114 = vmatpush.bf16.msra.mxu0 %v1300
    %2115 = vmatmul.bf16.gmra.mxu0 %v425
    %v2116 = vpop.f32.mrf.mxu0
    %v2117 = vadd.f32 %v397, %v2116
    %v2118 = vpop.f32.mrf.mxu0
    %2119 = vdwg.mxu0
    %2120 = vmatpush.bf16.msra.mxu0 %v1540
    %2121 = vmatpush.bf16.msra.mxu0 %v1524
    %2122 = vmatpush.bf16.msra.mxu0 %v1508
    %2123 = vmatpush.bf16.msra.mxu0 %v1492
    %2124 = vmatpush.bf16.msra.mxu0 %v1476
    %2125 = vmatpush.bf16.msra.mxu0 %v1460
    %2126 = vmatpush.bf16.msra.mxu0 %v1444
    %2127 = vmatpush.bf16.msra.mxu0 %v1428
    %2128 = vmatmul.bf16.gmra.mxu0 %v426
    %v2129 = vpop.f32.mrf.mxu0
    %v2130 = vadd.f32 %v2117, %v2129
    %v2131 = vpop.f32.mrf.mxu0
    %2132 = vdwg.mxu0
    %2133 = vmatpush.bf16.msra.mxu0 0
    %2134 = vmatpush.bf16.msra.mxu0 0
    %2135 = vmatpush.bf16.msra.mxu0 0
    %2136 = vmatpush.bf16.msra.mxu0 0
    %2137 = vmatpush.bf16.msra.mxu0 0
    %2138 = vmatpush.bf16.msra.mxu0 0
    %2139 = vmatpush.bf16.msra.mxu0 %v1572
    %2140 = vmatpush.bf16.msra.mxu0 %v1556
    %2141 = vmatmul.bf16.gmra.mxu0 %v1871
    %v2142 = vpop.f32.mrf.mxu0
    %v2143 = vadd.f32 %v2130, %v2142
    %v2144 = vpop.f32.mrf.mxu0
    %2145 = vdwg.mxu0
    %2146 = vmatpush.bf16.msra.mxu0 %v1413
    %2147 = vmatpush.bf16.msra.mxu0 %v1397
    %2148 = vmatpush.bf16.msra.mxu0 %v1381
    %2149 = vmatpush.bf16.msra.mxu0 %v1365
    %2150 = vmatpush.bf16.msra.mxu0 %v1349
    %2151 = vmatpush.bf16.msra.mxu0 %v1333
    %2152 = vmatpush.bf16.msra.mxu0 %v1317
    %2153 = vmatpush.bf16.msra.mxu0 %v1301
    %2154 = vmatmul.bf16.gmra.mxu0 %v425
    %v2155 = vpop.f32.mrf.mxu0
    %v2156 = vadd.f32 %v398, %v2155
    %v2157 = vpop.f32.mrf.mxu0
    %2158 = vdwg.mxu0
    %2159 = vmatpush.bf16.msra.mxu0 %v1541
    %2160 = vmatpush.bf16.msra.mxu0 %v1525
    %2161 = vmatpush.bf16.msra.mxu0 %v1509
    %2162 = vmatpush.bf16.msra.mxu0 %v1493
    %2163 = vmatpush.bf16.msra.mxu0 %v1477
    %2164 = vmatpush.bf16.msra.mxu0 %v1461
    %2165 = vmatpush.bf16.msra.mxu0 %v1445
    %2166 = vmatpush.bf16.msra.mxu0 %v1429
    %2167 = vmatmul.bf16.gmra.mxu0 %v426
    %v2168 = vpop.f32.mrf.mxu0
    %v2169 = vadd.f32 %v2156, %v2168
    %v2170 = vpop.f32.mrf.mxu0
    %2171 = vdwg.mxu0
    %2172 = vmatpush.bf16.msra.mxu0 0
    %2173 = vmatpush.bf16.msra.mxu0 0
    %2174 = vmatpush.bf16.msra.mxu0 0
    %2175 = vmatpush.bf16.msra.mxu0 0
    %2176 = vmatpush.bf16.msra.mxu0 0
    %2177 = vmatpush.bf16.msra.mxu0 0
    %2178 = vmatpush.bf16.msra.mxu0 %v1573
    %2179 = vmatpush.bf16.msra.mxu0 %v1557
    %2180 = vmatmul.bf16.gmra.mxu0 %v1871
    %v2181 = vpop.f32.mrf.mxu0
    %v2182 = vadd.f32 %v2169, %v2181
    %v2183 = vpop.f32.mrf.mxu0
    %2184 = vdwg.mxu0
    %2185 = vmatpush.bf16.msra.mxu0 %v1414
    %2186 = vmatpush.bf16.msra.mxu0 %v1398
    %2187 = vmatpush.bf16.msra.mxu0 %v1382
    %2188 = vmatpush.bf16.msra.mxu0 %v1366
    %2189 = vmatpush.bf16.msra.mxu0 %v1350
    %2190 = vmatpush.bf16.msra.mxu0 %v1334
    %2191 = vmatpush.bf16.msra.mxu0 %v1318
    %2192 = vmatpush.bf16.msra.mxu0 %v1302
    %2193 = vmatmul.bf16.gmra.mxu0 %v425
    %v2194 = vpop.f32.mrf.mxu0
    %v2195 = vadd.f32 %v399, %v2194
    %v2196 = vpop.f32.mrf.mxu0
    %2197 = vdwg.mxu0
    %2198 = vmatpush.bf16.msra.mxu0 %v1542
    %2199 = vmatpush.bf16.msra.mxu0 %v1526
    %2200 = vmatpush.bf16.msra.mxu0 %v1510
    %2201 = vmatpush.bf16.msra.mxu0 %v1494
    %2202 = vmatpush.bf16.msra.mxu0 %v1478
    %2203 = vmatpush.bf16.msra.mxu0 %v1462
    %2204 = vmatpush.bf16.msra.mxu0 %v1446
    %2205 = vmatpush.bf16.msra.mxu0 %v1430
    %2206 = vmatmul.bf16.gmra.mxu0 %v426
    %v2207 = vpop.f32.mrf.mxu0
    %v2208 = vadd.f32 %v2195, %v2207
    %v2209 = vpop.f32.mrf.mxu0
    %2210 = vdwg.mxu0
    %2211 = vmatpush.bf16.msra.mxu0 0
    %2212 = vmatpush.bf16.msra.mxu0 0
    %2213 = vmatpush.bf16.msra.mxu0 0
    %2214 = vmatpush.bf16.msra.mxu0 0
    %2215 = vmatpush.bf16.msra.mxu0 0
    %2216 = vmatpush.bf16.msra.mxu0 0
    %2217 = vmatpush.bf16.msra.mxu0 %v1574
    %2218 = vmatpush.bf16.msra.mxu0 %v1558
    %2219 = vmatmul.bf16.gmra.mxu0 %v1871
    %v2220 = vpop.f32.mrf.mxu0
    %v2221 = vadd.f32 %v2208, %v2220
    %v2222 = vpop.f32.mrf.mxu0
    %2223 = vdwg.mxu0
    %2224 = vmatpush.bf16.msra.mxu0 %v1415
    %2225 = vmatpush.bf16.msra.mxu0 %v1399
    %2226 = vmatpush.bf16.msra.mxu0 %v1383
    %2227 = vmatpush.bf16.msra.mxu0 %v1367
    %2228 = vmatpush.bf16.msra.mxu0 %v1351
    %2229 = vmatpush.bf16.msra.mxu0 %v1335
    %2230 = vmatpush.bf16.msra.mxu0 %v1319
    %2231 = vmatpush.bf16.msra.mxu0 %v1303
    %2232 = vmatmul.bf16.gmra.mxu0 %v425
    %v2233 = vpop.f32.mrf.mxu0
    %v2234 = vadd.f32 %v400, %v2233
    %v2235 = vpop.f32.mrf.mxu0
    %2236 = vdwg.mxu0
    %2237 = vmatpush.bf16.msra.mxu0 %v1543
    %2238 = vmatpush.bf16.msra.mxu0 %v1527
    %2239 = vmatpush.bf16.msra.mxu0 %v1511
    %2240 = vmatpush.bf16.msra.mxu0 %v1495
    %2241 = vmatpush.bf16.msra.mxu0 %v1479
    %2242 = vmatpush.bf16.msra.mxu0 %v1463
    %2243 = vmatpush.bf16.msra.mxu0 %v1447
    %2244 = vmatpush.bf16.msra.mxu0 %v1431
    %2245 = vmatmul.bf16.gmra.mxu0 %v426
    %v2246 = vpop.f32.mrf.mxu0
    %v2247 = vadd.f32 %v2234, %v2246
    %v2248 = vpop.f32.mrf.mxu0
    %2249 = vdwg.mxu0
    %2250 = vmatpush.bf16.msra.mxu0 0
    %2251 = vmatpush.bf16.msra.mxu0 0
    %2252 = vmatpush.bf16.msra.mxu0 0
    %2253 = vmatpush.bf16.msra.mxu0 0
    %2254 = vmatpush.bf16.msra.mxu0 0
    %2255 = vmatpush.bf16.msra.mxu0 0
    %2256 = vmatpush.bf16.msra.mxu0 %v1575
    %2257 = vmatpush.bf16.msra.mxu0 %v1559
    %2258 = vmatmul.bf16.gmra.mxu0 %v1871
    %v2259 = vpop.f32.mrf.mxu0
    %v2260 = vadd.f32 %v2247, %v2259
    %v2261 = vpop.f32.mrf.mxu0
    %2262 = vdwg.mxu0
    %2263 = vmatpush.bf16.msra.mxu0 %v1416
    %2264 = vmatpush.bf16.msra.mxu0 %v1400
    %2265 = vmatpush.bf16.msra.mxu0 %v1384
    %2266 = vmatpush.bf16.msra.mxu0 %v1368
    %2267 = vmatpush.bf16.msra.mxu0 %v1352
    %2268 = vmatpush.bf16.msra.mxu0 %v1336
    %2269 = vmatpush.bf16.msra.mxu0 %v1320
    %2270 = vmatpush.bf16.msra.mxu0 %v1304
    %2271 = vmatmul.bf16.gmra.mxu0 %v425
    %v2272 = vpop.f32.mrf.mxu0
    %v2273 = vadd.f32 %v401, %v2272
    %v2274 = vpop.f32.mrf.mxu0
    %2275 = vdwg.mxu0
    %2276 = vmatpush.bf16.msra.mxu0 %v1544
    %2277 = vmatpush.bf16.msra.mxu0 %v1528
    %2278 = vmatpush.bf16.msra.mxu0 %v1512
    %2279 = vmatpush.bf16.msra.mxu0 %v1496
    %2280 = vmatpush.bf16.msra.mxu0 %v1480
    %2281 = vmatpush.bf16.msra.mxu0 %v1464
    %2282 = vmatpush.bf16.msra.mxu0 %v1448
    %2283 = vmatpush.bf16.msra.mxu0 %v1432
    %2284 = vmatmul.bf16.gmra.mxu0 %v426
    %v2285 = vpop.f32.mrf.mxu0
    %v2286 = vadd.f32 %v2273, %v2285
    %v2287 = vpop.f32.mrf.mxu0
    %2288 = vdwg.mxu0
    %2289 = vmatpush.bf16.msra.mxu0 0
    %2290 = vmatpush.bf16.msra.mxu0 0
    %2291 = vmatpush.bf16.msra.mxu0 0
    %2292 = vmatpush.bf16.msra.mxu0 0
    %2293 = vmatpush.bf16.msra.mxu0 0
    %2294 = vmatpush.bf16.msra.mxu0 0
    %2295 = vmatpush.bf16.msra.mxu0 %v1576
    %2296 = vmatpush.bf16.msra.mxu0 %v1560
    %2297 = vmatmul.bf16.gmra.mxu0 %v1871
    %v2298 = vpop.f32.mrf.mxu0
    %v2299 = vadd.f32 %v2286, %v2298
    %v2300 = vpop.f32.mrf.mxu0
    %2301 = vdwg.mxu0
    %2302 = vmatpush.bf16.msra.mxu0 %v1417
    %2303 = vmatpush.bf16.msra.mxu0 %v1401
    %2304 = vmatpush.bf16.msra.mxu0 %v1385
    %2305 = vmatpush.bf16.msra.mxu0 %v1369
    %2306 = vmatpush.bf16.msra.mxu0 %v1353
    %2307 = vmatpush.bf16.msra.mxu0 %v1337
    %2308 = vmatpush.bf16.msra.mxu0 %v1321
    %2309 = vmatpush.bf16.msra.mxu0 %v1305
    %2310 = vmatmul.bf16.gmra.mxu0 %v425
    %v2311 = vpop.f32.mrf.mxu0
    %v2312 = vadd.f32 %v402, %v2311
    %v2313 = vpop.f32.mrf.mxu0
    %2314 = vdwg.mxu0
    %2315 = vmatpush.bf16.msra.mxu0 %v1545
    %2316 = vmatpush.bf16.msra.mxu0 %v1529
    %2317 = vmatpush.bf16.msra.mxu0 %v1513
    %2318 = vmatpush.bf16.msra.mxu0 %v1497
    %2319 = vmatpush.bf16.msra.mxu0 %v1481
    %2320 = vmatpush.bf16.msra.mxu0 %v1465
    %2321 = vmatpush.bf16.msra.mxu0 %v1449
    %2322 = vmatpush.bf16.msra.mxu0 %v1433
    %2323 = vmatmul.bf16.gmra.mxu0 %v426
    %v2324 = vpop.f32.mrf.mxu0
    %v2325 = vadd.f32 %v2312, %v2324
    %v2326 = vpop.f32.mrf.mxu0
    %2327 = vdwg.mxu0
    %2328 = vmatpush.bf16.msra.mxu0 0
    %2329 = vmatpush.bf16.msra.mxu0 0
    %2330 = vmatpush.bf16.msra.mxu0 0
    %2331 = vmatpush.bf16.msra.mxu0 0
    %2332 = vmatpush.bf16.msra.mxu0 0
    %2333 = vmatpush.bf16.msra.mxu0 0
    %2334 = vmatpush.bf16.msra.mxu0 %v1577
    %2335 = vmatpush.bf16.msra.mxu0 %v1561
    %2336 = vmatmul.bf16.gmra.mxu0 %v1871
    %v2337 = vpop.f32.mrf.mxu0
    %v2338 = vadd.f32 %v2325, %v2337
    %v2339 = vpop.f32.mrf.mxu0
    %2340 = vdwg.mxu0
    %2341 = vmatpush.bf16.msra.mxu0 %v1418
    %2342 = vmatpush.bf16.msra.mxu0 %v1402
    %2343 = vmatpush.bf16.msra.mxu0 %v1386
    %2344 = vmatpush.bf16.msra.mxu0 %v1370
    %2345 = vmatpush.bf16.msra.mxu0 %v1354
    %2346 = vmatpush.bf16.msra.mxu0 %v1338
    %2347 = vmatpush.bf16.msra.mxu0 %v1322
    %2348 = vmatpush.bf16.msra.mxu0 %v1306
    %2349 = vmatmul.bf16.gmra.mxu0 %v425
    %v2350 = vpop.f32.mrf.mxu0
    %v2351 = vadd.f32 %v403, %v2350
    %v2352 = vpop.f32.mrf.mxu0
    %2353 = vdwg.mxu0
    %2354 = vmatpush.bf16.msra.mxu0 %v1546
    %2355 = vmatpush.bf16.msra.mxu0 %v1530
    %2356 = vmatpush.bf16.msra.mxu0 %v1514
    %2357 = vmatpush.bf16.msra.mxu0 %v1498
    %2358 = vmatpush.bf16.msra.mxu0 %v1482
    %2359 = vmatpush.bf16.msra.mxu0 %v1466
    %2360 = vmatpush.bf16.msra.mxu0 %v1450
    %2361 = vmatpush.bf16.msra.mxu0 %v1434
    %2362 = vmatmul.bf16.gmra.mxu0 %v426
    %v2363 = vpop.f32.mrf.mxu0
    %v2364 = vadd.f32 %v2351, %v2363
    %v2365 = vpop.f32.mrf.mxu0
    %2366 = vdwg.mxu0
    %2367 = vmatpush.bf16.msra.mxu0 0
    %2368 = vmatpush.bf16.msra.mxu0 0
    %2369 = vmatpush.bf16.msra.mxu0 0
    %2370 = vmatpush.bf16.msra.mxu0 0
    %2371 = vmatpush.bf16.msra.mxu0 0
    %2372 = vmatpush.bf16.msra.mxu0 0
    %2373 = vmatpush.bf16.msra.mxu0 %v1578
    %2374 = vmatpush.bf16.msra.mxu0 %v1562
    %2375 = vmatmul.bf16.gmra.mxu0 %v1871
    %v2376 = vpop.f32.mrf.mxu0
    %v2377 = vadd.f32 %v2364, %v2376
    %v2378 = vpop.f32.mrf.mxu0
    %2379 = vdwg.mxu0
    %2380 = vmatpush.bf16.msra.mxu0 %v1419
    %2381 = vmatpush.bf16.msra.mxu0 %v1403
    %2382 = vmatpush.bf16.msra.mxu0 %v1387
    %2383 = vmatpush.bf16.msra.mxu0 %v1371
    %2384 = vmatpush.bf16.msra.mxu0 %v1355
    %2385 = vmatpush.bf16.msra.mxu0 %v1339
    %2386 = vmatpush.bf16.msra.mxu0 %v1323
    %2387 = vmatpush.bf16.msra.mxu0 %v1307
    %2388 = vmatmul.bf16.gmra.mxu0 %v425
    %v2389 = vpop.f32.mrf.mxu0
    %v2390 = vadd.f32 %v404, %v2389
    %v2391 = vpop.f32.mrf.mxu0
    %2392 = vdwg.mxu0
    %2393 = vmatpush.bf16.msra.mxu0 %v1547
    %2394 = vmatpush.bf16.msra.mxu0 %v1531
    %2395 = vmatpush.bf16.msra.mxu0 %v1515
    %2396 = vmatpush.bf16.msra.mxu0 %v1499
    %2397 = vmatpush.bf16.msra.mxu0 %v1483
    %2398 = vmatpush.bf16.msra.mxu0 %v1467
    %2399 = vmatpush.bf16.msra.mxu0 %v1451
    %2400 = vmatpush.bf16.msra.mxu0 %v1435
    %2401 = vmatmul.bf16.gmra.mxu0 %v426
    %v2402 = vpop.f32.mrf.mxu0
    %v2403 = vadd.f32 %v2390, %v2402
    %v2404 = vpop.f32.mrf.mxu0
    %2405 = vdwg.mxu0
    %2406 = vmatpush.bf16.msra.mxu0 0
    %2407 = vmatpush.bf16.msra.mxu0 0
    %2408 = vmatpush.bf16.msra.mxu0 0
    %2409 = vmatpush.bf16.msra.mxu0 0
    %2410 = vmatpush.bf16.msra.mxu0 0
    %2411 = vmatpush.bf16.msra.mxu0 0
    %2412 = vmatpush.bf16.msra.mxu0 %v1579
    %2413 = vmatpush.bf16.msra.mxu0 %v1563
    %2414 = vmatmul.bf16.gmra.mxu0 %v1871
    %v2415 = vpop.f32.mrf.mxu0
    %v2416 = vadd.f32 %v2403, %v2415
    %v2417 = vpop.f32.mrf.mxu0
    %2418 = vdwg.mxu0
    %2419 = vmatpush.bf16.msra.mxu0 %v1420
    %2420 = vmatpush.bf16.msra.mxu0 %v1404
    %2421 = vmatpush.bf16.msra.mxu0 %v1388
    %2422 = vmatpush.bf16.msra.mxu0 %v1372
    %2423 = vmatpush.bf16.msra.mxu0 %v1356
    %2424 = vmatpush.bf16.msra.mxu0 %v1340
    %2425 = vmatpush.bf16.msra.mxu0 %v1324
    %2426 = vmatpush.bf16.msra.mxu0 %v1308
    %2427 = vmatmul.bf16.gmra.mxu0 %v425
    %v2428 = vpop.f32.mrf.mxu0
    %v2429 = vadd.f32 %v405, %v2428
    %v2430 = vpop.f32.mrf.mxu0
    %2431 = vdwg.mxu0
    %2432 = vmatpush.bf16.msra.mxu0 %v1548
    %2433 = vmatpush.bf16.msra.mxu0 %v1532
    %2434 = vmatpush.bf16.msra.mxu0 %v1516
    %2435 = vmatpush.bf16.msra.mxu0 %v1500
    %2436 = vmatpush.bf16.msra.mxu0 %v1484
    %2437 = vmatpush.bf16.msra.mxu0 %v1468
    %2438 = vmatpush.bf16.msra.mxu0 %v1452
    %2439 = vmatpush.bf16.msra.mxu0 %v1436
    %2440 = vmatmul.bf16.gmra.mxu0 %v426
    %v2441 = vpop.f32.mrf.mxu0
    %v2442 = vadd.f32 %v2429, %v2441
    %v2443 = vpop.f32.mrf.mxu0
    %2444 = vdwg.mxu0
    %2445 = vmatpush.bf16.msra.mxu0 0
    %2446 = vmatpush.bf16.msra.mxu0 0
    %2447 = vmatpush.bf16.msra.mxu0 0
    %2448 = vmatpush.bf16.msra.mxu0 0
    %2449 = vmatpush.bf16.msra.mxu0 0
    %2450 = vmatpush.bf16.msra.mxu0 0
    %2451 = vmatpush.bf16.msra.mxu0 %v1580
    %2452 = vmatpush.bf16.msra.mxu0 %v1564
    %2453 = vmatmul.bf16.gmra.mxu0 %v1871
    %v2454 = vpop.f32.mrf.mxu0
    %v2455 = vadd.f32 %v2442, %v2454
    %v2456 = vpop.f32.mrf.mxu0
    %2457 = vdwg.mxu0
    %2458 = vmatpush.bf16.msra.mxu0 %v1421
    %2459 = vmatpush.bf16.msra.mxu0 %v1405
    %2460 = vmatpush.bf16.msra.mxu0 %v1389
    %2461 = vmatpush.bf16.msra.mxu0 %v1373
    %2462 = vmatpush.bf16.msra.mxu0 %v1357
    %2463 = vmatpush.bf16.msra.mxu0 %v1341
    %2464 = vmatpush.bf16.msra.mxu0 %v1325
    %2465 = vmatpush.bf16.msra.mxu0 %v1309
    %2466 = vmatmul.bf16.gmra.mxu0 %v425
    %v2467 = vpop.f32.mrf.mxu0
    %v2468 = vadd.f32 %v406, %v2467
    %v2469 = vpop.f32.mrf.mxu0
    %2470 = vdwg.mxu0
    %2471 = vmatpush.bf16.msra.mxu0 %v1549
    %2472 = vmatpush.bf16.msra.mxu0 %v1533
    %2473 = vmatpush.bf16.msra.mxu0 %v1517
    %2474 = vmatpush.bf16.msra.mxu0 %v1501
    %2475 = vmatpush.bf16.msra.mxu0 %v1485
    %2476 = vmatpush.bf16.msra.mxu0 %v1469
    %2477 = vmatpush.bf16.msra.mxu0 %v1453
    %2478 = vmatpush.bf16.msra.mxu0 %v1437
    %2479 = vmatmul.bf16.gmra.mxu0 %v426
    %v2480 = vpop.f32.mrf.mxu0
    %v2481 = vadd.f32 %v2468, %v2480
    %v2482 = vpop.f32.mrf.mxu0
    %2483 = vdwg.mxu0
    %2484 = vmatpush.bf16.msra.mxu0 0
    %2485 = vmatpush.bf16.msra.mxu0 0
    %2486 = vmatpush.bf16.msra.mxu0 0
    %2487 = vmatpush.bf16.msra.mxu0 0
    %2488 = vmatpush.bf16.msra.mxu0 0
    %2489 = vmatpush.bf16.msra.mxu0 0
    %2490 = vmatpush.bf16.msra.mxu0 %v1581
    %2491 = vmatpush.bf16.msra.mxu0 %v1565
    %2492 = vmatmul.bf16.gmra.mxu0 %v1871
    %v2493 = vpop.f32.mrf.mxu0
    %v2494 = vadd.f32 %v2481, %v2493
    %v2495 = vpop.f32.mrf.mxu0
    %2496 = vdwg.mxu0
    %v2497 = vmax.f32 %v1909, 0.0
    %v2498 = vmax.f32 %v1948, 0.0
    %v2499 = vmax.f32 %v1987, 0.0
    %v2500 = vmax.f32 %v2026, 0.0
    %v2501 = vmax.f32 %v2065, 0.0
    %v2502 = vmax.f32 %v2104, 0.0
    %v2503 = vmax.f32 %v2143, 0.0
    %v2504 = vmax.f32 %v2182, 0.0
    %v2505 = vmax.f32 %v2221, 0.0
    %v2506 = vmax.f32 %v2260, 0.0
    %v2507 = vmax.f32 %v2299, 0.0
    %v2508 = vmax.f32 %v2338, 0.0
    %v2509 = vmax.f32 %v2377, 0.0
    %v2510 = vmax.f32 %v2416, 0.0
    %v2511 = vmax.f32 %v2455, 0.0
    %v2512 = vmax.f32 %v2494, 0.0
    %v2513 = vpack.c.bf16 %v2497, %v2497
    %v2514 = vpack.c.bf16 %v2498, %v2498
    %v2515 = vpack.c.bf16 %v2499, %v2499
    %v2516 = vpack.c.bf16 %v2500, %v2500
    %v2517 = vpack.c.bf16 %v2501, %v2501
    %v2518 = vpack.c.bf16 %v2502, %v2502
    %v2519 = vpack.c.bf16 %v2503, %v2503
    %v2520 = vpack.c.bf16 %v2504, %v2504
    %v2521 = vpack.c.bf16 %v2505, %v2505
    %v2522 = vpack.c.bf16 %v2506, %v2506
    %v2523 = vpack.c.bf16 %v2507, %v2507
    %v2524 = vpack.c.bf16 %v2508, %v2508
    %v2525 = vpack.c.bf16 %v2509, %v2509
    %v2526 = vpack.c.bf16 %v2510, %v2510
    %v2527 = vpack.c.bf16 %v2511, %v2511
    %v2528 = vpack.c.bf16 %v2512, %v2512
    %v2529 = vld [vmem:[%s3] sm:$0xf]
    %v2530 = vld [vmem:[%s3 + $0x4] sm:$0xf]
    %v2531 = vld [vmem:[%s3 + $0x8] sm:$0xf]
    %v2532 = vld [vmem:[%s3 + $0xc] sm:$0xf]
    %v2533 = vld [vmem:[%s3 + $0x10] sm:$0xf]
    %v2534 = vld [vmem:[%s3 + $0x14] sm:$0xf]
    %v2535 = vld [vmem:[%s3 + $0x18] sm:$0xf]
    %v2536 = vld [vmem:[%s3 + $0x1c] sm:$0xf]
    %v2537 = vld [vmem:[%s3 + $0x20] sm:$0xf]
    %v2538 = vld [vmem:[%s3 + $0x24] sm:$0xf]
    %v2539 = vld [vmem:[%s3 + $0x28] sm:$0xf]
    %v2540 = vld [vmem:[%s3 + $0x2c] sm:$0xf]
    %v2541 = vld [vmem:[%s3 + $0x30] sm:$0xf]
    %v2542 = vld [vmem:[%s3 + $0x34] sm:$0xf]
    %v2543 = vld [vmem:[%s3 + $0x38] sm:$0xf]
    %v2544 = vld [vmem:[%s3 + $0x3c] sm:$0xf]
    %v2545 = vld [vmem:[%s3 + $0x40] sm:$0xf]
    %v2546 = vld [vmem:[%s3 + $0x44] sm:$0xf]
    %v2547 = vld [vmem:[%s3 + $0x48] sm:$0xf]
    %v2548 = vld [vmem:[%s3 + $0x4c] sm:$0xf]
    %v2549 = vld [vmem:[%s3 + $0x50] sm:$0xf]
    %v2550 = vld [vmem:[%s3 + $0x54] sm:$0xf]
    %v2551 = vld [vmem:[%s3 + $0x58] sm:$0xf]
    %v2552 = vld [vmem:[%s3 + $0x5c] sm:$0xf]
    %v2553 = vld [vmem:[%s3 + $0x60] sm:$0xf]
    %v2554 = vld [vmem:[%s3 + $0x64] sm:$0xf]
    %v2555 = vld [vmem:[%s3 + $0x68] sm:$0xf]
    %v2556 = vld [vmem:[%s3 + $0x6c] sm:$0xf]
    %v2557 = vld [vmem:[%s3 + $0x70] sm:$0xf]
    %v2558 = vld [vmem:[%s3 + $0x74] sm:$0xf]
    %v2559 = vld [vmem:[%s3 + $0x78] sm:$0xf]
    %v2560 = vld [vmem:[%s3 + $0x7c] sm:$0xf]
    %v2561 = vld [vmem:[%s3 + $0x80] sm:$0xf]
    %v2562 = vld [vmem:[%s3 + $0x84] sm:$0xf]
    %v2563 = vld [vmem:[%s3 + $0x88] sm:$0xf]
    %v2564 = vld [vmem:[%s3 + $0x8c] sm:$0xf]
    %v2565 = vld [vmem:[%s3 + $0x90] sm:$0xf]
    %v2566 = vld [vmem:[%s3 + $0x94] sm:$0xf]
    %v2567 = vld [vmem:[%s3 + $0x98] sm:$0xf]
    %v2568 = vld [vmem:[%s3 + $0x9c] sm:$0xf]
    %v2569 = vld [vmem:[%s3 + $0xa0] sm:$0xf]
    %v2570 = vld [vmem:[%s3 + $0xa4] sm:$0xf]
    %v2571 = vld [vmem:[%s3 + $0xa8] sm:$0xf]
    %v2572 = vld [vmem:[%s3 + $0xac] sm:$0xf]
    %v2573 = vld [vmem:[%s3 + $0xb0] sm:$0xf]
    %v2574 = vld [vmem:[%s3 + $0xb4] sm:$0xf]
    %v2575 = vld [vmem:[%s3 + $0xb8] sm:$0xf]
    %v2576 = vld [vmem:[%s3 + $0xbc] sm:$0xf]
    %v2577 = vld [vmem:[%s3 + $0xc0] sm:$0xf]
    %v2578 = vld [vmem:[%s3 + $0xc4] sm:$0xf]
    %v2579 = vld [vmem:[%s3 + $0xc8] sm:$0xf]
    %v2580 = vld [vmem:[%s3 + $0xcc] sm:$0xf]
    %v2581 = vld [vmem:[%s3 + $0xd0] sm:$0xf]
    %v2582 = vld [vmem:[%s3 + $0xd4] sm:$0xf]
    %v2583 = vld [vmem:[%s3 + $0xd8] sm:$0xf]
    %v2584 = vld [vmem:[%s3 + $0xdc] sm:$0xf]
    %v2585 = vld [vmem:[%s3 + $0xe0] sm:$0xf]
    %v2586 = vld [vmem:[%s3 + $0xe4] sm:$0xf]
    %v2587 = vld [vmem:[%s3 + $0xe8] sm:$0xf]
    %v2588 = vld [vmem:[%s3 + $0xec] sm:$0xf]
    %v2589 = vld [vmem:[%s3 + $0xf0] sm:$0xf]
    %v2590 = vld [vmem:[%s3 + $0xf4] sm:$0xf]
    %v2591 = vld [vmem:[%s3 + $0xf8] sm:$0xf]
    %v2592 = vld [vmem:[%s3 + $0xfc] sm:$0xf]
    %v2593 = vld [vmem:[%s3 + $0x100] sm:$0xf]
    %v2594 = vld [vmem:[%s3 + $0x104] sm:$0xf]
    %v2595 = vld [vmem:[%s3 + $0x108] sm:$0xf]
    %v2596 = vld [vmem:[%s3 + $0x10c] sm:$0xf]
    %v2597 = vld [vmem:[%s3 + $0x110] sm:$0xf]
    %v2598 = vld [vmem:[%s3 + $0x114] sm:$0xf]
    %v2599 = vld [vmem:[%s3 + $0x118] sm:$0xf]
    %v2600 = vld [vmem:[%s3 + $0x11c] sm:$0xf]
    %v2601 = vld [vmem:[%s3 + $0x120] sm:$0xf]
    %v2602 = vld [vmem:[%s3 + $0x124] sm:$0xf]
    %v2603 = vld [vmem:[%s3 + $0x128] sm:$0xf]
    %v2604 = vld [vmem:[%s3 + $0x12c] sm:$0xf]
    %v2605 = vld [vmem:[%s3 + $0x130] sm:$0xf]
    %v2606 = vld [vmem:[%s3 + $0x134] sm:$0xf]
    %v2607 = vld [vmem:[%s3 + $0x138] sm:$0xf]
    %v2608 = vld [vmem:[%s3 + $0x13c] sm:$0xf]
    %v2609 = vld [vmem:[%s3 + $0x140] sm:$0xf]
    %v2610 = vld [vmem:[%s3 + $0x144] sm:$0xf]
    %v2611 = vld [vmem:[%s3 + $0x148] sm:$0xf]
    %v2612 = vld [vmem:[%s3 + $0x14c] sm:$0xf]
    %v2613 = vld [vmem:[%s3 + $0x150] sm:$0xf]
    %v2614 = vld [vmem:[%s3 + $0x154] sm:$0xf]
    %v2615 = vld [vmem:[%s3 + $0x158] sm:$0xf]
    %v2616 = vld [vmem:[%s3 + $0x15c] sm:$0xf]
    %v2617 = vld [vmem:[%s3 + $0x160] sm:$0xf]
    %v2618 = vld [vmem:[%s3 + $0x164] sm:$0xf]
    %v2619 = vld [vmem:[%s3 + $0x168] sm:$0xf]
    %v2620 = vld [vmem:[%s3 + $0x16c] sm:$0xf]
    %v2621 = vld [vmem:[%s3 + $0x170] sm:$0xf]
    %v2622 = vld [vmem:[%s3 + $0x174] sm:$0xf]
    %v2623 = vld [vmem:[%s3 + $0x178] sm:$0xf]
    %v2624 = vld [vmem:[%s3 + $0x17c] sm:$0xf]
    %v2625 = vld [vmem:[%s3 + $0x180] sm:$0xf]
    %v2626 = vld [vmem:[%s3 + $0x184] sm:$0xf]
    %v2627 = vld [vmem:[%s3 + $0x188] sm:$0xf]
    %v2628 = vld [vmem:[%s3 + $0x18c] sm:$0xf]
    %v2629 = vld [vmem:[%s3 + $0x190] sm:$0xf]
    %v2630 = vld [vmem:[%s3 + $0x194] sm:$0xf]
    %v2631 = vld [vmem:[%s3 + $0x198] sm:$0xf]
    %v2632 = vld [vmem:[%s3 + $0x19c] sm:$0xf]
    %v2633 = vld [vmem:[%s3 + $0x1a0] sm:$0xf]
    %v2634 = vld [vmem:[%s3 + $0x1a4] sm:$0xf]
    %v2635 = vld [vmem:[%s3 + $0x1a8] sm:$0xf]
    %v2636 = vld [vmem:[%s3 + $0x1ac] sm:$0xf]
    %v2637 = vld [vmem:[%s3 + $0x1b0] sm:$0xf]
    %v2638 = vld [vmem:[%s3 + $0x1b4] sm:$0xf]
    %v2639 = vld [vmem:[%s3 + $0x1b8] sm:$0xf]
    %v2640 = vld [vmem:[%s3 + $0x1bc] sm:$0xf]
    %v2641 = vld [vmem:[%s3 + $0x1c0] sm:$0xf]
    %v2642 = vld [vmem:[%s3 + $0x1c4] sm:$0xf]
    %v2643 = vld [vmem:[%s3 + $0x1c8] sm:$0xf]
    %v2644 = vld [vmem:[%s3 + $0x1cc] sm:$0xf]
    %v2645 = vld [vmem:[%s3 + $0x1d0] sm:$0xf]
    %v2646 = vld [vmem:[%s3 + $0x1d4] sm:$0xf]
    %v2647 = vld [vmem:[%s3 + $0x1d8] sm:$0xf]
    %v2648 = vld [vmem:[%s3 + $0x1dc] sm:$0xf]
    %v2649 = vld [vmem:[%s3 + $0x1e0] sm:$0xf]
    %v2650 = vld [vmem:[%s3 + $0x1e4] sm:$0xf]
    %v2651 = vld [vmem:[%s3 + $0x1e8] sm:$0xf]
    %v2652 = vld [vmem:[%s3 + $0x1ec] sm:$0xf]
    %v2653 = vld [vmem:[%s3 + $0x1f0] sm:$0xf]
    %v2654 = vld [vmem:[%s3 + $0x1f4] sm:$0xf]
    %v2655 = vld [vmem:[%s3 + $0x1f8] sm:$0xf]
    %v2656 = vld [vmem:[%s3 + $0x1fc] sm:$0xf]
    %v2657 = vld [vmem:[%s3 + $0x200] sm:$0xf]
    %v2658 = vld [vmem:[%s3 + $0x204] sm:$0xf]
    %v2659 = vld [vmem:[%s3 + $0x208] sm:$0xf]
    %v2660 = vld [vmem:[%s3 + $0x20c] sm:$0xf]
    %v2661 = vld [vmem:[%s3 + $0x210] sm:$0xf]
    %v2662 = vld [vmem:[%s3 + $0x214] sm:$0xf]
    %v2663 = vld [vmem:[%s3 + $0x218] sm:$0xf]
    %v2664 = vld [vmem:[%s3 + $0x21c] sm:$0xf]
    %v2665 = vld [vmem:[%s3 + $0x220] sm:$0xf]
    %v2666 = vld [vmem:[%s3 + $0x224] sm:$0xf]
    %v2667 = vld [vmem:[%s3 + $0x228] sm:$0xf]
    %v2668 = vld [vmem:[%s3 + $0x22c] sm:$0xf]
    %v2669 = vld [vmem:[%s3 + $0x230] sm:$0xf]
    %v2670 = vld [vmem:[%s3 + $0x234] sm:$0xf]
    %v2671 = vld [vmem:[%s3 + $0x238] sm:$0xf]
    %v2672 = vld [vmem:[%s3 + $0x23c] sm:$0xf]
    %v2673 = vld [vmem:[%s3 + $0x240] sm:$0xf]
    %v2674 = vld [vmem:[%s3 + $0x244] sm:$0xf]
    %v2675 = vld [vmem:[%s3 + $0x248] sm:$0xf]
    %v2676 = vld [vmem:[%s3 + $0x24c] sm:$0xf]
    %v2677 = vld [vmem:[%s3 + $0x250] sm:$0xf]
    %v2678 = vld [vmem:[%s3 + $0x254] sm:$0xf]
    %v2679 = vld [vmem:[%s3 + $0x258] sm:$0xf]
    %v2680 = vld [vmem:[%s3 + $0x25c] sm:$0xf]
    %v2681 = vld [vmem:[%s3 + $0x260] sm:$0xf]
    %v2682 = vld [vmem:[%s3 + $0x264] sm:$0xf]
    %v2683 = vld [vmem:[%s3 + $0x268] sm:$0xf]
    %v2684 = vld [vmem:[%s3 + $0x26c] sm:$0xf]
    %v2685 = vld [vmem:[%s3 + $0x270] sm:$0xf]
    %v2686 = vld [vmem:[%s3 + $0x274] sm:$0xf]
    %v2687 = vld [vmem:[%s3 + $0x278] sm:$0xf]
    %v2688 = vld [vmem:[%s3 + $0x27c] sm:$0xf]
    %v2689 = vld [vmem:[%s3 + $0x280] sm:$0xf]
    %v2690 = vld [vmem:[%s3 + $0x284] sm:$0xf]
    %v2691 = vld [vmem:[%s3 + $0x288] sm:$0xf]
    %v2692 = vld [vmem:[%s3 + $0x28c] sm:$0xf]
    %v2693 = vld [vmem:[%s3 + $0x290] sm:$0xf]
    %v2694 = vld [vmem:[%s3 + $0x294] sm:$0xf]
    %v2695 = vld [vmem:[%s3 + $0x298] sm:$0xf]
    %v2696 = vld [vmem:[%s3 + $0x29c] sm:$0xf]
    %v2697 = vld [vmem:[%s3 + $0x2a0] sm:$0xf]
    %v2698 = vld [vmem:[%s3 + $0x2a4] sm:$0xf]
    %v2699 = vld [vmem:[%s3 + $0x2a8] sm:$0xf]
    %v2700 = vld [vmem:[%s3 + $0x2ac] sm:$0xf]
    %v2701 = vld [vmem:[%s3 + $0x2b0] sm:$0xf]
    %v2702 = vld [vmem:[%s3 + $0x2b4] sm:$0xf]
    %v2703 = vld [vmem:[%s3 + $0x2b8] sm:$0xf]
    %v2704 = vld [vmem:[%s3 + $0x2bc] sm:$0xf]
    %v2705 = vld [vmem:[%s3 + $0x2c0] sm:$0xf]
    %v2706 = vld [vmem:[%s3 + $0x2c4] sm:$0xf]
    %v2707 = vld [vmem:[%s3 + $0x2c8] sm:$0xf]
    %v2708 = vld [vmem:[%s3 + $0x2cc] sm:$0xf]
    %v2709 = vld [vmem:[%s3 + $0x2d0] sm:$0xf]
    %v2710 = vld [vmem:[%s3 + $0x2d4] sm:$0xf]
    %v2711 = vld [vmem:[%s3 + $0x2d8] sm:$0xf]
    %v2712 = vld [vmem:[%s3 + $0x2dc] sm:$0xf]
    %v2713 = vld [vmem:[%s3 + $0x2e0] sm:$0xf]
    %v2714 = vld [vmem:[%s3 + $0x2e4] sm:$0xf]
    %v2715 = vld [vmem:[%s3 + $0x2e8] sm:$0xf]
    %v2716 = vld [vmem:[%s3 + $0x2ec] sm:$0xf]
    %v2717 = vld [vmem:[%s3 + $0x2f0] sm:$0xf]
    %v2718 = vld [vmem:[%s3 + $0x2f4] sm:$0xf]
    %v2719 = vld [vmem:[%s3 + $0x2f8] sm:$0xf]
    %v2720 = vld [vmem:[%s3 + $0x2fc] sm:$0xf]
    %v2721 = vld [vmem:[%s3 + $0x300] sm:$0xf]
    %v2722 = vld [vmem:[%s3 + $0x304] sm:$0xf]
    %v2723 = vld [vmem:[%s3 + $0x308] sm:$0xf]
    %v2724 = vld [vmem:[%s3 + $0x30c] sm:$0xf]
    %v2725 = vld [vmem:[%s3 + $0x310] sm:$0xf]
    %v2726 = vld [vmem:[%s3 + $0x314] sm:$0xf]
    %v2727 = vld [vmem:[%s3 + $0x318] sm:$0xf]
    %v2728 = vld [vmem:[%s3 + $0x31c] sm:$0xf]
    %v2729 = vld [vmem:[%s3 + $0x320] sm:$0xf]
    %v2730 = vld [vmem:[%s3 + $0x324] sm:$0xf]
    %v2731 = vld [vmem:[%s3 + $0x328] sm:$0xf]
    %v2732 = vld [vmem:[%s3 + $0x32c] sm:$0xf]
    %v2733 = vld [vmem:[%s3 + $0x330] sm:$0xf]
    %v2734 = vld [vmem:[%s3 + $0x334] sm:$0xf]
    %v2735 = vld [vmem:[%s3 + $0x338] sm:$0xf]
    %v2736 = vld [vmem:[%s3 + $0x33c] sm:$0xf]
    %v2737 = vld [vmem:[%s3 + $0x340] sm:$0xf]
    %v2738 = vld [vmem:[%s3 + $0x344] sm:$0xf]
    %v2739 = vld [vmem:[%s3 + $0x348] sm:$0xf]
    %v2740 = vld [vmem:[%s3 + $0x34c] sm:$0xf]
    %v2741 = vld [vmem:[%s3 + $0x350] sm:$0xf]
    %v2742 = vld [vmem:[%s3 + $0x354] sm:$0xf]
    %v2743 = vld [vmem:[%s3 + $0x358] sm:$0xf]
    %v2744 = vld [vmem:[%s3 + $0x35c] sm:$0xf]
    %v2745 = vld [vmem:[%s3 + $0x360] sm:$0xf]
    %v2746 = vld [vmem:[%s3 + $0x364] sm:$0xf]
    %v2747 = vld [vmem:[%s3 + $0x368] sm:$0xf]
    %v2748 = vld [vmem:[%s3 + $0x36c] sm:$0xf]
    %v2749 = vld [vmem:[%s3 + $0x370] sm:$0xf]
    %v2750 = vld [vmem:[%s3 + $0x374] sm:$0xf]
    %v2751 = vld [vmem:[%s3 + $0x378] sm:$0xf]
    %v2752 = vld [vmem:[%s3 + $0x37c] sm:$0xf]
    %v2753 = vld [vmem:[%s3 + $0x380] sm:$0xf]
    %v2754 = vld [vmem:[%s3 + $0x384] sm:$0xf]
    %v2755 = vld [vmem:[%s3 + $0x388] sm:$0xf]
    %v2756 = vld [vmem:[%s3 + $0x38c] sm:$0xf]
    %v2757 = vld [vmem:[%s3 + $0x390] sm:$0xf]
    %v2758 = vld [vmem:[%s3 + $0x394] sm:$0xf]
    %v2759 = vld [vmem:[%s3 + $0x398] sm:$0xf]
    %v2760 = vld [vmem:[%s3 + $0x39c] sm:$0xf]
    %v2761 = vld [vmem:[%s3 + $0x3a0] sm:$0xf]
    %v2762 = vld [vmem:[%s3 + $0x3a4] sm:$0xf]
    %v2763 = vld [vmem:[%s3 + $0x3a8] sm:$0xf]
    %v2764 = vld [vmem:[%s3 + $0x3ac] sm:$0xf]
    %v2765 = vld [vmem:[%s3 + $0x3b0] sm:$0xf]
    %v2766 = vld [vmem:[%s3 + $0x3b4] sm:$0xf]
    %v2767 = vld [vmem:[%s3 + $0x3b8] sm:$0xf]
    %v2768 = vld [vmem:[%s3 + $0x3bc] sm:$0xf]
    %v2769 = vld [vmem:[%s3 + $0x3c0] sm:$0xf]
    %v2770 = vld [vmem:[%s3 + $0x3c4] sm:$0xf]
    %v2771 = vld [vmem:[%s3 + $0x3c8] sm:$0xf]
    %v2772 = vld [vmem:[%s3 + $0x3cc] sm:$0xf]
    %v2773 = vld [vmem:[%s3 + $0x3d0] sm:$0xf]
    %v2774 = vld [vmem:[%s3 + $0x3d4] sm:$0xf]
    %v2775 = vld [vmem:[%s3 + $0x3d8] sm:$0xf]
    %v2776 = vld [vmem:[%s3 + $0x3dc] sm:$0xf]
    %v2777 = vld [vmem:[%s3 + $0x3e0] sm:$0xf]
    %v2778 = vld [vmem:[%s3 + $0x3e4] sm:$0xf]
    %v2779 = vld [vmem:[%s3 + $0x3e8] sm:$0xf]
    %v2780 = vld [vmem:[%s3 + $0x3ec] sm:$0xf]
    %v2781 = vld [vmem:[%s3 + $0x3f0] sm:$0xf]
    %v2782 = vld [vmem:[%s3 + $0x3f4] sm:$0xf]
    %v2783 = vld [vmem:[%s3 + $0x3f8] sm:$0xf]
    %v2784 = vld [vmem:[%s3 + $0x3fc] sm:$0xf]
    %v2785 = vld [vmem:[#allocation8] sm:$0x1]
    %v2787 = vperm.slane %v2785, 0
    %v3045 = vunpack.c.l.b16 %v2529
    %v3046 = vunpack.c.l.b16 %v2530
    %v3047 = vunpack.c.l.b16 %v2531
    %v3048 = vunpack.c.l.b16 %v2532
    %v3049 = vunpack.c.l.b16 %v2533
    %v3050 = vunpack.c.l.b16 %v2534
    %v3051 = vunpack.c.l.b16 %v2535
    %v3052 = vunpack.c.l.b16 %v2536
    %v3053 = vunpack.c.l.b16 %v2537
    %v3054 = vunpack.c.l.b16 %v2538
    %v3055 = vunpack.c.l.b16 %v2539
    %v3056 = vunpack.c.l.b16 %v2540
    %v3057 = vunpack.c.l.b16 %v2541
    %v3058 = vunpack.c.l.b16 %v2542
    %v3059 = vunpack.c.l.b16 %v2543
    %v3060 = vunpack.c.l.b16 %v2544
    %v3061 = vunpack.c.l.b16 %v2545
    %v3062 = vunpack.c.l.b16 %v2546
    %v3063 = vunpack.c.l.b16 %v2547
    %v3064 = vunpack.c.l.b16 %v2548
    %v3065 = vunpack.c.l.b16 %v2549
    %v3066 = vunpack.c.l.b16 %v2550
    %v3067 = vunpack.c.l.b16 %v2551
    %v3068 = vunpack.c.l.b16 %v2552
    %v3069 = vunpack.c.l.b16 %v2553
    %v3070 = vunpack.c.l.b16 %v2554
    %v3071 = vunpack.c.l.b16 %v2555
    %v3072 = vunpack.c.l.b16 %v2556
    %v3073 = vunpack.c.l.b16 %v2557
    %v3074 = vunpack.c.l.b16 %v2558
    %v3075 = vunpack.c.l.b16 %v2559
    %v3076 = vunpack.c.l.b16 %v2560
    %v3077 = vunpack.c.l.b16 %v2561
    %v3078 = vunpack.c.l.b16 %v2562
    %v3079 = vunpack.c.l.b16 %v2563
    %v3080 = vunpack.c.l.b16 %v2564
    %v3081 = vunpack.c.l.b16 %v2565
    %v3082 = vunpack.c.l.b16 %v2566
    %v3083 = vunpack.c.l.b16 %v2567
    %v3084 = vunpack.c.l.b16 %v2568
    %v3085 = vunpack.c.l.b16 %v2569
    %v3086 = vunpack.c.l.b16 %v2570
    %v3087 = vunpack.c.l.b16 %v2571
    %v3088 = vunpack.c.l.b16 %v2572
    %v3089 = vunpack.c.l.b16 %v2573
    %v3090 = vunpack.c.l.b16 %v2574
    %v3091 = vunpack.c.l.b16 %v2575
    %v3092 = vunpack.c.l.b16 %v2576
    %v3093 = vunpack.c.l.b16 %v2577
    %v3094 = vunpack.c.l.b16 %v2578
    %v3095 = vunpack.c.l.b16 %v2579
    %v3096 = vunpack.c.l.b16 %v2580
    %v3097 = vunpack.c.l.b16 %v2581
    %v3098 = vunpack.c.l.b16 %v2582
    %v3099 = vunpack.c.l.b16 %v2583
    %v3100 = vunpack.c.l.b16 %v2584
    %v3101 = vunpack.c.l.b16 %v2585
    %v3102 = vunpack.c.l.b16 %v2586
    %v3103 = vunpack.c.l.b16 %v2587
    %v3104 = vunpack.c.l.b16 %v2588
    %v3105 = vunpack.c.l.b16 %v2589
    %v3106 = vunpack.c.l.b16 %v2590
    %v3107 = vunpack.c.l.b16 %v2591
    %v3108 = vunpack.c.l.b16 %v2592
    %v3109 = vunpack.c.l.b16 %v2593
    %v3110 = vunpack.c.l.b16 %v2594
    %v3111 = vunpack.c.l.b16 %v2595
    %v3112 = vunpack.c.l.b16 %v2596
    %v3113 = vunpack.c.l.b16 %v2597
    %v3114 = vunpack.c.l.b16 %v2598
    %v3115 = vunpack.c.l.b16 %v2599
    %v3116 = vunpack.c.l.b16 %v2600
    %v3117 = vunpack.c.l.b16 %v2601
    %v3118 = vunpack.c.l.b16 %v2602
    %v3119 = vunpack.c.l.b16 %v2603
    %v3120 = vunpack.c.l.b16 %v2604
    %v3121 = vunpack.c.l.b16 %v2605
    %v3122 = vunpack.c.l.b16 %v2606
    %v3123 = vunpack.c.l.b16 %v2607
    %v3124 = vunpack.c.l.b16 %v2608
    %v3125 = vunpack.c.l.b16 %v2609
    %v3126 = vunpack.c.l.b16 %v2610
    %v3127 = vunpack.c.l.b16 %v2611
    %v3128 = vunpack.c.l.b16 %v2612
    %v3129 = vunpack.c.l.b16 %v2613
    %v3130 = vunpack.c.l.b16 %v2614
    %v3131 = vunpack.c.l.b16 %v2615
    %v3132 = vunpack.c.l.b16 %v2616
    %v3133 = vunpack.c.l.b16 %v2617
    %v3134 = vunpack.c.l.b16 %v2618
    %v3135 = vunpack.c.l.b16 %v2619
    %v3136 = vunpack.c.l.b16 %v2620
    %v3137 = vunpack.c.l.b16 %v2621
    %v3138 = vunpack.c.l.b16 %v2622
    %v3139 = vunpack.c.l.b16 %v2623
    %v3140 = vunpack.c.l.b16 %v2624
    %v3141 = vunpack.c.l.b16 %v2625
    %v3142 = vunpack.c.l.b16 %v2626
    %v3143 = vunpack.c.l.b16 %v2627
    %v3144 = vunpack.c.l.b16 %v2628
    %v3145 = vunpack.c.l.b16 %v2629
    %v3146 = vunpack.c.l.b16 %v2630
    %v3147 = vunpack.c.l.b16 %v2631
    %v3148 = vunpack.c.l.b16 %v2632
    %v3149 = vunpack.c.l.b16 %v2633
    %v3150 = vunpack.c.l.b16 %v2634
    %v3151 = vunpack.c.l.b16 %v2635
    %v3152 = vunpack.c.l.b16 %v2636
    %v3153 = vunpack.c.l.b16 %v2637
    %v3154 = vunpack.c.l.b16 %v2638
    %v3155 = vunpack.c.l.b16 %v2639
    %v3156 = vunpack.c.l.b16 %v2640
    %v3157 = vunpack.c.l.b16 %v2641
    %v3158 = vunpack.c.l.b16 %v2642
    %v3159 = vunpack.c.l.b16 %v2643
    %v3160 = vunpack.c.l.b16 %v2644
    %v3161 = vunpack.c.l.b16 %v2645
    %v3162 = vunpack.c.l.b16 %v2646
    %v3163 = vunpack.c.l.b16 %v2647
    %v3164 = vunpack.c.l.b16 %v2648
    %v3165 = vunpack.c.l.b16 %v2649
    %v3166 = vunpack.c.l.b16 %v2650
    %v3167 = vunpack.c.l.b16 %v2651
    %v3168 = vunpack.c.l.b16 %v2652
    %v3169 = vunpack.c.l.b16 %v2653
    %v3170 = vunpack.c.l.b16 %v2654
    %v3171 = vunpack.c.l.b16 %v2655
    %v3172 = vunpack.c.l.b16 %v2656
    %v3173 = vunpack.c.l.b16 %v2657
    %v3174 = vunpack.c.l.b16 %v2658
    %v3175 = vunpack.c.l.b16 %v2659
    %v3176 = vunpack.c.l.b16 %v2660
    %v3177 = vunpack.c.l.b16 %v2661
    %v3178 = vunpack.c.l.b16 %v2662
    %v3179 = vunpack.c.l.b16 %v2663
    %v3180 = vunpack.c.l.b16 %v2664
    %v3181 = vunpack.c.l.b16 %v2665
    %v3182 = vunpack.c.l.b16 %v2666
    %v3183 = vunpack.c.l.b16 %v2667
    %v3184 = vunpack.c.l.b16 %v2668
    %v3185 = vunpack.c.l.b16 %v2669
    %v3186 = vunpack.c.l.b16 %v2670
    %v3187 = vunpack.c.l.b16 %v2671
    %v3188 = vunpack.c.l.b16 %v2672
    %v3189 = vunpack.c.l.b16 %v2673
    %v3190 = vunpack.c.l.b16 %v2674
    %v3191 = vunpack.c.l.b16 %v2675
    %v3192 = vunpack.c.l.b16 %v2676
    %v3193 = vunpack.c.l.b16 %v2677
    %v3194 = vunpack.c.l.b16 %v2678
    %v3195 = vunpack.c.l.b16 %v2679
    %v3196 = vunpack.c.l.b16 %v2680
    %v3197 = vunpack.c.l.b16 %v2681
    %v3198 = vunpack.c.l.b16 %v2682
    %v3199 = vunpack.c.l.b16 %v2683
    %v3200 = vunpack.c.l.b16 %v2684
    %v3201 = vunpack.c.l.b16 %v2685
    %v3202 = vunpack.c.l.b16 %v2686
    %v3203 = vunpack.c.l.b16 %v2687
    %v3204 = vunpack.c.l.b16 %v2688
    %v3205 = vunpack.c.l.b16 %v2689
    %v3206 = vunpack.c.l.b16 %v2690
    %v3207 = vunpack.c.l.b16 %v2691
    %v3208 = vunpack.c.l.b16 %v2692
    %v3209 = vunpack.c.l.b16 %v2693
    %v3210 = vunpack.c.l.b16 %v2694
    %v3211 = vunpack.c.l.b16 %v2695
    %v3212 = vunpack.c.l.b16 %v2696
    %v3213 = vunpack.c.l.b16 %v2697
    %v3214 = vunpack.c.l.b16 %v2698
    %v3215 = vunpack.c.l.b16 %v2699
    %v3216 = vunpack.c.l.b16 %v2700
    %v3217 = vunpack.c.l.b16 %v2701
    %v3218 = vunpack.c.l.b16 %v2702
    %v3219 = vunpack.c.l.b16 %v2703
    %v3220 = vunpack.c.l.b16 %v2704
    %v3221 = vunpack.c.l.b16 %v2705
    %v3222 = vunpack.c.l.b16 %v2706
    %v3223 = vunpack.c.l.b16 %v2707
    %v3224 = vunpack.c.l.b16 %v2708
    %v3225 = vunpack.c.l.b16 %v2709
    %v3226 = vunpack.c.l.b16 %v2710
    %v3227 = vunpack.c.l.b16 %v2711
    %v3228 = vunpack.c.l.b16 %v2712
    %v3229 = vunpack.c.l.b16 %v2713
    %v3230 = vunpack.c.l.b16 %v2714
    %v3231 = vunpack.c.l.b16 %v2715
    %v3232 = vunpack.c.l.b16 %v2716
    %v3233 = vunpack.c.l.b16 %v2717
    %v3234 = vunpack.c.l.b16 %v2718
    %v3235 = vunpack.c.l.b16 %v2719
    %v3236 = vunpack.c.l.b16 %v2720
    %v3237 = vunpack.c.l.b16 %v2721
    %v3238 = vunpack.c.l.b16 %v2722
    %v3239 = vunpack.c.l.b16 %v2723
    %v3240 = vunpack.c.l.b16 %v2724
    %v3241 = vunpack.c.l.b16 %v2725
    %v3242 = vunpack.c.l.b16 %v2726
    %v3243 = vunpack.c.l.b16 %v2727
    %v3244 = vunpack.c.l.b16 %v2728
    %v3245 = vunpack.c.l.b16 %v2729
    %v3246 = vunpack.c.l.b16 %v2730
    %v3247 = vunpack.c.l.b16 %v2731
    %v3248 = vunpack.c.l.b16 %v2732
    %v3249 = vunpack.c.l.b16 %v2733
    %v3250 = vunpack.c.l.b16 %v2734
    %v3251 = vunpack.c.l.b16 %v2735
    %v3252 = vunpack.c.l.b16 %v2736
    %v3253 = vunpack.c.l.b16 %v2737
    %v3254 = vunpack.c.l.b16 %v2738
    %v3255 = vunpack.c.l.b16 %v2739
    %v3256 = vunpack.c.l.b16 %v2740
    %v3257 = vunpack.c.l.b16 %v2741
    %v3258 = vunpack.c.l.b16 %v2742
    %v3259 = vunpack.c.l.b16 %v2743
    %v3260 = vunpack.c.l.b16 %v2744
    %v3261 = vunpack.c.l.b16 %v2745
    %v3262 = vunpack.c.l.b16 %v2746
    %v3263 = vunpack.c.l.b16 %v2747
    %v3264 = vunpack.c.l.b16 %v2748
    %v3265 = vunpack.c.l.b16 %v2749
    %v3266 = vunpack.c.l.b16 %v2750
    %v3267 = vunpack.c.l.b16 %v2751
    %v3268 = vunpack.c.l.b16 %v2752
    %v3269 = vunpack.c.l.b16 %v2753
    %v3270 = vunpack.c.l.b16 %v2754
    %v3271 = vunpack.c.l.b16 %v2755
    %v3272 = vunpack.c.l.b16 %v2756
    %v3273 = vunpack.c.l.b16 %v2757
    %v3274 = vunpack.c.l.b16 %v2758
    %v3275 = vunpack.c.l.b16 %v2759
    %v3276 = vunpack.c.l.b16 %v2760
    %v3277 = vunpack.c.l.b16 %v2761
    %v3278 = vunpack.c.l.b16 %v2762
    %v3279 = vunpack.c.l.b16 %v2763
    %v3280 = vunpack.c.l.b16 %v2764
    %v3281 = vunpack.c.l.b16 %v2765
    %v3282 = vunpack.c.l.b16 %v2766
    %v3283 = vunpack.c.l.b16 %v2767
    %v3284 = vunpack.c.l.b16 %v2768
    %v3285 = vunpack.c.l.b16 %v2769
    %v3286 = vunpack.c.l.b16 %v2770
    %v3287 = vunpack.c.l.b16 %v2771
    %v3288 = vunpack.c.l.b16 %v2772
    %v3289 = vunpack.c.l.b16 %v2773
    %v3290 = vunpack.c.l.b16 %v2774
    %v3291 = vunpack.c.l.b16 %v2775
    %v3292 = vunpack.c.l.b16 %v2776
    %v3293 = vunpack.c.l.b16 %v2777
    %v3294 = vunpack.c.l.b16 %v2778
    %v3295 = vunpack.c.l.b16 %v2779
    %v3296 = vunpack.c.l.b16 %v2780
    %v3297 = vunpack.c.l.b16 %v2781
    %v3298 = vunpack.c.l.b16 %v2782
    %v3299 = vunpack.c.l.b16 %v2783
    %v3300 = vunpack.c.l.b16 %v2784
    %v3301 = vpack.c.b16 %v3046, %v3045
    %v3302 = vpack.c.b16 %v3048, %v3047
    %v3303 = vpack.c.b16 %v3050, %v3049
    %v3304 = vpack.c.b16 %v3052, %v3051
    %v3305 = vpack.c.b16 %v3054, %v3053
    %v3306 = vpack.c.b16 %v3056, %v3055
    %v3307 = vpack.c.b16 %v3058, %v3057
    %v3308 = vpack.c.b16 %v3060, %v3059
    %v3309 = vpack.c.b16 %v3062, %v3061
    %v3310 = vpack.c.b16 %v3064, %v3063
    %v3311 = vpack.c.b16 %v3066, %v3065
    %v3312 = vpack.c.b16 %v3068, %v3067
    %v3313 = vpack.c.b16 %v3070, %v3069
    %v3314 = vpack.c.b16 %v3072, %v3071
    %v3315 = vpack.c.b16 %v3074, %v3073
    %v3316 = vpack.c.b16 %v3076, %v3075
    %v3317 = vpack.c.b16 %v3078, %v3077
    %v3318 = vpack.c.b16 %v3080, %v3079
    %v3319 = vpack.c.b16 %v3082, %v3081
    %v3320 = vpack.c.b16 %v3084, %v3083
    %v3321 = vpack.c.b16 %v3086, %v3085
    %v3322 = vpack.c.b16 %v3088, %v3087
    %v3323 = vpack.c.b16 %v3090, %v3089
    %v3324 = vpack.c.b16 %v3092, %v3091
    %v3325 = vpack.c.b16 %v3094, %v3093
    %v3326 = vpack.c.b16 %v3096, %v3095
    %v3327 = vpack.c.b16 %v3098, %v3097
    %v3328 = vpack.c.b16 %v3100, %v3099
    %v3329 = vpack.c.b16 %v3102, %v3101
    %v3330 = vpack.c.b16 %v3104, %v3103
    %v3331 = vpack.c.b16 %v3106, %v3105
    %v3332 = vpack.c.b16 %v3108, %v3107
    %v3333 = vpack.c.b16 %v3110, %v3109
    %v3334 = vpack.c.b16 %v3112, %v3111
    %v3335 = vpack.c.b16 %v3114, %v3113
    %v3336 = vpack.c.b16 %v3116, %v3115
    %v3337 = vpack.c.b16 %v3118, %v3117
    %v3338 = vpack.c.b16 %v3120, %v3119
    %v3339 = vpack.c.b16 %v3122, %v3121
    %v3340 = vpack.c.b16 %v3124, %v3123
    %v3341 = vpack.c.b16 %v3126, %v3125
    %v3342 = vpack.c.b16 %v3128, %v3127
    %v3343 = vpack.c.b16 %v3130, %v3129
    %v3344 = vpack.c.b16 %v3132, %v3131
    %v3345 = vpack.c.b16 %v3134, %v3133
    %v3346 = vpack.c.b16 %v3136, %v3135
    %v3347 = vpack.c.b16 %v3138, %v3137
    %v3348 = vpack.c.b16 %v3140, %v3139
    %v3349 = vpack.c.b16 %v3142, %v3141
    %v3350 = vpack.c.b16 %v3144, %v3143
    %v3351 = vpack.c.b16 %v3146, %v3145
    %v3352 = vpack.c.b16 %v3148, %v3147
    %v3353 = vpack.c.b16 %v3150, %v3149
    %v3354 = vpack.c.b16 %v3152, %v3151
    %v3355 = vpack.c.b16 %v3154, %v3153
    %v3356 = vpack.c.b16 %v3156, %v3155
    %v3357 = vpack.c.b16 %v3158, %v3157
    %v3358 = vpack.c.b16 %v3160, %v3159
    %v3359 = vpack.c.b16 %v3162, %v3161
    %v3360 = vpack.c.b16 %v3164, %v3163
    %v3361 = vpack.c.b16 %v3166, %v3165
    %v3362 = vpack.c.b16 %v3168, %v3167
    %v3363 = vpack.c.b16 %v3170, %v3169
    %v3364 = vpack.c.b16 %v3172, %v3171
    %v3365 = vpack.c.b16 %v3174, %v3173
    %v3366 = vpack.c.b16 %v3176, %v3175
    %v3367 = vpack.c.b16 %v3178, %v3177
    %v3368 = vpack.c.b16 %v3180, %v3179
    %v3369 = vpack.c.b16 %v3182, %v3181
    %v3370 = vpack.c.b16 %v3184, %v3183
    %v3371 = vpack.c.b16 %v3186, %v3185
    %v3372 = vpack.c.b16 %v3188, %v3187
    %v3373 = vpack.c.b16 %v3190, %v3189
    %v3374 = vpack.c.b16 %v3192, %v3191
    %v3375 = vpack.c.b16 %v3194, %v3193
    %v3376 = vpack.c.b16 %v3196, %v3195
    %v3377 = vpack.c.b16 %v3198, %v3197
    %v3378 = vpack.c.b16 %v3200, %v3199
    %v3379 = vpack.c.b16 %v3202, %v3201
    %v3380 = vpack.c.b16 %v3204, %v3203
    %v3381 = vpack.c.b16 %v3206, %v3205
    %v3382 = vpack.c.b16 %v3208, %v3207
    %v3383 = vpack.c.b16 %v3210, %v3209
    %v3384 = vpack.c.b16 %v3212, %v3211
    %v3385 = vpack.c.b16 %v3214, %v3213
    %v3386 = vpack.c.b16 %v3216, %v3215
    %v3387 = vpack.c.b16 %v3218, %v3217
    %v3388 = vpack.c.b16 %v3220, %v3219
    %v3389 = vpack.c.b16 %v3222, %v3221
    %v3390 = vpack.c.b16 %v3224, %v3223
    %v3391 = vpack.c.b16 %v3226, %v3225
    %v3392 = vpack.c.b16 %v3228, %v3227
    %v3393 = vpack.c.b16 %v3230, %v3229
    %v3394 = vpack.c.b16 %v3232, %v3231
    %v3395 = vpack.c.b16 %v3234, %v3233
    %v3396 = vpack.c.b16 %v3236, %v3235
    %v3397 = vpack.c.b16 %v3238, %v3237
    %v3398 = vpack.c.b16 %v3240, %v3239
    %v3399 = vpack.c.b16 %v3242, %v3241
    %v3400 = vpack.c.b16 %v3244, %v3243
    %v3401 = vpack.c.b16 %v3246, %v3245
    %v3402 = vpack.c.b16 %v3248, %v3247
    %v3403 = vpack.c.b16 %v3250, %v3249
    %v3404 = vpack.c.b16 %v3252, %v3251
    %v3405 = vpack.c.b16 %v3254, %v3253
    %v3406 = vpack.c.b16 %v3256, %v3255
    %v3407 = vpack.c.b16 %v3258, %v3257
    %v3408 = vpack.c.b16 %v3260, %v3259
    %v3409 = vpack.c.b16 %v3262, %v3261
    %v3410 = vpack.c.b16 %v3264, %v3263
    %v3411 = vpack.c.b16 %v3266, %v3265
    %v3412 = vpack.c.b16 %v3268, %v3267
    %v3413 = vpack.c.b16 %v3270, %v3269
    %v3414 = vpack.c.b16 %v3272, %v3271
    %v3415 = vpack.c.b16 %v3274, %v3273
    %v3416 = vpack.c.b16 %v3276, %v3275
    %v3417 = vpack.c.b16 %v3278, %v3277
    %v3418 = vpack.c.b16 %v3280, %v3279
    %v3419 = vpack.c.b16 %v3282, %v3281
    %v3420 = vpack.c.b16 %v3284, %v3283
    %v3421 = vpack.c.b16 %v3286, %v3285
    %v3422 = vpack.c.b16 %v3288, %v3287
    %v3423 = vpack.c.b16 %v3290, %v3289
    %v3424 = vpack.c.b16 %v3292, %v3291
    %v3425 = vpack.c.b16 %v3294, %v3293
    %v3426 = vpack.c.b16 %v3296, %v3295
    %v3427 = vpack.c.b16 %v3298, %v3297
    %v3428 = vpack.c.b16 %v3300, %v3299
    %3557 = vmatpush.bf16.msra.mxu0 %v3308
    %3558 = vmatpush.bf16.msra.mxu0 %v3307
    %3559 = vmatpush.bf16.msra.mxu0 %v3306
    %3560 = vmatpush.bf16.msra.mxu0 %v3305
    %3561 = vmatpush.bf16.msra.mxu0 %v3304
    %3562 = vmatpush.bf16.msra.mxu0 %v3303
    %3563 = vmatpush.bf16.msra.mxu0 %v3302
    %3564 = vmatpush.bf16.msra.mxu0 %v3301
    %3565 = vmatmul.bf16.gmra.mxu0 %v2513
    %v3566 = vpop.f32.mrf.mxu0
    %v3567 = vadd.f32 %v2787, %v3566
    %v3568 = vpop.f32.mrf.mxu0
    %3569 = vdwg.mxu0
    %3570 = vmatpush.bf16.msra.mxu0 %v3316
    %3571 = vmatpush.bf16.msra.mxu0 %v3315
    %3572 = vmatpush.bf16.msra.mxu0 %v3314
    %3573 = vmatpush.bf16.msra.mxu0 %v3313
    %3574 = vmatpush.bf16.msra.mxu0 %v3312
    %3575 = vmatpush.bf16.msra.mxu0 %v3311
    %3576 = vmatpush.bf16.msra.mxu0 %v3310
    %3577 = vmatpush.bf16.msra.mxu0 %v3309
    %3578 = vmatmul.bf16.gmra.mxu0 %v2514
    %v3579 = vpop.f32.mrf.mxu0
    %v3580 = vadd.f32 %v3567, %v3579
    %v3581 = vpop.f32.mrf.mxu0
    %3582 = vdwg.mxu0
    %3583 = vmatpush.bf16.msra.mxu0 %v3324
    %3584 = vmatpush.bf16.msra.mxu0 %v3323
    %3585 = vmatpush.bf16.msra.mxu0 %v3322
    %3586 = vmatpush.bf16.msra.mxu0 %v3321
    %3587 = vmatpush.bf16.msra.mxu0 %v3320
    %3588 = vmatpush.bf16.msra.mxu0 %v3319
    %3589 = vmatpush.bf16.msra.mxu0 %v3318
    %3590 = vmatpush.bf16.msra.mxu0 %v3317
    %3591 = vmatmul.bf16.gmra.mxu0 %v2515
    %v3592 = vpop.f32.mrf.mxu0
    %v3593 = vadd.f32 %v3580, %v3592
    %v3594 = vpop.f32.mrf.mxu0
    %3595 = vdwg.mxu0
    %3596 = vmatpush.bf16.msra.mxu0 %v3332
    %3597 = vmatpush.bf16.msra.mxu0 %v3331
    %3598 = vmatpush.bf16.msra.mxu0 %v3330
    %3599 = vmatpush.bf16.msra.mxu0 %v3329
    %3600 = vmatpush.bf16.msra.mxu0 %v3328
    %3601 = vmatpush.bf16.msra.mxu0 %v3327
    %3602 = vmatpush.bf16.msra.mxu0 %v3326
    %3603 = vmatpush.bf16.msra.mxu0 %v3325
    %3604 = vmatmul.bf16.gmra.mxu0 %v2516
    %v3605 = vpop.f32.mrf.mxu0
    %v3606 = vadd.f32 %v3593, %v3605
    %v3607 = vpop.f32.mrf.mxu0
    %3608 = vdwg.mxu0
    %3609 = vmatpush.bf16.msra.mxu0 %v3340
    %3610 = vmatpush.bf16.msra.mxu0 %v3339
    %3611 = vmatpush.bf16.msra.mxu0 %v3338
    %3612 = vmatpush.bf16.msra.mxu0 %v3337
    %3613 = vmatpush.bf16.msra.mxu0 %v3336
    %3614 = vmatpush.bf16.msra.mxu0 %v3335
    %3615 = vmatpush.bf16.msra.mxu0 %v3334
    %3616 = vmatpush.bf16.msra.mxu0 %v3333
    %3617 = vmatmul.bf16.gmra.mxu0 %v2517
    %v3618 = vpop.f32.mrf.mxu0
    %v3619 = vadd.f32 %v3606, %v3618
    %v3620 = vpop.f32.mrf.mxu0
    %3621 = vdwg.mxu0
    %3622 = vmatpush.bf16.msra.mxu0 %v3348
    %3623 = vmatpush.bf16.msra.mxu0 %v3347
    %3624 = vmatpush.bf16.msra.mxu0 %v3346
    %3625 = vmatpush.bf16.msra.mxu0 %v3345
    %3626 = vmatpush.bf16.msra.mxu0 %v3344
    %3627 = vmatpush.bf16.msra.mxu0 %v3343
    %3628 = vmatpush.bf16.msra.mxu0 %v3342
    %3629 = vmatpush.bf16.msra.mxu0 %v3341
    %3630 = vmatmul.bf16.gmra.mxu0 %v2518
    %v3631 = vpop.f32.mrf.mxu0
    %v3632 = vadd.f32 %v3619, %v3631
    %v3633 = vpop.f32.mrf.mxu0
    %3634 = vdwg.mxu0
    %3635 = vmatpush.bf16.msra.mxu0 %v3356
    %3636 = vmatpush.bf16.msra.mxu0 %v3355
    %3637 = vmatpush.bf16.msra.mxu0 %v3354
    %3638 = vmatpush.bf16.msra.mxu0 %v3353
    %3639 = vmatpush.bf16.msra.mxu0 %v3352
    %3640 = vmatpush.bf16.msra.mxu0 %v3351
    %3641 = vmatpush.bf16.msra.mxu0 %v3350
    %3642 = vmatpush.bf16.msra.mxu0 %v3349
    %3643 = vmatmul.bf16.gmra.mxu0 %v2519
    %v3644 = vpop.f32.mrf.mxu0
    %v3645 = vadd.f32 %v3632, %v3644
    %v3646 = vpop.f32.mrf.mxu0
    %3647 = vdwg.mxu0
    %3648 = vmatpush.bf16.msra.mxu0 %v3364
    %3649 = vmatpush.bf16.msra.mxu0 %v3363
    %3650 = vmatpush.bf16.msra.mxu0 %v3362
    %3651 = vmatpush.bf16.msra.mxu0 %v3361
    %3652 = vmatpush.bf16.msra.mxu0 %v3360
    %3653 = vmatpush.bf16.msra.mxu0 %v3359
    %3654 = vmatpush.bf16.msra.mxu0 %v3358
    %3655 = vmatpush.bf16.msra.mxu0 %v3357
    %3656 = vmatmul.bf16.gmra.mxu0 %v2520
    %v3657 = vpop.f32.mrf.mxu0
    %v3658 = vadd.f32 %v3645, %v3657
    %v3659 = vpop.f32.mrf.mxu0
    %3660 = vdwg.mxu0
    %3661 = vmatpush.bf16.msra.mxu0 %v3372
    %3662 = vmatpush.bf16.msra.mxu0 %v3371
    %3663 = vmatpush.bf16.msra.mxu0 %v3370
    %3664 = vmatpush.bf16.msra.mxu0 %v3369
    %3665 = vmatpush.bf16.msra.mxu0 %v3368
    %3666 = vmatpush.bf16.msra.mxu0 %v3367
    %3667 = vmatpush.bf16.msra.mxu0 %v3366
    %3668 = vmatpush.bf16.msra.mxu0 %v3365
    %3669 = vmatmul.bf16.gmra.mxu0 %v2521
    %v3670 = vpop.f32.mrf.mxu0
    %v3671 = vadd.f32 %v3658, %v3670
    %v3672 = vpop.f32.mrf.mxu0
    %3673 = vdwg.mxu0
    %3674 = vmatpush.bf16.msra.mxu0 %v3380
    %3675 = vmatpush.bf16.msra.mxu0 %v3379
    %3676 = vmatpush.bf16.msra.mxu0 %v3378
    %3677 = vmatpush.bf16.msra.mxu0 %v3377
    %3678 = vmatpush.bf16.msra.mxu0 %v3376
    %3679 = vmatpush.bf16.msra.mxu0 %v3375
    %3680 = vmatpush.bf16.msra.mxu0 %v3374
    %3681 = vmatpush.bf16.msra.mxu0 %v3373
    %3682 = vmatmul.bf16.gmra.mxu0 %v2522
    %v3683 = vpop.f32.mrf.mxu0
    %v3684 = vadd.f32 %v3671, %v3683
    %v3685 = vpop.f32.mrf.mxu0
    %3686 = vdwg.mxu0
    %3687 = vmatpush.bf16.msra.mxu0 %v3388
    %3688 = vmatpush.bf16.msra.mxu0 %v3387
    %3689 = vmatpush.bf16.msra.mxu0 %v3386
    %3690 = vmatpush.bf16.msra.mxu0 %v3385
    %3691 = vmatpush.bf16.msra.mxu0 %v3384
    %3692 = vmatpush.bf16.msra.mxu0 %v3383
    %3693 = vmatpush.bf16.msra.mxu0 %v3382
    %3694 = vmatpush.bf16.msra.mxu0 %v3381
    %3695 = vmatmul.bf16.gmra.mxu0 %v2523
    %v3696 = vpop.f32.mrf.mxu0
    %v3697 = vadd.f32 %v3684, %v3696
    %v3698 = vpop.f32.mrf.mxu0
    %3699 = vdwg.mxu0
    %3700 = vmatpush.bf16.msra.mxu0 %v3396
    %3701 = vmatpush.bf16.msra.mxu0 %v3395
    %3702 = vmatpush.bf16.msra.mxu0 %v3394
    %3703 = vmatpush.bf16.msra.mxu0 %v3393
    %3704 = vmatpush.bf16.msra.mxu0 %v3392
    %3705 = vmatpush.bf16.msra.mxu0 %v3391
    %3706 = vmatpush.bf16.msra.mxu0 %v3390
    %3707 = vmatpush.bf16.msra.mxu0 %v3389
    %3708 = vmatmul.bf16.gmra.mxu0 %v2524
    %v3709 = vpop.f32.mrf.mxu0
    %v3710 = vadd.f32 %v3697, %v3709
    %v3711 = vpop.f32.mrf.mxu0
    %3712 = vdwg.mxu0
    %3713 = vmatpush.bf16.msra.mxu0 %v3404
    %3714 = vmatpush.bf16.msra.mxu0 %v3403
    %3715 = vmatpush.bf16.msra.mxu0 %v3402
    %3716 = vmatpush.bf16.msra.mxu0 %v3401
    %3717 = vmatpush.bf16.msra.mxu0 %v3400
    %3718 = vmatpush.bf16.msra.mxu0 %v3399
    %3719 = vmatpush.bf16.msra.mxu0 %v3398
    %3720 = vmatpush.bf16.msra.mxu0 %v3397
    %3721 = vmatmul.bf16.gmra.mxu0 %v2525
    %v3722 = vpop.f32.mrf.mxu0
    %v3723 = vadd.f32 %v3710, %v3722
    %v3724 = vpop.f32.mrf.mxu0
    %3725 = vdwg.mxu0
    %3726 = vmatpush.bf16.msra.mxu0 %v3412
    %3727 = vmatpush.bf16.msra.mxu0 %v3411
    %3728 = vmatpush.bf16.msra.mxu0 %v3410
    %3729 = vmatpush.bf16.msra.mxu0 %v3409
    %3730 = vmatpush.bf16.msra.mxu0 %v3408
    %3731 = vmatpush.bf16.msra.mxu0 %v3407
    %3732 = vmatpush.bf16.msra.mxu0 %v3406
    %3733 = vmatpush.bf16.msra.mxu0 %v3405
    %3734 = vmatmul.bf16.gmra.mxu0 %v2526
    %v3735 = vpop.f32.mrf.mxu0
    %v3736 = vadd.f32 %v3723, %v3735
    %v3737 = vpop.f32.mrf.mxu0
    %3738 = vdwg.mxu0
    %3739 = vmatpush.bf16.msra.mxu0 %v3420
    %3740 = vmatpush.bf16.msra.mxu0 %v3419
    %3741 = vmatpush.bf16.msra.mxu0 %v3418
    %3742 = vmatpush.bf16.msra.mxu0 %v3417
    %3743 = vmatpush.bf16.msra.mxu0 %v3416
    %3744 = vmatpush.bf16.msra.mxu0 %v3415
    %3745 = vmatpush.bf16.msra.mxu0 %v3414
    %3746 = vmatpush.bf16.msra.mxu0 %v3413
    %3747 = vmatmul.bf16.gmra.mxu0 %v2527
    %v3748 = vpop.f32.mrf.mxu0
    %v3749 = vadd.f32 %v3736, %v3748
    %v3750 = vpop.f32.mrf.mxu0
    %3751 = vdwg.mxu0
    %3752 = vmatpush.bf16.msra.mxu0 %v3428
    %3753 = vmatpush.bf16.msra.mxu0 %v3427
    %3754 = vmatpush.bf16.msra.mxu0 %v3426
    %3755 = vmatpush.bf16.msra.mxu0 %v3425
    %3756 = vmatpush.bf16.msra.mxu0 %v3424
    %3757 = vmatpush.bf16.msra.mxu0 %v3423
    %3758 = vmatpush.bf16.msra.mxu0 %v3422
    %3759 = vmatpush.bf16.msra.mxu0 %v3421
    %3760 = vmatmul.bf16.gmra.mxu0 %v2528
    %v3761 = vpop.f32.mrf.mxu0
    %v3762 = vadd.f32 %v3749, %v3761
    %v3763 = vpop.f32.mrf.mxu0
    %3764 = vdwg.mxu0
    %v3765 = vmax.f32 %v3762, 0.0
    %v3766 = vpack.c.bf16 %v3765, %v3765
    %v3767 = vld [vmem:[%s5] sm:$0xf]
    %v3768 = vld [vmem:[%s5 + $0x4] sm:$0xf]
    %v3769 = vld [vmem:[%s5 + $0x8] sm:$0xf]
    %v3770 = vld [vmem:[%s5 + $0xc] sm:$0xf]
    %v3771 = vld [vmem:[%s5 + $0x10] sm:$0xf]
    %v3772 = vld [vmem:[%s5 + $0x14] sm:$0xf]
    %v3773 = vld [vmem:[%s5 + $0x18] sm:$0xf]
    %v3774 = vld [vmem:[%s5 + $0x1c] sm:$0xf]
    %v3775 = vld [vmem:[#allocation10] sm:$0x1]
    %v3777 = vperm.slane %v3775, 0
    %v3787 = vunpack.c.l.b16 %v3767
    %v3788 = vunpack.c.l.b16 %v3768
    %v3789 = vunpack.c.l.b16 %v3769
    %v3790 = vunpack.c.l.b16 %v3770
    %v3791 = vunpack.c.l.b16 %v3771
    %v3792 = vunpack.c.l.b16 %v3772
    %v3793 = vunpack.c.l.b16 %v3773
    %v3794 = vunpack.c.l.b16 %v3774
    %v3795 = vpack.c.b16 %v3788, %v3787
    %v3796 = vpack.c.b16 %v3790, %v3789
    %v3797 = vpack.c.b16 %v3792, %v3791
    %v3798 = vpack.c.b16 %v3794, %v3793
    %vm3803 = vcmask 523264
    %v3805 = vsel %vm3803, %v3766, 0
    %3807 = vmatpush.bf16.msra.mxu0 0
    %3808 = vmatpush.bf16.msra.mxu0 0
    %3809 = vmatpush.bf16.msra.mxu0 0
    %3810 = vmatpush.bf16.msra.mxu0 0
    %3811 = vmatpush.bf16.msra.mxu0 %v3798
    %3812 = vmatpush.bf16.msra.mxu0 %v3797
    %3813 = vmatpush.bf16.msra.mxu0 %v3796
    %3814 = vmatpush.bf16.msra.mxu0 %v3795
    %3815 = vmatmul.bf16.gmra.mxu0 %v3805
    %v3816 = vpop.f32.mrf.mxu0
    %v3817 = vadd.f32 %v3777, %v3816
    %v3818 = vpop.f32.mrf.mxu0
    %3819 = vdwg.mxu0
    %vm3820 = vcmask 41984
    %v3821 = vsel %vm3820, %v3817, -inf
    %3822 = vmax.xlane.f32.xlu0 %v3821
    %v3823 = vpop.xlane.xlu0 %3822
    %v3824 = vsub.f32 %v3817, %v3823
    %v3825 = vmul.f32 %v3824, 1.442695
    %v3826 = vpow.pop %v3825
    %v3827 = vsel %vm3820, %v3826, 0.0
    %3828 = vadd.xlane.f32.xlu0 %v3827
    %v3829 = vpop.xlane.xlu0 %3828
    %v3830 = vrcp.pop %v3829
    %v3831 = vmul.f32 %v3829, %v3830
    %v3832 = vsub.f32 1.0, %v3831
    %v3833 = vmul.f32 %v3830, %v3832
    %v3834 = vadd.f32 %v3830, %v3833
    %vm3835 = vweird.f32 %v3829
    %vm3836 = vweird.f32 %v3830
    %vm3837 = vmor %vm3835, %vm3836
    %v3838 = vsel %vm3837, %v3830, %v3834
    %v3839 = vand.u32 2147483647, %v3829
    %vm3840 = vcmp.eq.f32.partialorder %v3839, 8.507059e+37
    %v3841 = vand.u32 %v3829, 2147483648
    %v3842 = vor.u32 1.1754944e-38, %v3841
    %v3843 = vsel %vm3840, %v3842, %v3838
    %v3844 = vmul.f32 %v3826, %v3843
    %3845 = vst.msk [vmem:[#allocation11] sm:$0x3] %vm3820, %v3844
    // Predicated region
    $region50: #{tpu_custom_call.1} parent=1 // pred_check
      _
    $region51: #{tpu_custom_call.1} parent=1 // pred_check_branch
      %3847 = sbr.rel (0) target = $region53
    $region52: #{tpu_custom_call.1} parent=1 // pred_region
      %3849 = vsyncadd [#allocation4], 0
      %s3851 = sshll.u32 [#allocation11], 4
      %s3852 = int_to_ptr.vmem [resolvable:$true] %s3851
      %s3853 = sshll.u32 %s7, 4
      %s3854 = int_to_ptr.hbm [resolvable:$true] %s3853
      %3856 = dma.vmem_to_hbm [thread:$0]  %s3852, 32, %s3854, [#allocation4]
    $region53: #{tpu_custom_call.1} parent=1 // pred_fallthru
      _
    // Predicated region
    $region54: #{tpu_custom_call.1} parent=1 // pred_check
      _
    $region55: #{tpu_custom_call.1} parent=1 // pred_check_branch
      %3858 = sbr.rel (0) target = $region57
    $region56: #{tpu_custom_call.1} parent=1 // pred_region
      %3860 = dma.done [#allocation4], 32
    $region57: #{tpu_custom_call.1} parent=1 // pred_fallthru
      _
    %3861 = vsyncpa [#allocation3], 1
    %3862 = vsyncpa [#allocation6], 1
    %3863 = vsyncpa [#allocation9], 1
    %3864 = vsyncpa [#allocation4], 1

</llo_original>
